<compile_context>
chip_gen: v7x
topology: tpu7x:2x2x1
jax: 0.10.0
libtpu: 0.0.40
codegen_flags: <defaults>
</compile_context>

<pallas_src>
from functools import partial

import jax
import jax.numpy as jnp
from jax.experimental import pallas as pl
from jax.experimental.pallas import tpu as pltpu

_EPS = 1e-5


# ----------------------------------------------------------------------------------
# Kernels
# ----------------------------------------------------------------------------------

def _conv1_kernel(x_ref, w1_ref, y1_ref):
    # 1x1 conv over a row tile: one MXU matmul (bf16 operands, f32 accumulate).
    y1_ref[...] = jnp.dot(x_ref[...].astype(jnp.bfloat16), w1_ref[...],
                          preferred_element_type=jnp.float32)


def _conv2_kernel(y1_ref, s1_ref, sh1_ref, w2_ref, y2_ref, pad_ref, patch_ref):
    # One image per grid step: BN1-apply + ReLU + 3x3 conv (pad=1) as a single
    # im2col matmul.  pad_ref / patch_ref are bf16 VMEM scratch (half footprint).
    _, H, W, C = y1_ref.shape
    HW = H * W

    scale = s1_ref[...].reshape(1, 1, 1, C)
    shift = sh1_ref[...].reshape(1, 1, 1, C)
    y = jnp.maximum(y1_ref[...] * scale + shift, 0.0).astype(jnp.bfloat16)

    # Zero only the 1-pixel halo; write the interior once.
    pad_ref[:, 0:1, :, :] = jnp.zeros((1, 1, W + 2, C), jnp.bfloat16)
    pad_ref[:, H + 1:H + 2, :, :] = jnp.zeros((1, 1, W + 2, C), jnp.bfloat16)
    pad_ref[:, :, 0:1, :] = jnp.zeros((1, H + 2, 1, C), jnp.bfloat16)
    pad_ref[:, :, W + 1:W + 2, :] = jnp.zeros((1, H + 2, 1, C), jnp.bfloat16)
    pad_ref[:, 1:H + 1, 1:W + 1, :] = y

    # im2col into a dedicated bf16 scratch: 9 lane-aligned stores (col offsets are
    # multiples of 128), tap-major / channel-minor to match w2's row layout.
    # TODO(synk): at production spatial sizes, tile H with a 1-row halo and replace the
    # offset-1 W-window reads with pltpu.roll-based shifts to keep sublane alignment.
    for t, kh in enumerate(range(3)):
        for kw in range(3):
            tap = kh * 3 + kw
            patch_ref[:, tap * C:(tap + 1) * C] = (
                pad_ref[:, kh:kh + H, kw:kw + W, :].reshape(HW, C))

    y2_ref[...] = jnp.dot(patch_ref[...], w2_ref[...],
                          preferred_element_type=jnp.float32)


def _conv3_kernel(y2_ref, s2_ref, sh2_ref, w3_ref, y3_ref):
    # BN2-apply + ReLU (f32) + 1x1 conv (bf16 MXU matmul) over a row tile.
    y = jnp.maximum(y2_ref[...] * s2_ref[...] + sh2_ref[...], 0.0)
    y3_ref[...] = jnp.dot(y.astype(jnp.bfloat16), w3_ref[...],
                          preferred_element_type=jnp.float32)


def _bn3_residual_kernel(y3_ref, x_ref, s3_ref, sh3_ref, o_ref):
    # BN3-apply + residual add + ReLU, all f32 elementwise on a row tile.
    o_ref[...] = jnp.maximum(
        y3_ref[...] * s3_ref[...] + sh3_ref[...] + x_ref[...], 0.0
    ).astype(o_ref.dtype)


# ----------------------------------------------------------------------------------
# Wrapper helpers
# ----------------------------------------------------------------------------------

def _row_tile(rows, cap):
    """Largest multiple-of-8 divisor of `rows` that is <= cap (fallback: rows)."""
    start = min(rows, cap)
    start -= start % 8
    for t in range(start, 0, -8):
        if rows % t == 0:
            return t
    return rows


def _mosaic_params(block_bytes, scratch_bytes=0):
    # Per-block bytes x double-buffering + persistent scratch, with headroom;
    # capped well below v7x's 64 MiB/TC physical VMEM.
    needed = 2 * sum(block_bytes) + scratch_bytes
    limit = int(min(48 * 2 ** 20, max(16 * 2 ** 20, int(needed * 1.5))))
    return pltpu.CompilerParams(dimension_semantics=("parallel",),
                                vmem_limit_bytes=limit)


def _bn_scale_shift(y2d, gamma, beta):
    """Full-batch training-mode BatchNorm folded to y*scale + shift.

    Two-pass centered variance (no E[y^2]-mean^2 cancellation); runs as a small fused
    XLA reduction between the Pallas passes (the 'stats pass')."""
    y = y2d.astype(jnp.float32)
    mean = jnp.mean(y, axis=0, keepdims=True)
    var = jnp.mean(jnp.square(y - mean), axis=0, keepdims=True)
    scale = gamma * jax.lax.rsqrt(var + _EPS)
    shift = beta - mean * scale
    return scale, shift


# ----------------------------------------------------------------------------------
# Forward passes
# ----------------------------------------------------------------------------------

@partial(jax.jit, static_argnames=("max_rows_per_tile",))
def bottleneck_forward_nhwc(x_nhwc, params, *, max_rows_per_tile=1024):
    """Primary entry point: NHWC in, NHWC out (channels on the lane axis)."""
    N, H, W, Cin = x_nhwc.shape
    Cmid = params["w1"].shape[1]
    Cmid_p = ((Cmid + 127) // 128) * 128          # lane-dense mid width
    R, HW = N * H * W, H * W
    TR = _row_tile(R, max_rows_per_tile)
    grid_r = (R // TR,)
    f32, bf16 = jnp.float32, jnp.bfloat16

    # Zero-pad mid-channel weights / affine params to Cmid_p.  Padded gammas/betas are
    # zero, so padded channels are exactly zero end-to-end.
    w1 = jnp.zeros((Cin, Cmid_p), f32).at[:, :Cmid].set(params["w1"]).astype(bf16)
    w2 = jnp.zeros((9, Cmid_p, Cmid_p), f32).at[:, :Cmid, :Cmid].set(params["w2"])
    w2 = w2.reshape(9 * Cmid_p, Cmid_p).astype(bf16)
    w3 = jnp.zeros((Cmid_p, Cin), f32).at[:Cmid, :].set(params["w3"]).astype(bf16)
    g1 = jnp.zeros((1, Cmid_p), f32).at[:, :Cmid].set(params["g1"])
    b1 = jnp.zeros((1, Cmid_p), f32).at[:, :Cmid].set(params["b1"])
    g2 = jnp.zeros((1, Cmid_p), f32).at[:, :Cmid].set(params["g2"])
    b2 = jnp.zeros((1, Cmid_p), f32).at[:, :Cmid].set(params["b2"])
    g3, b3 = params["g3"], params["b3"]

    x2d = x_nhwc.reshape(R, Cin).astype(f32)

    # ---- stage 1: conv1 (1x1), gridded over row tiles -------------------------------
    y1 = pl.pallas_call(
        _conv1_kernel,
        grid=grid_r,
        in_specs=[pl.BlockSpec((TR, Cin), lambda i: (i, 0)),
                  pl.BlockSpec((Cin, Cmid_p), lambda i: (0, 0))],
        out_specs=pl.BlockSpec((TR, Cmid_p), lambda i: (i, 0)),
        out_shape=jax.ShapeDtypeStruct((R, Cmid_p), f32),
        compiler_params=_mosaic_params(
            [TR * Cin * 4, Cin * Cmid_p * 2, TR * Cmid_p * 4]),
        cost_estimate=pl.CostEstimate(
            flops=2 * R * Cin * Cmid_p, transcendentals=0,
            bytes_accessed=R * (Cin + Cmid_p) * 4 + Cin * Cmid_p * 2),
    )(x2d, w1)
    s1, sh1 = _bn_scale_shift(y1, g1, b1)

    # ---- stage 2: BN1+ReLU + conv2 (3x3, pad=1), gridded over batch images ----------
    y2 = pl.pallas_call(
        _conv2_kernel,
        grid=(N,),
        in_specs=[pl.BlockSpec((1, H, W, Cmid_p), lambda n: (n, 0, 0, 0)),
                  pl.BlockSpec((1, Cmid_p), lambda n: (0, 0)),
                  pl.BlockSpec((1, Cmid_p), lambda n: (0, 0)),
                  pl.BlockSpec((9 * Cmid_p, Cmid_p), lambda n: (0, 0))],
        out_specs=pl.BlockSpec((HW, Cmid_p), lambda n: (n, 0)),
        out_shape=jax.ShapeDtypeStruct((R, Cmid_p), f32),
        scratch_shapes=[pltpu.VMEM((1, H + 2, W + 2, Cmid_p), bf16),
                        pltpu.VMEM((HW, 9 * Cmid_p), bf16)],
        compiler_params=_mosaic_params(
            [HW * Cmid_p * 4, Cmid_p * 4, Cmid_p * 4,
             9 * Cmid_p * Cmid_p * 2, HW * Cmid_p * 4],
            scratch_bytes=(H + 2) * (W + 2) * Cmid_p * 2 + HW * 9 * Cmid_p * 2),
        cost_estimate=pl.CostEstimate(
            flops=2 * R * 9 * Cmid_p * Cmid_p, transcendentals=0,
            bytes_accessed=2 * R * Cmid_p * 4 + 9 * Cmid_p * Cmid_p * 2),
    )(y1.reshape(N, H, W, Cmid_p), s1, sh1, w2)
    s2, sh2 = _bn_scale_shift(y2, g2, b2)

    # ---- stage 3: BN2+ReLU + conv3 (1x1), gridded over row tiles ---------------------
    y3 = pl.pallas_call(
        _conv3_kernel,
        grid=grid_r,
        in_specs=[pl.BlockSpec((TR, Cmid_p), lambda i: (i, 0)),
                  pl.BlockSpec((1, Cmid_p), lambda i: (0, 0)),
                  pl.BlockSpec((1, Cmid_p), lambda i: (0, 0)),
                  pl.BlockSpec((Cmid_p, Cin), lambda i: (0, 0))],
        out_specs=pl.BlockSpec((TR, Cin), lambda i: (i, 0)),
        out_shape=jax.ShapeDtypeStruct((R, Cin), f32),
        compiler_params=_mosaic_params(
            [TR * Cmid_p * 4, Cmid_p * 4, Cmid_p * 4,
             Cmid_p * Cin * 2, TR * Cin * 4]),
        cost_estimate=pl.CostEstimate(
            flops=2 * R * Cmid_p * Cin, transcendentals=0,
            bytes_accessed=R * (Cmid_p + Cin) * 4 + Cmid_p * Cin * 2),
    )(y2, s2, sh2, w3)
    s3, sh3 = _bn_scale_shift(y3, g3, b3)

    # ---- stage 4: BN3 + residual + ReLU, gridded elementwise -------------------------
    out2d = pl.pallas_call(
        _bn3_residual_kernel,
        grid=grid_r,
        in_specs=[pl.BlockSpec((TR, Cin), lambda i: (i, 0)),
                  pl.BlockSpec((TR, Cin), lambda i: (i, 0)),
                  pl.BlockSpec((1, Cin), lambda i: (0, 0)),
                  pl.BlockSpec((1, Cin), lambda i: (0, 0))],
        out_specs=pl.BlockSpec((TR, Cin), lambda i: (i, 0)),
        out_shape=jax.ShapeDtypeStruct((R, Cin), x_nhwc.dtype),
        compiler_params=_mosaic_params(
            [TR * Cin * 4, TR * Cin * 4, Cin * 4, Cin * 4, TR * Cin * 4]),
    )(y3, x2d, s3, sh3)

    return out2d.reshape(N, H, W, Cin)


@partial(jax.jit, static_argnames=("max_rows_per_tile",))
def bottleneck_forward(x_nchw, params, *, max_rows_per_tile=1024):
    """PyTorch-parity wrapper: NCHW in, NCHW out (layout transposes at the boundary)."""
    x = jnp.transpose(x_nchw, (0, 2, 3, 1))
    out = bottleneck_forward_nhwc(x, params, max_rows_per_tile=max_rows_per_tile)
    return jnp.transpose(out, (0, 3, 1, 2))


# ----------------------------------------------------------------------------------
# Test harness
# ----------------------------------------------------------------------------------

def make_params(key, in_planes, mid_planes):
    """Deterministic synthetic parameters with the shapes implied by __init__."""
    ks = jax.random.split(key, 8)
    scale1 = 1.0 / jnp.sqrt(in_planes)
    scale2 = 1.0 / jnp.sqrt(9.0 * mid_planes)
    scale3 = 1.0 / jnp.sqrt(mid_planes)
    return {
        # conv weights in kernel-friendly layouts:
        #   w1: (Cin, Cmid)     [1x1]
        #   w2: (9, Cmid, Cmid) [3x3, (kh*3+kw, in_c, out_c)]
        #   w3: (Cmid, Cin)     [1x1]
        "w1": jax.random.normal(ks[0], (in_planes, mid_planes), jnp.float32) * scale1,
        "w2": jax.random.normal(ks[1], (9, mid_planes, mid_planes), jnp.float32) * scale2,
        "w3": jax.random.normal(ks[2], (mid_planes, in_planes), jnp.float32) * scale3,
        # BatchNorm affine parameters, shaped (1, C) for lane broadcast.
        "g1": 1.0 + 0.1 * jax.random.normal(ks[3], (1, mid_planes), jnp.float32),
        "b1": 0.1 * jax.random.normal(ks[4], (1, mid_planes), jnp.float32),
        "g2": 1.0 + 0.1 * jax.random.normal(ks[5], (1, mid_planes), jnp.float32),
        "b2": 0.1 * jax.random.normal(ks[6], (1, mid_planes), jnp.float32),
        "g3": 1.0 + 0.1 * jax.random.normal(ks[7], (1, in_planes), jnp.float32),
        "b3": jnp.zeros((1, in_planes), jnp.float32),
    }


def ref_forward(x, params):
    """Pure-JAX f32 reference (NCHW, matching the PyTorch forward in training mode)."""
    def bn(y, g, b):
        mean = y.mean(axis=(0, 2, 3), keepdims=True)
        var = ((y - mean) ** 2).mean(axis=(0, 2, 3), keepdims=True)
        return ((y - mean) / jnp.sqrt(var + _EPS)
                * g.reshape(1, -1, 1, 1) + b.reshape(1, -1, 1, 1))

    def conv(x, w, pad):
        return jax.lax.conv_general_dilated(
            x, w, (1, 1), pad, dimension_numbers=("NCHW", "OIHW", "NCHW"),
            precision=jax.lax.Precision.HIGHEST)

    cmid = params["w1"].shape[1]
    w1 = jnp.transpose(params["w1"])[:, :, None, None]                        # (Cmid, Cin, 1, 1)
    w2 = jnp.transpose(params["w2"].reshape(3, 3, cmid, cmid), (3, 2, 0, 1))  # (Cmid, Cmid, 3, 3)
    w3 = jnp.transpose(params["w3"])[:, :, None, None]                        # (Cin, Cmid, 1, 1)

    out = jax.nn.relu(bn(conv(x, w1, "VALID"), params["g1"].ravel(), params["b1"].ravel()))
    out = jax.nn.relu(bn(conv(out, w2, [(1, 1), (1, 1)]), params["g2"].ravel(), params["b2"].ravel()))
    out = bn(conv(out, w3, "VALID"), params["g3"].ravel(), params["b3"].ravel()) + x
    return jax.nn.relu(out)


if __name__ == "__main__":
    # Small but lane-dense config: Cin = 128 (one full vreg lane width), 4:1 bottleneck.
    # Cmid = 32 gets zero-padded to 128 inside the wrapper for lane-dense mid tiles.
    N, IN_PLANES, MID_PLANES, H, W = 2, 128, 32, 8, 8

    root = jax.random.PRNGKey(0)
    kx, kp = jax.random.split(root)
    x_nhwc = jax.random.normal(kx, (N, H, W, IN_PLANES), jnp.float32)
    params = make_params(kp, IN_PLANES, MID_PLANES)

    # NHWC end-to-end; small row-tile cap so the test actually exercises grid > 1.
    out = jax.block_until_ready(
        bottleneck_forward_nhwc(x_nhwc, params, max_rows_per_tile=64))

    # Reference in NCHW (PyTorch layout); transposes live only in the test harness.
    x_nchw = jnp.transpose(x_nhwc, (0, 3, 1, 2))
    ref_nhwc = jnp.transpose(ref_forward(x_nchw, params), (0, 2, 3, 1))
    ref_nhwc = jax.block_until_ready(ref_nhwc)

    assert out.shape == x_nhwc.shape and out.dtype == x_nhwc.dtype
    max_diff = float(jnp.max(jnp.abs(out - ref_nhwc)))
    # bf16 MXU operands chained through three matmuls vs. a pure-f32 (HIGHEST) reference
    # -> bf16-level tolerance (observed max |diff| ~3e-2 on this config).
    assert jnp.allclose(out, ref_nhwc, atol=1e-1, rtol=1e-1), f"max abs diff {max_diff}"

    # PyTorch-parity NCHW wrapper gives the same result.
    out_nchw = jax.block_until_ready(
        bottleneck_forward(x_nchw, params, max_rows_per_tile=64))
    assert jnp.allclose(out_nchw, jnp.transpose(out, (0, 3, 1, 2)), atol=1e-3, rtol=1e-3)

    print("KERNEL_OK")
</pallas_src>

<mosaic_0001>
module attributes {stable_mosaic.version = 11 : i64} {
  func.func @_conv1_kernel(%arg0: i32, %arg1: memref<64x128xf32, #tpu.memory_space<vmem>>, %arg2: memref<128x128xbf16, #tpu.memory_space<vmem>>, %arg3: memref<64x128xf32, #tpu.memory_space<vmem>>) attributes {dimension_semantics = [#tpu.dimension_semantics<parallel>], iteration_bounds = array<i64: 2>, scalar_prefetch = 0 : i64, scratch_operands = 0 : i64, tpu.core_type = #tpu.core_type<tc>, window_params = [{transform_indices = @transform_0, window_bounds = array<i64: 64, 128>}, {pipeline_mode = #tpu.pipeline_mode<synchronous>, transform_indices = @transform_1, window_bounds = array<i64: 128, 128>}, {transform_indices = @transform_2, window_bounds = array<i64: 64, 128>}]} {
    %c0 = arith.constant 0 : index
    %c0_0 = arith.constant 0 : index
    %0 = vector.load %arg1[%c0, %c0_0] : memref<64x128xf32, #tpu.memory_space<vmem>>, vector<64x128xf32>
    %1 = arith.truncf %0 : vector<64x128xf32> to vector<64x128xbf16>
    %c0_1 = arith.constant 0 : index
    %c0_2 = arith.constant 0 : index
    %2 = vector.load %arg2[%c0_1, %c0_2] : memref<128x128xbf16, #tpu.memory_space<vmem>>, vector<128x128xbf16>
    %cst = arith.constant dense<0.000000e+00> : vector<64x128xf32>
    %3 = tpu.matmul %1, %2, %cst {dimension_numbers = #tpu.dot_dimension_numbers<[1], [0], [0], [1], [0, 0, 1, 1], [], []>} : vector<64x128xbf16>, vector<128x128xbf16>, vector<64x128xf32> -> vector<64x128xf32>
    %c0_3 = arith.constant 0 : index
    %c0_4 = arith.constant 0 : index
    %4 = vector.load %arg3[%c0_3, %c0_4] : memref<64x128xf32, #tpu.memory_space<vmem>>, vector<64x128xf32>
    tpu.vector_store %arg3[%c0_3, %c0_4], %3 {strides = array<i32>} : memref<64x128xf32, #tpu.memory_space<vmem>>, vector<64x128xf32>,
    return
  }
  func.func @transform_0(%arg0: i32) -> (i32, i32) {
    %c0_i32 = arith.constant 0 : i32
    %c0_i32_0 = arith.constant 0 : i32
    return %arg0, %c0_i32 : i32, i32
  }
  func.func @transform_1(%arg0: i32) -> (i32, i32) {
    %c0_i32 = arith.constant 0 : i32
    %c0_i32_0 = arith.constant 0 : i32
    %c0_i32_1 = arith.constant 0 : i32
    return %c0_i32, %c0_i32_0 : i32, i32
  }
  func.func @transform_2(%arg0: i32) -> (i32, i32) {
    %c0_i32 = arith.constant 0 : i32
    %c0_i32_0 = arith.constant 0 : i32
    return %arg0, %c0_i32 : i32, i32
  }
}

module attributes {stable_mosaic.version = 11 : i64} {
  func.func @_conv2_kernel(%arg0: i32, %arg1: memref<1x8x8x128xf32, #tpu.memory_space<vmem>>, %arg2: memref<1x128xf32, #tpu.memory_space<vmem>>, %arg3: memref<1x128xf32, #tpu.memory_space<vmem>>, %arg4: memref<1152x128xbf16, #tpu.memory_space<vmem>>, %arg5: memref<64x128xf32, #tpu.memory_space<vmem>>, %arg6: memref<1x10x10x128xbf16, #tpu.memory_space<vmem>>, %arg7: memref<64x1152xbf16, #tpu.memory_space<vmem>>) attributes {dimension_semantics = [#tpu.dimension_semantics<parallel>], iteration_bounds = array<i64: 2>, scalar_prefetch = 0 : i64, scratch_operands = 2 : i64, tpu.core_type = #tpu.core_type<tc>, window_params = [{transform_indices = @transform_0, window_bounds = array<i64: 1, 8, 8, 128>}, {pipeline_mode = #tpu.pipeline_mode<synchronous>, transform_indices = @transform_1, window_bounds = array<i64: 1, 128>}, {pipeline_mode = #tpu.pipeline_mode<synchronous>, transform_indices = @transform_2, window_bounds = array<i64: 1, 128>}, {pipeline_mode = #tpu.pipeline_mode<synchronous>, transform_indices = @transform_3, window_bounds = array<i64: 1152, 128>}, {transform_indices = @transform_4, window_bounds = array<i64: 64, 128>}]} {
    %c0 = arith.constant 0 : index
    %c0_0 = arith.constant 0 : index
    %0 = vector.load %arg2[%c0, %c0_0] : memref<1x128xf32, #tpu.memory_space<vmem>>, vector<1x128xf32>
    %1 = vector.shape_cast %0 : vector<1x128xf32> to vector<1x1x1x128xf32>
    %c0_1 = arith.constant 0 : index
    %c0_2 = arith.constant 0 : index
    %2 = vector.load %arg3[%c0_1, %c0_2] : memref<1x128xf32, #tpu.memory_space<vmem>>, vector<1x128xf32>
    %3 = vector.shape_cast %2 : vector<1x128xf32> to vector<1x1x1x128xf32>
    %c0_3 = arith.constant 0 : index
    %c0_4 = arith.constant 0 : index
    %c0_5 = arith.constant 0 : index
    %c0_6 = arith.constant 0 : index
    %4 = vector.load %arg1[%c0_3, %c0_4, %c0_5, %c0_6] : memref<1x8x8x128xf32, #tpu.memory_space<vmem>>, vector<1x8x8x128xf32>
    %5 = vector.broadcast %1 : vector<1x1x1x128xf32> to vector<1x8x8x128xf32>
    %6 = arith.mulf %4, %5 : vector<1x8x8x128xf32>
    %7 = vector.broadcast %3 : vector<1x1x1x128xf32> to vector<1x8x8x128xf32>
    %8 = arith.addf %6, %7 : vector<1x8x8x128xf32>
    %cst = arith.constant 0.000000e+00 : f32
    %9 = vector.broadcast %cst : f32 to vector<1x8x8x128xf32>
    %10 = arith.maximumf %8, %9 : vector<1x8x8x128xf32>
    %11 = arith.truncf %10 : vector<1x8x8x128xf32> to vector<1x8x8x128xbf16>
    %cst_7 = arith.constant 0.000000e+00 : bf16
    %12 = vector.broadcast %cst_7 : bf16 to vector<1x1x10x128xbf16>
    %c0_8 = arith.constant 0 : index
    %c0_9 = arith.constant 0 : index
    %c0_10 = arith.constant 0 : index
    %c0_11 = arith.constant 0 : index
    %13 = vector.load %arg6[%c0_8, %c0_9, %c0_10, %c0_11] : memref<1x10x10x128xbf16, #tpu.memory_space<vmem>>, vector<1x1x10x128xbf16>
    tpu.vector_store %arg6[%c0_8, %c0_9, %c0_10, %c0_11], %12 {strides = array<i32>} : memref<1x10x10x128xbf16, #tpu.memory_space<vmem>>, vector<1x1x10x128xbf16>,
    %cst_12 = arith.constant 0.000000e+00 : bf16
    %14 = vector.broadcast %cst_12 : bf16 to vector<1x1x10x128xbf16>
    %c0_13 = arith.constant 0 : index
    %c9 = arith.constant 9 : index
    %c0_14 = arith.constant 0 : index
    %c0_15 = arith.constant 0 : index
    %15 = vector.load %arg6[%c0_13, %c9, %c0_14, %c0_15] : memref<1x10x10x128xbf16, #tpu.memory_space<vmem>>, vector<1x1x10x128xbf16>
    tpu.vector_store %arg6[%c0_13, %c9, %c0_14, %c0_15], %14 {strides = array<i32>} : memref<1x10x10x128xbf16, #tpu.memory_space<vmem>>, vector<1x1x10x128xbf16>,
    %cst_16 = arith.constant 0.000000e+00 : bf16
    %16 = vector.broadcast %cst_16 : bf16 to vector<1x10x1x128xbf16>
    %c0_17 = arith.constant 0 : index
    %c0_18 = arith.constant 0 : index
    %c0_19 = arith.constant 0 : index
    %c0_20 = arith.constant 0 : index
    %17 = vector.load %arg6[%c0_17, %c0_18, %c0_19, %c0_20] : memref<1x10x10x128xbf16, #tpu.memory_space<vmem>>, vector<1x10x1x128xbf16>
    tpu.vector_store %arg6[%c0_17, %c0_18, %c0_19, %c0_20], %16 {strides = array<i32>} : memref<1x10x10x128xbf16, #tpu.memory_space<vmem>>, vector<1x10x1x128xbf16>,
    %cst_21 = arith.constant 0.000000e+00 : bf16
    %18 = vector.broadcast %cst_21 : bf16 to vector<1x10x1x128xbf16>
    %c0_22 = arith.constant 0 : index
    %c0_23 = arith.constant 0 : index
    %c9_24 = arith.constant 9 : index
    %c0_25 = arith.constant 0 : index
    %19 = vector.load %arg6[%c0_22, %c0_23, %c9_24, %c0_25] : memref<1x10x10x128xbf16, #tpu.memory_space<vmem>>, vector<1x10x1x128xbf16>
    tpu.vector_store %arg6[%c0_22, %c0_23, %c9_24, %c0_25], %18 {strides = array<i32>} : memref<1x10x10x128xbf16, #tpu.memory_space<vmem>>, vector<1x10x1x128xbf16>,
    %c0_26 = arith.constant 0 : index
    %c1 = arith.constant 1 : index
    %c1_27 = arith.constant 1 : index
    %c0_28 = arith.constant 0 : index
    %20 = vector.load %arg6[%c0_26, %c1, %c1_27, %c0_28] : memref<1x10x10x128xbf16, #tpu.memory_space<vmem>>, vector<1x8x8x128xbf16>
    tpu.vector_store %arg6[%c0_26, %c1, %c1_27, %c0_28], %11 {strides = array<i32>} : memref<1x10x10x128xbf16, #tpu.memory_space<vmem>>, vector<1x8x8x128xbf16>,
    %c0_29 = arith.constant 0 : index
    %c0_30 = arith.constant 0 : index
    %c0_31 = arith.constant 0 : index
    %c0_32 = arith.constant 0 : index
    %21 = vector.load %arg6[%c0_29, %c0_30, %c0_31, %c0_32] : memref<1x10x10x128xbf16, #tpu.memory_space<vmem>>, vector<1x8x8x128xbf16>
    %22 = vector.shape_cast %21 : vector<1x8x8x128xbf16> to vector<64x128xbf16>
    %c0_33 = arith.constant 0 : index
    %c0_34 = arith.constant 0 : index
    %23 = vector.load %arg7[%c0_33, %c0_34] : memref<64x1152xbf16, #tpu.memory_space<vmem>>, vector<64x128xbf16>
    tpu.vector_store %arg7[%c0_33, %c0_34], %22 {strides = array<i32>} : memref<64x1152xbf16, #tpu.memory_space<vmem>>, vector<64x128xbf16>,
    %c0_35 = arith.constant 0 : index
    %c0_36 = arith.constant 0 : index
    %c1_37 = arith.constant 1 : index
    %c0_38 = arith.constant 0 : index
    %24 = vector.load %arg6[%c0_35, %c0_36, %c1_37, %c0_38] : memref<1x10x10x128xbf16, #tpu.memory_space<vmem>>, vector<1x8x8x128xbf16>
    %25 = vector.shape_cast %24 : vector<1x8x8x128xbf16> to vector<64x128xbf16>
    %c0_39 = arith.constant 0 : index
    %c128 = arith.constant 128 : index
    %26 = vector.load %arg7[%c0_39, %c128] : memref<64x1152xbf16, #tpu.memory_space<vmem>>, vector<64x128xbf16>
    tpu.vector_store %arg7[%c0_39, %c128], %25 {strides = array<i32>} : memref<64x1152xbf16, #tpu.memory_space<vmem>>, vector<64x128xbf16>,
    %c0_40 = arith.constant 0 : index
    %c0_41 = arith.constant 0 : index
    %c2 = arith.constant 2 : index
    %c0_42 = arith.constant 0 : index
    %27 = vector.load %arg6[%c0_40, %c0_41, %c2, %c0_42] : memref<1x10x10x128xbf16, #tpu.memory_space<vmem>>, vector<1x8x8x128xbf16>
    %28 = vector.shape_cast %27 : vector<1x8x8x128xbf16> to vector<64x128xbf16>
    %c0_43 = arith.constant 0 : index
    %c256 = arith.constant 256 : index
    %29 = vector.load %arg7[%c0_43, %c256] : memref<64x1152xbf16, #tpu.memory_space<vmem>>, vector<64x128xbf16>
    tpu.vector_store %arg7[%c0_43, %c256], %28 {strides = array<i32>} : memref<64x1152xbf16, #tpu.memory_space<vmem>>, vector<64x128xbf16>,
    %c0_44 = arith.constant 0 : index
    %c1_45 = arith.constant 1 : index
    %c0_46 = arith.constant 0 : index
    %c0_47 = arith.constant 0 : index
    %30 = vector.load %arg6[%c0_44, %c1_45, %c0_46, %c0_47] : memref<1x10x10x128xbf16, #tpu.memory_space<vmem>>, vector<1x8x8x128xbf16>
    %31 = vector.shape_cast %30 : vector<1x8x8x128xbf16> to vector<64x128xbf16>
    %c0_48 = arith.constant 0 : index
    %c384 = arith.constant 384 : index
    %32 = vector.load %arg7[%c0_48, %c384] : memref<64x1152xbf16, #tpu.memory_space<vmem>>, vector<64x128xbf16>
    tpu.vector_store %arg7[%c0_48, %c384], %31 {strides = array<i32>} : memref<64x1152xbf16, #tpu.memory_space<vmem>>, vector<64x128xbf16>,
    %c0_49 = arith.constant 0 : index
    %c1_50 = arith.constant 1 : index
    %c1_51 = arith.constant 1 : index
    %c0_52 = arith.constant 0 : index
    %33 = vector.load %arg6[%c0_49, %c1_50, %c1_51, %c0_52] : memref<1x10x10x128xbf16, #tpu.memory_space<vmem>>, vector<1x8x8x128xbf16>
    %34 = vector.shape_cast %33 : vector<1x8x8x128xbf16> to vector<64x128xbf16>
    %c0_53 = arith.constant 0 : index
    %c512 = arith.constant 512 : index
    %35 = vector.load %arg7[%c0_53, %c512] : memref<64x1152xbf16, #tpu.memory_space<vmem>>, vector<64x128xbf16>
    tpu.vector_store %arg7[%c0_53, %c512], %34 {strides = array<i32>} : memref<64x1152xbf16, #tpu.memory_space<vmem>>, vector<64x128xbf16>,
    %c0_54 = arith.constant 0 : index
    %c1_55 = arith.constant 1 : index
    %c2_56 = arith.constant 2 : index
    %c0_57 = arith.constant 0 : index
    %36 = vector.load %arg6[%c0_54, %c1_55, %c2_56, %c0_57] : memref<1x10x10x128xbf16, #tpu.memory_space<vmem>>, vector<1x8x8x128xbf16>
    %37 = vector.shape_cast %36 : vector<1x8x8x128xbf16> to vector<64x128xbf16>
    %c0_58 = arith.constant 0 : index
    %c640 = arith.constant 640 : index
    %38 = vector.load %arg7[%c0_58, %c640] : memref<64x1152xbf16, #tpu.memory_space<vmem>>, vector<64x128xbf16>
    tpu.vector_store %arg7[%c0_58, %c640], %37 {strides = array<i32>} : memref<64x1152xbf16, #tpu.memory_space<vmem>>, vector<64x128xbf16>,
    %c0_59 = arith.constant 0 : index
    %c2_60 = arith.constant 2 : index
    %c0_61 = arith.constant 0 : index
    %c0_62 = arith.constant 0 : index
    %39 = vector.load %arg6[%c0_59, %c2_60, %c0_61, %c0_62] : memref<1x10x10x128xbf16, #tpu.memory_space<vmem>>, vector<1x8x8x128xbf16>
    %40 = vector.shape_cast %39 : vector<1x8x8x128xbf16> to vector<64x128xbf16>
    %c0_63 = arith.constant 0 : index
    %c768 = arith.constant 768 : index
    %41 = vector.load %arg7[%c0_63, %c768] : memref<64x1152xbf16, #tpu.memory_space<vmem>>, vector<64x128xbf16>
    tpu.vector_store %arg7[%c0_63, %c768], %40 {strides = array<i32>} : memref<64x1152xbf16, #tpu.memory_space<vmem>>, vector<64x128xbf16>,
    %c0_64 = arith.constant 0 : index
    %c2_65 = arith.constant 2 : index
    %c1_66 = arith.constant 1 : index
    %c0_67 = arith.constant 0 : index
    %42 = vector.load %arg6[%c0_64, %c2_65, %c1_66, %c0_67] : memref<1x10x10x128xbf16, #tpu.memory_space<vmem>>, vector<1x8x8x128xbf16>
    %43 = vector.shape_cast %42 : vector<1x8x8x128xbf16> to vector<64x128xbf16>
    %c0_68 = arith.constant 0 : index
    %c896 = arith.constant 896 : index
    %44 = vector.load %arg7[%c0_68, %c896] : memref<64x1152xbf16, #tpu.memory_space<vmem>>, vector<64x128xbf16>
    tpu.vector_store %arg7[%c0_68, %c896], %43 {strides = array<i32>} : memref<64x1152xbf16, #tpu.memory_space<vmem>>, vector<64x128xbf16>,
    %c0_69 = arith.constant 0 : index
    %c2_70 = arith.constant 2 : index
    %c2_71 = arith.constant 2 : index
    %c0_72 = arith.constant 0 : index
    %45 = vector.load %arg6[%c0_69, %c2_70, %c2_71, %c0_72] : memref<1x10x10x128xbf16, #tpu.memory_space<vmem>>, vector<1x8x8x128xbf16>
    %46 = vector.shape_cast %45 : vector<1x8x8x128xbf16> to vector<64x128xbf16>
    %c0_73 = arith.constant 0 : index
    %c1024 = arith.constant 1024 : index
    %47 = vector.load %arg7[%c0_73, %c1024] : memref<64x1152xbf16, #tpu.memory_space<vmem>>, vector<64x128xbf16>
    tpu.vector_store %arg7[%c0_73, %c1024], %46 {strides = array<i32>} : memref<64x1152xbf16, #tpu.memory_space<vmem>>, vector<64x128xbf16>,
    %c0_74 = arith.constant 0 : index
    %c0_75 = arith.constant 0 : index
    %48 = vector.load %arg7[%c0_74, %c0_75] : memref<64x1152xbf16, #tpu.memory_space<vmem>>, vector<64x1152xbf16>
    %c0_76 = arith.constant 0 : index
    %c0_77 = arith.constant 0 : index
    %49 = vector.load %arg4[%c0_76, %c0_77] : memref<1152x128xbf16, #tpu.memory_space<vmem>>, vector<1152x128xbf16>
    %cst_78 = arith.constant dense<0.000000e+00> : vector<64x128xf32>
    %50 = tpu.matmul %48, %49, %cst_78 {dimension_numbers = #tpu.dot_dimension_numbers<[1], [0], [0], [1], [0, 0, 1, 1], [], []>} : vector<64x1152xbf16>, vector<1152x128xbf16>, vector<64x128xf32> -> vector<64x128xf32>
    %c0_79 = arith.constant 0 : index
    %c0_80 = arith.constant 0 : index
    %51 = vector.load %arg5[%c0_79, %c0_80] : memref<64x128xf32, #tpu.memory_space<vmem>>, vector<64x128xf32>
    tpu.vector_store %arg5[%c0_79, %c0_80], %50 {strides = array<i32>} : memref<64x128xf32, #tpu.memory_space<vmem>>, vector<64x128xf32>,
    return
  }
  func.func @transform_0(%arg0: i32) -> (i32, i32, i32, i32) {
    %c0_i32 = arith.constant 0 : i32
    %c0_i32_0 = arith.constant 0 : i32
    %c0_i32_1 = arith.constant 0 : i32
    %c0_i32_2 = arith.constant 0 : i32
    return %arg0, %c0_i32, %c0_i32_0, %c0_i32_1 : i32, i32, i32, i32
  }
  func.func @transform_1(%arg0: i32) -> (i32, i32) {
    %c0_i32 = arith.constant 0 : i32
    %c0_i32_0 = arith.constant 0 : i32
    %c0_i32_1 = arith.constant 0 : i32
    return %c0_i32, %c0_i32_0 : i32, i32
  }
  func.func @transform_2(%arg0: i32) -> (i32, i32) {
    %c0_i32 = arith.constant 0 : i32
    %c0_i32_0 = arith.constant 0 : i32
    %c0_i32_1 = arith.constant 0 : i32
    return %c0_i32, %c0_i32_0 : i32, i32
  }
  func.func @transform_3(%arg0: i32) -> (i32, i32) {
    %c0_i32 = arith.constant 0 : i32
    %c0_i32_0 = arith.constant 0 : i32
    %c0_i32_1 = arith.constant 0 : i32
    return %c0_i32, %c0_i32_0 : i32, i32
  }
  func.func @transform_4(%arg0: i32) -> (i32, i32) {
    %c0_i32 = arith.constant 0 : i32
    %c0_i32_0 = arith.constant 0 : i32
    return %arg0, %c0_i32 : i32, i32
  }
}

module attributes {stable_mosaic.version = 11 : i64} {
  func.func @_conv3_kernel(%arg0: i32, %arg1: memref<64x128xf32, #tpu.memory_space<vmem>>, %arg2: memref<1x128xf32, #tpu.memory_space<vmem>>, %arg3: memref<1x128xf32, #tpu.memory_space<vmem>>, %arg4: memref<128x128xbf16, #tpu.memory_space<vmem>>, %arg5: memref<64x128xf32, #tpu.memory_space<vmem>>) attributes {dimension_semantics = [#tpu.dimension_semantics<parallel>], iteration_bounds = array<i64: 2>, scalar_prefetch = 0 : i64, scratch_operands = 0 : i64, tpu.core_type = #tpu.core_type<tc>, window_params = [{transform_indices = @transform_0, window_bounds = array<i64: 64, 128>}, {pipeline_mode = #tpu.pipeline_mode<synchronous>, transform_indices = @transform_1, window_bounds = array<i64: 1, 128>}, {pipeline_mode = #tpu.pipeline_mode<synchronous>, transform_indices = @transform_2, window_bounds = array<i64: 1, 128>}, {pipeline_mode = #tpu.pipeline_mode<synchronous>, transform_indices = @transform_3, window_bounds = array<i64: 128, 128>}, {transform_indices = @transform_4, window_bounds = array<i64: 64, 128>}]} {
    %c0 = arith.constant 0 : index
    %c0_0 = arith.constant 0 : index
    %0 = vector.load %arg1[%c0, %c0_0] : memref<64x128xf32, #tpu.memory_space<vmem>>, vector<64x128xf32>
    %c0_1 = arith.constant 0 : index
    %c0_2 = arith.constant 0 : index
    %1 = vector.load %arg2[%c0_1, %c0_2] : memref<1x128xf32, #tpu.memory_space<vmem>>, vector<1x128xf32>
    %2 = vector.broadcast %1 : vector<1x128xf32> to vector<64x128xf32>
    %3 = arith.mulf %0, %2 : vector<64x128xf32>
    %c0_3 = arith.constant 0 : index
    %c0_4 = arith.constant 0 : index
    %4 = vector.load %arg3[%c0_3, %c0_4] : memref<1x128xf32, #tpu.memory_space<vmem>>, vector<1x128xf32>
    %5 = vector.broadcast %4 : vector<1x128xf32> to vector<64x128xf32>
    %6 = arith.addf %3, %5 : vector<64x128xf32>
    %cst = arith.constant 0.000000e+00 : f32
    %7 = vector.broadcast %cst : f32 to vector<64x128xf32>
    %8 = arith.maximumf %6, %7 : vector<64x128xf32>
    %9 = arith.truncf %8 : vector<64x128xf32> to vector<64x128xbf16>
    %c0_5 = arith.constant 0 : index
    %c0_6 = arith.constant 0 : index
    %10 = vector.load %arg4[%c0_5, %c0_6] : memref<128x128xbf16, #tpu.memory_space<vmem>>, vector<128x128xbf16>
    %cst_7 = arith.constant dense<0.000000e+00> : vector<64x128xf32>
    %11 = tpu.matmul %9, %10, %cst_7 {dimension_numbers = #tpu.dot_dimension_numbers<[1], [0], [0], [1], [0, 0, 1, 1], [], []>} : vector<64x128xbf16>, vector<128x128xbf16>, vector<64x128xf32> -> vector<64x128xf32>
    %c0_8 = arith.constant 0 : index
    %c0_9 = arith.constant 0 : index
    %12 = vector.load %arg5[%c0_8, %c0_9] : memref<64x128xf32, #tpu.memory_space<vmem>>, vector<64x128xf32>
    tpu.vector_store %arg5[%c0_8, %c0_9], %11 {strides = array<i32>} : memref<64x128xf32, #tpu.memory_space<vmem>>, vector<64x128xf32>,
    return
  }
  func.func @transform_0(%arg0: i32) -> (i32, i32) {
    %c0_i32 = arith.constant 0 : i32
    %c0_i32_0 = arith.constant 0 : i32
    return %arg0, %c0_i32 : i32, i32
  }
  func.func @transform_1(%arg0: i32) -> (i32, i32) {
    %c0_i32 = arith.constant 0 : i32
    %c0_i32_0 = arith.constant 0 : i32
    %c0_i32_1 = arith.constant 0 : i32
    return %c0_i32, %c0_i32_0 : i32, i32
  }
  func.func @transform_2(%arg0: i32) -> (i32, i32) {
    %c0_i32 = arith.constant 0 : i32
    %c0_i32_0 = arith.constant 0 : i32
    %c0_i32_1 = arith.constant 0 : i32
    return %c0_i32, %c0_i32_0 : i32, i32
  }
  func.func @transform_3(%arg0: i32) -> (i32, i32) {
    %c0_i32 = arith.constant 0 : i32
    %c0_i32_0 = arith.constant 0 : i32
    %c0_i32_1 = arith.constant 0 : i32
    return %c0_i32, %c0_i32_0 : i32, i32
  }
  func.func @transform_4(%arg0: i32) -> (i32, i32) {
    %c0_i32 = arith.constant 0 : i32
    %c0_i32_0 = arith.constant 0 : i32
    return %arg0, %c0_i32 : i32, i32
  }
}

module attributes {stable_mosaic.version = 11 : i64} {
  func.func @_bn3_residual_kernel(%arg0: i32, %arg1: memref<64x128xf32, #tpu.memory_space<vmem>>, %arg2: memref<64x128xf32, #tpu.memory_space<vmem>>, %arg3: memref<1x128xf32, #tpu.memory_space<vmem>>, %arg4: memref<1x128xf32, #tpu.memory_space<vmem>>, %arg5: memref<64x128xf32, #tpu.memory_space<vmem>>) attributes {dimension_semantics = [#tpu.dimension_semantics<parallel>], iteration_bounds = array<i64: 2>, scalar_prefetch = 0 : i64, scratch_operands = 0 : i64, tpu.core_type = #tpu.core_type<tc>, window_params = [{transform_indices = @transform_0, window_bounds = array<i64: 64, 128>}, {transform_indices = @transform_1, window_bounds = array<i64: 64, 128>}, {pipeline_mode = #tpu.pipeline_mode<synchronous>, transform_indices = @transform_2, window_bounds = array<i64: 1, 128>}, {pipeline_mode = #tpu.pipeline_mode<synchronous>, transform_indices = @transform_3, window_bounds = array<i64: 1, 128>}, {transform_indices = @transform_4, window_bounds = array<i64: 64, 128>}]} {
    %c0 = arith.constant 0 : index
    %c0_0 = arith.constant 0 : index
    %0 = vector.load %arg1[%c0, %c0_0] : memref<64x128xf32, #tpu.memory_space<vmem>>, vector<64x128xf32>
    %c0_1 = arith.constant 0 : index
    %c0_2 = arith.constant 0 : index
    %1 = vector.load %arg3[%c0_1, %c0_2] : memref<1x128xf32, #tpu.memory_space<vmem>>, vector<1x128xf32>
    %2 = vector.broadcast %1 : vector<1x128xf32> to vector<64x128xf32>
    %3 = arith.mulf %0, %2 : vector<64x128xf32>
    %c0_3 = arith.constant 0 : index
    %c0_4 = arith.constant 0 : index
    %4 = vector.load %arg4[%c0_3, %c0_4] : memref<1x128xf32, #tpu.memory_space<vmem>>, vector<1x128xf32>
    %5 = vector.broadcast %4 : vector<1x128xf32> to vector<64x128xf32>
    %6 = arith.addf %3, %5 : vector<64x128xf32>
    %c0_5 = arith.constant 0 : index
    %c0_6 = arith.constant 0 : index
    %7 = vector.load %arg2[%c0_5, %c0_6] : memref<64x128xf32, #tpu.memory_space<vmem>>, vector<64x128xf32>
    %8 = arith.addf %6, %7 : vector<64x128xf32>
    %cst = arith.constant 0.000000e+00 : f32
    %9 = vector.broadcast %cst : f32 to vector<64x128xf32>
    %10 = arith.maximumf %8, %9 : vector<64x128xf32>
    %c0_7 = arith.constant 0 : index
    %c0_8 = arith.constant 0 : index
    %11 = vector.load %arg5[%c0_7, %c0_8] : memref<64x128xf32, #tpu.memory_space<vmem>>, vector<64x128xf32>
    tpu.vector_store %arg5[%c0_7, %c0_8], %10 {strides = array<i32>} : memref<64x128xf32, #tpu.memory_space<vmem>>, vector<64x128xf32>,
    return
  }
  func.func @transform_0(%arg0: i32) -> (i32, i32) {
    %c0_i32 = arith.constant 0 : i32
    %c0_i32_0 = arith.constant 0 : i32
    return %arg0, %c0_i32 : i32, i32
  }
  func.func @transform_1(%arg0: i32) -> (i32, i32) {
    %c0_i32 = arith.constant 0 : i32
    %c0_i32_0 = arith.constant 0 : i32
    return %arg0, %c0_i32 : i32, i32
  }
  func.func @transform_2(%arg0: i32) -> (i32, i32) {
    %c0_i32 = arith.constant 0 : i32
    %c0_i32_0 = arith.constant 0 : i32
    %c0_i32_1 = arith.constant 0 : i32
    return %c0_i32, %c0_i32_0 : i32, i32
  }
  func.func @transform_3(%arg0: i32) -> (i32, i32) {
    %c0_i32 = arith.constant 0 : i32
    %c0_i32_0 = arith.constant 0 : i32
    %c0_i32_1 = arith.constant 0 : i32
    return %c0_i32, %c0_i32_0 : i32, i32
  }
  func.func @transform_4(%arg0: i32) -> (i32, i32) {
    %c0_i32 = arith.constant 0 : i32
    %c0_i32_0 = arith.constant 0 : i32
    return %arg0, %c0_i32 : i32, i32
  }
}

</mosaic_0001>

<llo_original>
// kernel: bottleneck_forward_nhwc.4
$region0: #{bottleneck_forward_nhwc.4}
  #allocation0 [shape = 'u32[]', space=smem, size = 0x4, offset = 0x4, fixed_abs, tag = 'smem constant byte address 0x4 - core index']
  #allocation1 [shape = 'u32[144,128]{1,0:T(1,128)}', space=vmem, size = 0x12000, scoped, tag = 'internal scratch']
  %s0 = inlined_call_operand.vmem [shape: f32[128,128], index: 0, kind: input, shape index: {}]
  %s1 = inlined_call_operand.vmem [shape: bf16[128,128], index: 1, kind: input, shape index: {}]
  %s2 = inlined_call_operand.vmem [shape: f32[128,128], index: 2, kind: output, shape index: {}]
  %s3 = sld [smem:[#allocation0]]
  $region41: #{bottleneck_forward_nhwc.4} parent=0
    _
  %s5 = ssub.s32 1, %s3
  %s6 = scalar_select 0, %s5, %s3
  loop: start=0, step=1, limit=4
  $region2: #{bottleneck_forward_nhwc.4} parent=0 // loop_pre_header
    _
  $region3: #{bottleneck_forward_nhwc.4} parent=0 // loop_header
    %s8 = sphi 0, %s12
    %p9 = scmp.ge.s32.totalorder %s8, 4
    %s18 = sphi 0, %s20
    %s21 = sphi 0, %s18
    %s22 = sphi 0, %s21
    %s38 = sphi 0, %s22
    %s42 = sphi 0, %s42
    %s44 = sphi 0, %s42
    %s45 = sphi 0, %s44
    %s59 = sphi 0, %s45
    %s65 = sphi 0, %s67
    %s68 = sphi 0, %s65
    %s69 = sphi 0, %s68
    %s85 = sphi 0, %s69
  $region4: #{bottleneck_forward_nhwc.4} parent=0 // loop_header_branch
    %11 = sbr.rel (%p9) target = $region8
  $region5: #{bottleneck_forward_nhwc.4} parent=0 // loop_body
    %s13 = ssub.s32 %s8, 1
    %s14 = ssub.s32 %s8, 2
    %s15 = sadd.s32 %s8, 1
    %s16 = ssub.s32 %s8, %s15
    %p17 = scmp.eq.s32.totalorder %s16, 0
    %s19 = sadd.s32 %s18, 1
    %s20 = scalar_select %p17, %s18, %s19
    %p23 = pneg %p17
    %p24 = scmp.eq.s32.totalorder %s8, 1
    %p25 = por %p23, %p24
    %p26 = scmp.ne.s32.totalorder %s18, %s21
    %p27 = scmp.eq.s32.totalorder %s8, 0
    %p28 = por %p26, %p27
    %p29 = scmp.ne.s32.totalorder %s18, %s21
    %p30 = scmp.eq.s32.totalorder %s13, 1
    %p31 = por %p29, %p30
    %p32 = scmp.ne.s32.totalorder %s21, %s22
    %p33 = scmp.eq.s32.totalorder %s13, 0
    %p34 = por %p32, %p33
    %p35 = scmp.ne.s32.totalorder %s21, %s22
    %p36 = scmp.eq.s32.totalorder %s14, 1
    %p37 = por %p35, %p36
    %p39 = scmp.ne.s32.totalorder %s22, %s38
    %p40 = scmp.eq.s32.totalorder %s14, 0
    %p41 = por %p39, %p40
    %s43 = sadd.s32 %s42, 1
    %p46 = scmp.eq.s32.totalorder %s8, 1
    %p47 = scmp.ne.s32.totalorder %s42, %s44
    %p48 = scmp.eq.s32.totalorder %s8, 0
    %p49 = por %p47, %p48
    %p50 = scmp.ne.s32.totalorder %s42, %s44
    %p51 = scmp.eq.s32.totalorder %s13, 1
    %p52 = por %p50, %p51
    %p53 = scmp.ne.s32.totalorder %s44, %s45
    %p54 = scmp.eq.s32.totalorder %s13, 0
    %p55 = por %p53, %p54
    %p56 = scmp.ne.s32.totalorder %s44, %s45
    %p57 = scmp.eq.s32.totalorder %s14, 1
    %p58 = por %p56, %p57
    %p60 = scmp.ne.s32.totalorder %s45, %s59
    %p61 = scmp.eq.s32.totalorder %s14, 0
    %p62 = por %p60, %p61
    %s63 = ssub.s32 %s8, %s15
    %p64 = scmp.eq.s32.totalorder %s63, 0
    %s66 = sadd.s32 %s65, 1
    %s67 = scalar_select %p64, %s65, %s66
    %p70 = pneg %p64
    %p71 = scmp.eq.s32.totalorder %s8, 1
    %p72 = por %p70, %p71
    %p73 = scmp.ne.s32.totalorder %s65, %s68
    %p74 = scmp.eq.s32.totalorder %s8, 0
    %p75 = por %p73, %p74
    %p76 = scmp.ne.s32.totalorder %s65, %s68
    %p77 = scmp.eq.s32.totalorder %s13, 1
    %p78 = por %p76, %p77
    %p79 = scmp.ne.s32.totalorder %s68, %s69
    %p80 = scmp.eq.s32.totalorder %s13, 0
    %p81 = por %p79, %p80
    %p82 = scmp.ne.s32.totalorder %s68, %s69
    %p83 = scmp.eq.s32.totalorder %s14, 1
    %p84 = por %p82, %p83
    %p86 = scmp.ne.s32.totalorder %s69, %s85
    %p87 = scmp.eq.s32.totalorder %s14, 0
    %p88 = por %p86, %p87
    %p89 = scmp.le.s32.totalorder 1, %s8
    %p90 = scmp.lt.s32.totalorder %s8, 3
    %p91 = pnand %p89, %p90
    %p92 = pneg %p91
    // Predicated region
    $region9: #{bottleneck_forward_nhwc.4} parent=5 // pred_check
      _
    $region10: #{bottleneck_forward_nhwc.4} parent=5 // pred_check_branch
      %94 = sbr.rel (%p91) target = $region12
    $region11: #{bottleneck_forward_nhwc.4} parent=5 // pred_region
      %s95 = ssub.s32 %s8, 1
      // Predicated region
      $region13: #{bottleneck_forward_nhwc.4} parent=11 // pred_check
        %p96 = pneg %p55
      $region14: #{bottleneck_forward_nhwc.4} parent=11 // pred_check_branch
        %98 = sbr.rel (%p96) target = $region16
      $region15: #{bottleneck_forward_nhwc.4} parent=11 // pred_region
        _
      $region16: #{bottleneck_forward_nhwc.4} parent=11 // pred_fallthru
        _
    $region12: #{bottleneck_forward_nhwc.4} parent=5 // pred_fallthru
      _
    %p99 = scmp.lt.s32.totalorder %s8, 2
    // Predicated region
    $region17: #{bottleneck_forward_nhwc.4} parent=5 // pred_check
      %p100 = pneg %p99
    $region18: #{bottleneck_forward_nhwc.4} parent=5 // pred_check_branch
      %102 = sbr.rel (%p100) target = $region20
    $region19: #{bottleneck_forward_nhwc.4} parent=5 // pred_region
      // Predicated region
      $region21: #{bottleneck_forward_nhwc.4} parent=19 // pred_check
        %p103 = pneg %p28
      $region22: #{bottleneck_forward_nhwc.4} parent=19 // pred_check_branch
        %105 = sbr.rel (%p103) target = $region24
      $region23: #{bottleneck_forward_nhwc.4} parent=19 // pred_region
        %s106 = smul.u32 8, %s8
        %p107 = scmp.lt.s32.totalorder %s106, 15
        %s108 = scalar_select %p107, %s106, 15
        %s109 = smul.addr %s108, 8
        %s110 = scalar_lea.vmem %s0, %s109
        %s111 = smul.u32 8, %s8
      $region24: #{bottleneck_forward_nhwc.4} parent=19 // pred_fallthru
        _
    $region20: #{bottleneck_forward_nhwc.4} parent=5 // pred_fallthru
      _
    %p112 = scmp.le.s32.totalorder 1, %s8
    %p113 = scmp.lt.s32.totalorder %s8, 3
    %p114 = pnand %p112, %p113
    %p115 = pneg %p114
    // Predicated region
    $region25: #{bottleneck_forward_nhwc.4} parent=5 // pred_check
      _
    $region26: #{bottleneck_forward_nhwc.4} parent=5 // pred_check_branch
      %117 = sbr.rel (%p114) target = $region28
    $region27: #{bottleneck_forward_nhwc.4} parent=5 // pred_region
      %s118 = ssub.s32 %s8, 1
      %s119 = smul.u32 8, %s13
      %p120 = scmp.lt.s32.totalorder %s119, 15
      %s121 = scalar_select %p120, %s119, 15
      %s122 = smul.addr %s121, 8
      %s123 = scalar_lea.vmem %s0, %s122
      %p124 = pneg %p34
      %p125 = pneg %p31
      %p126 = pneg %p55
      %p127 = pneg %p52
      %p128 = pneg %p81
      %p129 = pneg %p78
      %s130 = smul.u32 8, %s13
      %p131 = scmp.lt.s32.totalorder %s130, 15
      %s132 = scalar_select %p131, %s130, 15
      %s133 = smul.addr %s132, 8
      %s134 = scalar_lea.vmem %s2, %s133
      %s135 = smul.u32 8, %s13
      %p136 = scmp.lt.s32.totalorder %s135, 15
      %s137 = scalar_select %p136, %s135, 15
      %s138 = smul.addr %s137, 8
      %s139 = scalar_lea.vmem %s0, %s138
      %s140 = smul.u32 8, %s13
      %s141 = smul.u32 8, %s13
      %p142 = scmp.lt.s32.totalorder %s141, 15
      %s143 = scalar_select %p142, %s141, 15
      %s144 = smul.addr %s143, 8
      %s145 = scalar_lea.vmem %s2, %s144
      %s146 = smul.u32 8, %s13
      %v148 = vld [vmem:[%s139] sm:$0xff]
      %v149 = vld [vmem:[%s139 + $0x8] sm:$0xff]
      %v150 = vld [vmem:[%s139 + $0x10] sm:$0xff]
      %v151 = vld [vmem:[%s139 + $0x18] sm:$0xff]
      %v152 = vld [vmem:[%s139 + $0x20] sm:$0xff]
      %v153 = vld [vmem:[%s139 + $0x28] sm:$0xff]
      %v154 = vld [vmem:[%s139 + $0x30] sm:$0xff]
      %v155 = vld [vmem:[%s139 + $0x38] sm:$0xff]
      %v156 = vpack.c.bf16 %v149, %v148
      %v157 = vpack.c.bf16 %v151, %v150
      %v158 = vpack.c.bf16 %v153, %v152
      %v159 = vpack.c.bf16 %v155, %v154
      %v160 = vld [vmem:[%s1] sm:$0xf]
      %v161 = vld [vmem:[%s1 + $0x4] sm:$0xf]
      %v162 = vld [vmem:[%s1 + $0x8] sm:$0xf]
      %v163 = vld [vmem:[%s1 + $0xc] sm:$0xf]
      %v164 = vld [vmem:[%s1 + $0x10] sm:$0xf]
      %v165 = vld [vmem:[%s1 + $0x14] sm:$0xf]
      %v166 = vld [vmem:[%s1 + $0x18] sm:$0xf]
      %v167 = vld [vmem:[%s1 + $0x1c] sm:$0xf]
      %v168 = vld [vmem:[%s1 + $0x20] sm:$0xf]
      %v169 = vld [vmem:[%s1 + $0x24] sm:$0xf]
      %v170 = vld [vmem:[%s1 + $0x28] sm:$0xf]
      %v171 = vld [vmem:[%s1 + $0x2c] sm:$0xf]
      %v172 = vld [vmem:[%s1 + $0x30] sm:$0xf]
      %v173 = vld [vmem:[%s1 + $0x34] sm:$0xf]
      %v174 = vld [vmem:[%s1 + $0x38] sm:$0xf]
      %v175 = vld [vmem:[%s1 + $0x3c] sm:$0xf]
      %v192 = vunpack.c.l.b16 %v160
      %v193 = vunpack.c.l.b16 %v161
      %v194 = vunpack.c.l.b16 %v162
      %v195 = vunpack.c.l.b16 %v163
      %v196 = vunpack.c.l.b16 %v164
      %v197 = vunpack.c.l.b16 %v165
      %v198 = vunpack.c.l.b16 %v166
      %v199 = vunpack.c.l.b16 %v167
      %v200 = vunpack.c.l.b16 %v168
      %v201 = vunpack.c.l.b16 %v169
      %v202 = vunpack.c.l.b16 %v170
      %v203 = vunpack.c.l.b16 %v171
      %v204 = vunpack.c.l.b16 %v172
      %v205 = vunpack.c.l.b16 %v173
      %v206 = vunpack.c.l.b16 %v174
      %v207 = vunpack.c.l.b16 %v175
      %v208 = vpack.c.b16 %v193, %v192
      %v209 = vpack.c.b16 %v195, %v194
      %v210 = vpack.c.b16 %v197, %v196
      %v211 = vpack.c.b16 %v199, %v198
      %v212 = vpack.c.b16 %v201, %v200
      %v213 = vpack.c.b16 %v203, %v202
      %v214 = vpack.c.b16 %v205, %v204
      %v215 = vpack.c.b16 %v207, %v206
      %224 = vmatprep.subr.bf16.mxu0 0
      %225 = vmatpush1.bf16.msra.mxu0 %v208
      %226 = vmatprep.subr.bf16.mxu0 0
      %227 = vmatpush1.bf16.msra.mxu0 %v209
      %228 = vmatprep.subr.bf16.mxu0 0
      %229 = vmatpush1.bf16.msra.mxu0 %v210
      %230 = vmatprep.subr.bf16.mxu0 0
      %231 = vmatpush1.bf16.msra.mxu0 %v211
      %232 = vmatprep.subr.bf16.mxu0 0
      %233 = vmatpush1.bf16.msra.mxu0 %v212
      %234 = vmatprep.subr.bf16.mxu0 0
      %235 = vmatpush1.bf16.msra.mxu0 %v213
      %236 = vmatprep.subr.bf16.mxu0 0
      %237 = vmatpush1.bf16.msra.mxu0 %v214
      %238 = vmatprep.subr.bf16.mxu0 0
      %239 = vmatpush1.bf16.msra.mxu0 %v215
      %240 = vmatprep.subr.bf16.mxu0 0
      %241 = vmatpush1.bf16.msra.mxu0 0
      %242 = vmatprep.subr.bf16.mxu0 0
      %243 = vmatpush1.bf16.msra.mxu0 0
      %244 = vmatprep.subr.bf16.mxu0 0
      %245 = vmatpush1.bf16.msra.mxu0 0
      %246 = vmatprep.subr.bf16.mxu0 0
      %247 = vmatpush1.bf16.msra.mxu0 0
      %248 = vmatprep.subr.bf16.mxu0 0
      %249 = vmatpush1.bf16.msra.mxu0 0
      %250 = vmatprep.subr.bf16.mxu0 0
      %251 = vmatpush1.bf16.msra.mxu0 0
      %252 = vmatprep.subr.bf16.mxu0 0
      %253 = vmatpush1.bf16.msra.mxu0 0
      %254 = vmatprep.subr.bf16.mxu0 0
      %255 = vmatpush1.bf16.msra.mxu0 0
      %256 = vmatprep.mubr.bf16.mxu0 0
      %257 = vmatmul.mubr.bf16.gmra.mrb[0].mxu0 %v156
      %v258 = vpop.f32.mrb[0].mxu0
      %v259 = vadd.f32 0.0, %v258
      %v260 = vpop.f32.mrb[0].mxu0
      %v261 = vpop.f32.mrb[0].mxu0
      %v262 = vadd.f32 0.0, %v261
      %v263 = vpop.f32.mrb[0].mxu0
      %264 = vmatprep.mubr.bf16.mxu0 0
      %265 = vmatmul.mubr.bf16.gmra.mrb[0].mxu0 %v157
      %v266 = vpop.f32.mrb[0].mxu0
      %v267 = vadd.f32 0.0, %v266
      %v268 = vpop.f32.mrb[0].mxu0
      %v269 = vpop.f32.mrb[0].mxu0
      %v270 = vadd.f32 0.0, %v269
      %v271 = vpop.f32.mrb[0].mxu0
      %272 = vmatprep.mubr.bf16.mxu0 0
      %273 = vmatmul.mubr.bf16.gmra.mrb[0].mxu0 %v158
      %v274 = vpop.f32.mrb[0].mxu0
      %v275 = vadd.f32 0.0, %v274
      %v276 = vpop.f32.mrb[0].mxu0
      %v277 = vpop.f32.mrb[0].mxu0
      %v278 = vadd.f32 0.0, %v277
      %v279 = vpop.f32.mrb[0].mxu0
      %280 = vmatprep.mubr.bf16.mxu0 0
      %281 = vmatmul.mubr.bf16.gmra.mrb[0].mxu0 %v159
      %v282 = vpop.f32.mrb[0].mxu0
      %v283 = vadd.f32 0.0, %v282
      %v284 = vpop.f32.mrb[0].mxu0
      %v285 = vpop.f32.mrb[0].mxu0
      %v286 = vadd.f32 0.0, %v285
      %v287 = vpop.f32.mrb[0].mxu0
      %288 = vdwg.mxu0
      %289 = vst [vmem:[%s145] sm:$0xff] %v259
      %290 = vst [vmem:[%s145 + $0x8] sm:$0xff] %v262
      %291 = vst [vmem:[%s145 + $0x10] sm:$0xff] %v267
      %292 = vst [vmem:[%s145 + $0x18] sm:$0xff] %v270
      %293 = vst [vmem:[%s145 + $0x20] sm:$0xff] %v275
      %294 = vst [vmem:[%s145 + $0x28] sm:$0xff] %v278
      %295 = vst [vmem:[%s145 + $0x30] sm:$0xff] %v283
      %296 = vst [vmem:[%s145 + $0x38] sm:$0xff] %v286
      %s297 = smul.u32 8, %s13
      %p298 = scmp.lt.s32.totalorder %s297, 15
      %s299 = scalar_select %p298, %s297, 15
      %s300 = smul.addr %s299, 8
      %s301 = scalar_lea.vmem %s2, %s300
      // Predicated region
      $region29: #{bottleneck_forward_nhwc.4} parent=27 // pred_check
        %p302 = pneg %p78
      $region30: #{bottleneck_forward_nhwc.4} parent=27 // pred_check_branch
        %304 = sbr.rel (%p302) target = $region32
      $region31: #{bottleneck_forward_nhwc.4} parent=27 // pred_region
        %s305 = smul.u32 8, %s13
      $region32: #{bottleneck_forward_nhwc.4} parent=27 // pred_fallthru
        _
    $region28: #{bottleneck_forward_nhwc.4} parent=5 // pred_fallthru
      _
    %p306 = scmp.le.s32.totalorder 2, %s8
    // Predicated region
    $region33: #{bottleneck_forward_nhwc.4} parent=5 // pred_check
      %p307 = pneg %p306
    $region34: #{bottleneck_forward_nhwc.4} parent=5 // pred_check_branch
      %309 = sbr.rel (%p307) target = $region36
    $region35: #{bottleneck_forward_nhwc.4} parent=5 // pred_region
      %s310 = ssub.s32 %s8, 2
      // Predicated region
      $region37: #{bottleneck_forward_nhwc.4} parent=35 // pred_check
        %p311 = pneg %p84
      $region38: #{bottleneck_forward_nhwc.4} parent=35 // pred_check_branch
        %313 = sbr.rel (%p311) target = $region40
      $region39: #{bottleneck_forward_nhwc.4} parent=35 // pred_region
        %s314 = smul.u32 8, %s14
        %p315 = scmp.lt.s32.totalorder %s314, 15
        %s316 = scalar_select %p315, %s314, 15
        %s317 = smul.addr %s316, 8
        %s318 = scalar_lea.vmem %s2, %s317
      $region40: #{bottleneck_forward_nhwc.4} parent=35 // pred_fallthru
        _
    $region36: #{bottleneck_forward_nhwc.4} parent=5 // pred_fallthru
      _
  $region6: #{bottleneck_forward_nhwc.4} parent=0 // loop_footer
    %s12 = sadd.s32 1, %s8
  $region7: #{bottleneck_forward_nhwc.4} parent=0 // loop_footer_branch
    %7 = sbr.rel target = $region3
  $region8: #{bottleneck_forward_nhwc.4} parent=0 // loop_exit
    _

// kernel: bottleneck_forward_nhwc.6
$region0: #{bottleneck_forward_nhwc.6}
  #allocation0 [shape = 'u32[]', space=smem, size = 0x4, offset = 0x4, fixed_abs, tag = 'smem constant byte address 0x4 - core index']
  #allocation1 [shape = 'u32[144,128]{1,0:T(1,128)}', space=vmem, size = 0x12000, scoped, tag = 'internal scratch']
  %s0 = inlined_call_operand.vmem [shape: f32[128,128], index: 0, kind: input, shape index: {}]
  %s1 = inlined_call_operand.vmem [shape: f32[1,128], index: 1, kind: input, shape index: {}]
  %s2 = inlined_call_operand.vmem [shape: f32[1,128], index: 2, kind: input, shape index: {}]
  %s3 = inlined_call_operand.vmem [shape: bf16[128,128], index: 3, kind: input, shape index: {}]
  %s4 = inlined_call_operand.vmem [shape: f32[128,128], index: 4, kind: output, shape index: {}]
  %s5 = sld [smem:[#allocation0]]
  $region49: #{bottleneck_forward_nhwc.6} parent=0
    _
  %s7 = ssub.s32 1, %s5
  %s8 = scalar_select 0, %s7, %s5
  loop: start=0, step=1, limit=4
  $region2: #{bottleneck_forward_nhwc.6} parent=0 // loop_pre_header
    _
  $region3: #{bottleneck_forward_nhwc.6} parent=0 // loop_header
    %s10 = sphi 0, %s14
    %p11 = scmp.ge.s32.totalorder %s10, 4
    %s20 = sphi 0, %s22
    %s23 = sphi 0, %s20
    %s24 = sphi 0, %s23
    %s40 = sphi 0, %s24
    %s44 = sphi 0, %s44
    %s46 = sphi 0, %s44
    %s47 = sphi 0, %s46
    %s61 = sphi 0, %s47
    %s65 = sphi 0, %s65
    %s67 = sphi 0, %s65
    %s68 = sphi 0, %s67
    %s82 = sphi 0, %s68
    %s86 = sphi 0, %s86
    %s88 = sphi 0, %s86
    %s89 = sphi 0, %s88
    %s103 = sphi 0, %s89
    %s109 = sphi 0, %s111
    %s112 = sphi 0, %s109
    %s113 = sphi 0, %s112
    %s129 = sphi 0, %s113
  $region4: #{bottleneck_forward_nhwc.6} parent=0 // loop_header_branch
    %13 = sbr.rel (%p11) target = $region8
  $region5: #{bottleneck_forward_nhwc.6} parent=0 // loop_body
    %s15 = ssub.s32 %s10, 1
    %s16 = ssub.s32 %s10, 2
    %s17 = sadd.s32 %s10, 1
    %s18 = ssub.s32 %s10, %s17
    %p19 = scmp.eq.s32.totalorder %s18, 0
    %s21 = sadd.s32 %s20, 1
    %s22 = scalar_select %p19, %s20, %s21
    %p25 = pneg %p19
    %p26 = scmp.eq.s32.totalorder %s10, 1
    %p27 = por %p25, %p26
    %p28 = scmp.ne.s32.totalorder %s20, %s23
    %p29 = scmp.eq.s32.totalorder %s10, 0
    %p30 = por %p28, %p29
    %p31 = scmp.ne.s32.totalorder %s20, %s23
    %p32 = scmp.eq.s32.totalorder %s15, 1
    %p33 = por %p31, %p32
    %p34 = scmp.ne.s32.totalorder %s23, %s24
    %p35 = scmp.eq.s32.totalorder %s15, 0
    %p36 = por %p34, %p35
    %p37 = scmp.ne.s32.totalorder %s23, %s24
    %p38 = scmp.eq.s32.totalorder %s16, 1
    %p39 = por %p37, %p38
    %p41 = scmp.ne.s32.totalorder %s24, %s40
    %p42 = scmp.eq.s32.totalorder %s16, 0
    %p43 = por %p41, %p42
    %s45 = sadd.s32 %s44, 1
    %p48 = scmp.eq.s32.totalorder %s10, 1
    %p49 = scmp.ne.s32.totalorder %s44, %s46
    %p50 = scmp.eq.s32.totalorder %s10, 0
    %p51 = por %p49, %p50
    %p52 = scmp.ne.s32.totalorder %s44, %s46
    %p53 = scmp.eq.s32.totalorder %s15, 1
    %p54 = por %p52, %p53
    %p55 = scmp.ne.s32.totalorder %s46, %s47
    %p56 = scmp.eq.s32.totalorder %s15, 0
    %p57 = por %p55, %p56
    %p58 = scmp.ne.s32.totalorder %s46, %s47
    %p59 = scmp.eq.s32.totalorder %s16, 1
    %p60 = por %p58, %p59
    %p62 = scmp.ne.s32.totalorder %s47, %s61
    %p63 = scmp.eq.s32.totalorder %s16, 0
    %p64 = por %p62, %p63
    %s66 = sadd.s32 %s65, 1
    %p69 = scmp.eq.s32.totalorder %s10, 1
    %p70 = scmp.ne.s32.totalorder %s65, %s67
    %p71 = scmp.eq.s32.totalorder %s10, 0
    %p72 = por %p70, %p71
    %p73 = scmp.ne.s32.totalorder %s65, %s67
    %p74 = scmp.eq.s32.totalorder %s15, 1
    %p75 = por %p73, %p74
    %p76 = scmp.ne.s32.totalorder %s67, %s68
    %p77 = scmp.eq.s32.totalorder %s15, 0
    %p78 = por %p76, %p77
    %p79 = scmp.ne.s32.totalorder %s67, %s68
    %p80 = scmp.eq.s32.totalorder %s16, 1
    %p81 = por %p79, %p80
    %p83 = scmp.ne.s32.totalorder %s68, %s82
    %p84 = scmp.eq.s32.totalorder %s16, 0
    %p85 = por %p83, %p84
    %s87 = sadd.s32 %s86, 1
    %p90 = scmp.eq.s32.totalorder %s10, 1
    %p91 = scmp.ne.s32.totalorder %s86, %s88
    %p92 = scmp.eq.s32.totalorder %s10, 0
    %p93 = por %p91, %p92
    %p94 = scmp.ne.s32.totalorder %s86, %s88
    %p95 = scmp.eq.s32.totalorder %s15, 1
    %p96 = por %p94, %p95
    %p97 = scmp.ne.s32.totalorder %s88, %s89
    %p98 = scmp.eq.s32.totalorder %s15, 0
    %p99 = por %p97, %p98
    %p100 = scmp.ne.s32.totalorder %s88, %s89
    %p101 = scmp.eq.s32.totalorder %s16, 1
    %p102 = por %p100, %p101
    %p104 = scmp.ne.s32.totalorder %s89, %s103
    %p105 = scmp.eq.s32.totalorder %s16, 0
    %p106 = por %p104, %p105
    %s107 = ssub.s32 %s10, %s17
    %p108 = scmp.eq.s32.totalorder %s107, 0
    %s110 = sadd.s32 %s109, 1
    %s111 = scalar_select %p108, %s109, %s110
    %p114 = pneg %p108
    %p115 = scmp.eq.s32.totalorder %s10, 1
    %p116 = por %p114, %p115
    %p117 = scmp.ne.s32.totalorder %s109, %s112
    %p118 = scmp.eq.s32.totalorder %s10, 0
    %p119 = por %p117, %p118
    %p120 = scmp.ne.s32.totalorder %s109, %s112
    %p121 = scmp.eq.s32.totalorder %s15, 1
    %p122 = por %p120, %p121
    %p123 = scmp.ne.s32.totalorder %s112, %s113
    %p124 = scmp.eq.s32.totalorder %s15, 0
    %p125 = por %p123, %p124
    %p126 = scmp.ne.s32.totalorder %s112, %s113
    %p127 = scmp.eq.s32.totalorder %s16, 1
    %p128 = por %p126, %p127
    %p130 = scmp.ne.s32.totalorder %s113, %s129
    %p131 = scmp.eq.s32.totalorder %s16, 0
    %p132 = por %p130, %p131
    %p133 = scmp.le.s32.totalorder 1, %s10
    %p134 = scmp.lt.s32.totalorder %s10, 3
    %p135 = pnand %p133, %p134
    %p136 = pneg %p135
    // Predicated region
    $region9: #{bottleneck_forward_nhwc.6} parent=5 // pred_check
      _
    $region10: #{bottleneck_forward_nhwc.6} parent=5 // pred_check_branch
      %138 = sbr.rel (%p135) target = $region12
    $region11: #{bottleneck_forward_nhwc.6} parent=5 // pred_region
      %s139 = ssub.s32 %s10, 1
      // Predicated region
      $region13: #{bottleneck_forward_nhwc.6} parent=11 // pred_check
        %p140 = pneg %p57
      $region14: #{bottleneck_forward_nhwc.6} parent=11 // pred_check_branch
        %142 = sbr.rel (%p140) target = $region16
      $region15: #{bottleneck_forward_nhwc.6} parent=11 // pred_region
        _
      $region16: #{bottleneck_forward_nhwc.6} parent=11 // pred_fallthru
        _
      // Predicated region
      $region17: #{bottleneck_forward_nhwc.6} parent=11 // pred_check
        %p143 = pneg %p78
      $region18: #{bottleneck_forward_nhwc.6} parent=11 // pred_check_branch
        %145 = sbr.rel (%p143) target = $region20
      $region19: #{bottleneck_forward_nhwc.6} parent=11 // pred_region
        _
      $region20: #{bottleneck_forward_nhwc.6} parent=11 // pred_fallthru
        _
      // Predicated region
      $region21: #{bottleneck_forward_nhwc.6} parent=11 // pred_check
        %p146 = pneg %p99
      $region22: #{bottleneck_forward_nhwc.6} parent=11 // pred_check_branch
        %148 = sbr.rel (%p146) target = $region24
      $region23: #{bottleneck_forward_nhwc.6} parent=11 // pred_region
        _
      $region24: #{bottleneck_forward_nhwc.6} parent=11 // pred_fallthru
        _
    $region12: #{bottleneck_forward_nhwc.6} parent=5 // pred_fallthru
      _
    %p149 = scmp.lt.s32.totalorder %s10, 2
    // Predicated region
    $region25: #{bottleneck_forward_nhwc.6} parent=5 // pred_check
      %p150 = pneg %p149
    $region26: #{bottleneck_forward_nhwc.6} parent=5 // pred_check_branch
      %152 = sbr.rel (%p150) target = $region28
    $region27: #{bottleneck_forward_nhwc.6} parent=5 // pred_region
      // Predicated region
      $region29: #{bottleneck_forward_nhwc.6} parent=27 // pred_check
        %p153 = pneg %p30
      $region30: #{bottleneck_forward_nhwc.6} parent=27 // pred_check_branch
        %155 = sbr.rel (%p153) target = $region32
      $region31: #{bottleneck_forward_nhwc.6} parent=27 // pred_region
        %s156 = smul.u32 8, %s10
        %p157 = scmp.lt.s32.totalorder %s156, 15
        %s158 = scalar_select %p157, %s156, 15
        %s159 = smul.addr %s158, 8
        %s160 = scalar_lea.vmem %s0, %s159
        %s161 = smul.u32 8, %s10
      $region32: #{bottleneck_forward_nhwc.6} parent=27 // pred_fallthru
        _
    $region28: #{bottleneck_forward_nhwc.6} parent=5 // pred_fallthru
      _
    %p162 = scmp.le.s32.totalorder 1, %s10
    %p163 = scmp.lt.s32.totalorder %s10, 3
    %p164 = pnand %p162, %p163
    %p165 = pneg %p164
    // Predicated region
    $region33: #{bottleneck_forward_nhwc.6} parent=5 // pred_check
      _
    $region34: #{bottleneck_forward_nhwc.6} parent=5 // pred_check_branch
      %167 = sbr.rel (%p164) target = $region36
    $region35: #{bottleneck_forward_nhwc.6} parent=5 // pred_region
      %s168 = ssub.s32 %s10, 1
      %s169 = smul.u32 8, %s15
      %p170 = scmp.lt.s32.totalorder %s169, 15
      %s171 = scalar_select %p170, %s169, 15
      %s172 = smul.addr %s171, 8
      %s173 = scalar_lea.vmem %s0, %s172
      %p174 = pneg %p36
      %p175 = pneg %p33
      %p176 = pneg %p57
      %p177 = pneg %p54
      %p178 = pneg %p78
      %p179 = pneg %p75
      %p180 = pneg %p99
      %p181 = pneg %p96
      %p182 = pneg %p125
      %p183 = pneg %p122
      %s184 = smul.u32 8, %s15
      %p185 = scmp.lt.s32.totalorder %s184, 15
      %s186 = scalar_select %p185, %s184, 15
      %s187 = smul.addr %s186, 8
      %s188 = scalar_lea.vmem %s4, %s187
      %s189 = smul.u32 8, %s15
      %p190 = scmp.lt.s32.totalorder %s189, 15
      %s191 = scalar_select %p190, %s189, 15
      %s192 = smul.addr %s191, 8
      %s193 = scalar_lea.vmem %s0, %s192
      %s194 = smul.u32 8, %s15
      %s195 = smul.u32 8, %s15
      %p196 = scmp.lt.s32.totalorder %s195, 15
      %s197 = scalar_select %p196, %s195, 15
      %s198 = smul.addr %s197, 8
      %s199 = scalar_lea.vmem %s4, %s198
      %s200 = smul.u32 8, %s15
      %v202 = vld [vmem:[%s193] sm:$0xff]
      %v203 = vld [vmem:[%s193 + $0x8] sm:$0xff]
      %v204 = vld [vmem:[%s193 + $0x10] sm:$0xff]
      %v205 = vld [vmem:[%s193 + $0x18] sm:$0xff]
      %v206 = vld [vmem:[%s193 + $0x20] sm:$0xff]
      %v207 = vld [vmem:[%s193 + $0x28] sm:$0xff]
      %v208 = vld [vmem:[%s193 + $0x30] sm:$0xff]
      %v209 = vld [vmem:[%s193 + $0x38] sm:$0xff]
      %v210 = vld [vmem:[%s1] sm:$0x1]
      %v212 = vlaneseq
      %v213 = vshrl.u32 %v212, 7
      %v214 = vsub.s32 0, %v213
      %v215 = vrot.slane %v210, %v214
      %v217 = vmul.f32 %v202, %v215
      %v218 = vmul.f32 %v203, %v215
      %v219 = vmul.f32 %v204, %v215
      %v220 = vmul.f32 %v205, %v215
      %v221 = vmul.f32 %v206, %v215
      %v222 = vmul.f32 %v207, %v215
      %v223 = vmul.f32 %v208, %v215
      %v224 = vmul.f32 %v209, %v215
      %v225 = vld [vmem:[%s2] sm:$0x1]
      %v227 = vlaneseq
      %v228 = vshrl.u32 %v227, 7
      %v229 = vsub.s32 0, %v228
      %v230 = vrot.slane %v225, %v229
      %v232 = vadd.f32 %v217, %v230
      %v233 = vadd.f32 %v218, %v230
      %v234 = vadd.f32 %v219, %v230
      %v235 = vadd.f32 %v220, %v230
      %v236 = vadd.f32 %v221, %v230
      %v237 = vadd.f32 %v222, %v230
      %v238 = vadd.f32 %v223, %v230
      %v239 = vadd.f32 %v224, %v230
      %v240 = vmax.f32 %v232, 0.0
      %v241 = vmax.f32 %v233, 0.0
      %v242 = vmax.f32 %v234, 0.0
      %v243 = vmax.f32 %v235, 0.0
      %v244 = vmax.f32 %v236, 0.0
      %v245 = vmax.f32 %v237, 0.0
      %v246 = vmax.f32 %v238, 0.0
      %v247 = vmax.f32 %v239, 0.0
      %v248 = vpack.c.bf16 %v241, %v240
      %v249 = vpack.c.bf16 %v243, %v242
      %v250 = vpack.c.bf16 %v245, %v244
      %v251 = vpack.c.bf16 %v247, %v246
      %v252 = vld [vmem:[%s3] sm:$0xf]
      %v253 = vld [vmem:[%s3 + $0x4] sm:$0xf]
      %v254 = vld [vmem:[%s3 + $0x8] sm:$0xf]
      %v255 = vld [vmem:[%s3 + $0xc] sm:$0xf]
      %v256 = vld [vmem:[%s3 + $0x10] sm:$0xf]
      %v257 = vld [vmem:[%s3 + $0x14] sm:$0xf]
      %v258 = vld [vmem:[%s3 + $0x18] sm:$0xf]
      %v259 = vld [vmem:[%s3 + $0x1c] sm:$0xf]
      %v260 = vld [vmem:[%s3 + $0x20] sm:$0xf]
      %v261 = vld [vmem:[%s3 + $0x24] sm:$0xf]
      %v262 = vld [vmem:[%s3 + $0x28] sm:$0xf]
      %v263 = vld [vmem:[%s3 + $0x2c] sm:$0xf]
      %v264 = vld [vmem:[%s3 + $0x30] sm:$0xf]
      %v265 = vld [vmem:[%s3 + $0x34] sm:$0xf]
      %v266 = vld [vmem:[%s3 + $0x38] sm:$0xf]
      %v267 = vld [vmem:[%s3 + $0x3c] sm:$0xf]
      %v284 = vunpack.c.l.b16 %v252
      %v285 = vunpack.c.l.b16 %v253
      %v286 = vunpack.c.l.b16 %v254
      %v287 = vunpack.c.l.b16 %v255
      %v288 = vunpack.c.l.b16 %v256
      %v289 = vunpack.c.l.b16 %v257
      %v290 = vunpack.c.l.b16 %v258
      %v291 = vunpack.c.l.b16 %v259
      %v292 = vunpack.c.l.b16 %v260
      %v293 = vunpack.c.l.b16 %v261
      %v294 = vunpack.c.l.b16 %v262
      %v295 = vunpack.c.l.b16 %v263
      %v296 = vunpack.c.l.b16 %v264
      %v297 = vunpack.c.l.b16 %v265
      %v298 = vunpack.c.l.b16 %v266
      %v299 = vunpack.c.l.b16 %v267
      %v300 = vpack.c.b16 %v285, %v284
      %v301 = vpack.c.b16 %v287, %v286
      %v302 = vpack.c.b16 %v289, %v288
      %v303 = vpack.c.b16 %v291, %v290
      %v304 = vpack.c.b16 %v293, %v292
      %v305 = vpack.c.b16 %v295, %v294
      %v306 = vpack.c.b16 %v297, %v296
      %v307 = vpack.c.b16 %v299, %v298
      %316 = vmatprep.subr.bf16.mxu0 0
      %317 = vmatpush1.bf16.msra.mxu0 %v300
      %318 = vmatprep.subr.bf16.mxu0 0
      %319 = vmatpush1.bf16.msra.mxu0 %v301
      %320 = vmatprep.subr.bf16.mxu0 0
      %321 = vmatpush1.bf16.msra.mxu0 %v302
      %322 = vmatprep.subr.bf16.mxu0 0
      %323 = vmatpush1.bf16.msra.mxu0 %v303
      %324 = vmatprep.subr.bf16.mxu0 0
      %325 = vmatpush1.bf16.msra.mxu0 %v304
      %326 = vmatprep.subr.bf16.mxu0 0
      %327 = vmatpush1.bf16.msra.mxu0 %v305
      %328 = vmatprep.subr.bf16.mxu0 0
      %329 = vmatpush1.bf16.msra.mxu0 %v306
      %330 = vmatprep.subr.bf16.mxu0 0
      %331 = vmatpush1.bf16.msra.mxu0 %v307
      %332 = vmatprep.subr.bf16.mxu0 0
      %333 = vmatpush1.bf16.msra.mxu0 0
      %334 = vmatprep.subr.bf16.mxu0 0
      %335 = vmatpush1.bf16.msra.mxu0 0
      %336 = vmatprep.subr.bf16.mxu0 0
      %337 = vmatpush1.bf16.msra.mxu0 0
      %338 = vmatprep.subr.bf16.mxu0 0
      %339 = vmatpush1.bf16.msra.mxu0 0
      %340 = vmatprep.subr.bf16.mxu0 0
      %341 = vmatpush1.bf16.msra.mxu0 0
      %342 = vmatprep.subr.bf16.mxu0 0
      %343 = vmatpush1.bf16.msra.mxu0 0
      %344 = vmatprep.subr.bf16.mxu0 0
      %345 = vmatpush1.bf16.msra.mxu0 0
      %346 = vmatprep.subr.bf16.mxu0 0
      %347 = vmatpush1.bf16.msra.mxu0 0
      %348 = vmatprep.mubr.bf16.mxu0 0
      %349 = vmatmul.mubr.bf16.gmra.mrb[0].mxu0 %v248
      %v350 = vpop.f32.mrb[0].mxu0
      %v351 = vadd.f32 0.0, %v350
      %v352 = vpop.f32.mrb[0].mxu0
      %v353 = vpop.f32.mrb[0].mxu0
      %v354 = vadd.f32 0.0, %v353
      %v355 = vpop.f32.mrb[0].mxu0
      %356 = vmatprep.mubr.bf16.mxu0 0
      %357 = vmatmul.mubr.bf16.gmra.mrb[0].mxu0 %v249
      %v358 = vpop.f32.mrb[0].mxu0
      %v359 = vadd.f32 0.0, %v358
      %v360 = vpop.f32.mrb[0].mxu0
      %v361 = vpop.f32.mrb[0].mxu0
      %v362 = vadd.f32 0.0, %v361
      %v363 = vpop.f32.mrb[0].mxu0
      %364 = vmatprep.mubr.bf16.mxu0 0
      %365 = vmatmul.mubr.bf16.gmra.mrb[0].mxu0 %v250
      %v366 = vpop.f32.mrb[0].mxu0
      %v367 = vadd.f32 0.0, %v366
      %v368 = vpop.f32.mrb[0].mxu0
      %v369 = vpop.f32.mrb[0].mxu0
      %v370 = vadd.f32 0.0, %v369
      %v371 = vpop.f32.mrb[0].mxu0
      %372 = vmatprep.mubr.bf16.mxu0 0
      %373 = vmatmul.mubr.bf16.gmra.mrb[0].mxu0 %v251
      %v374 = vpop.f32.mrb[0].mxu0
      %v375 = vadd.f32 0.0, %v374
      %v376 = vpop.f32.mrb[0].mxu0
      %v377 = vpop.f32.mrb[0].mxu0
      %v378 = vadd.f32 0.0, %v377
      %v379 = vpop.f32.mrb[0].mxu0
      %380 = vdwg.mxu0
      %381 = vst [vmem:[%s199] sm:$0xff] %v351
      %382 = vst [vmem:[%s199 + $0x8] sm:$0xff] %v354
      %383 = vst [vmem:[%s199 + $0x10] sm:$0xff] %v359
      %384 = vst [vmem:[%s199 + $0x18] sm:$0xff] %v362
      %385 = vst [vmem:[%s199 + $0x20] sm:$0xff] %v367
      %386 = vst [vmem:[%s199 + $0x28] sm:$0xff] %v370
      %387 = vst [vmem:[%s199 + $0x30] sm:$0xff] %v375
      %388 = vst [vmem:[%s199 + $0x38] sm:$0xff] %v378
      %s389 = smul.u32 8, %s15
      %p390 = scmp.lt.s32.totalorder %s389, 15
      %s391 = scalar_select %p390, %s389, 15
      %s392 = smul.addr %s391, 8
      %s393 = scalar_lea.vmem %s4, %s392
      // Predicated region
      $region37: #{bottleneck_forward_nhwc.6} parent=35 // pred_check
        %p394 = pneg %p122
      $region38: #{bottleneck_forward_nhwc.6} parent=35 // pred_check_branch
        %396 = sbr.rel (%p394) target = $region40
      $region39: #{bottleneck_forward_nhwc.6} parent=35 // pred_region
        %s397 = smul.u32 8, %s15
      $region40: #{bottleneck_forward_nhwc.6} parent=35 // pred_fallthru
        _
    $region36: #{bottleneck_forward_nhwc.6} parent=5 // pred_fallthru
      _
    %p398 = scmp.le.s32.totalorder 2, %s10
    // Predicated region
    $region41: #{bottleneck_forward_nhwc.6} parent=5 // pred_check
      %p399 = pneg %p398
    $region42: #{bottleneck_forward_nhwc.6} parent=5 // pred_check_branch
      %401 = sbr.rel (%p399) target = $region44
    $region43: #{bottleneck_forward_nhwc.6} parent=5 // pred_region
      %s402 = ssub.s32 %s10, 2
      // Predicated region
      $region45: #{bottleneck_forward_nhwc.6} parent=43 // pred_check
        %p403 = pneg %p128
      $region46: #{bottleneck_forward_nhwc.6} parent=43 // pred_check_branch
        %405 = sbr.rel (%p403) target = $region48
      $region47: #{bottleneck_forward_nhwc.6} parent=43 // pred_region
        %s406 = smul.u32 8, %s16
        %p407 = scmp.lt.s32.totalorder %s406, 15
        %s408 = scalar_select %p407, %s406, 15
        %s409 = smul.addr %s408, 8
        %s410 = scalar_lea.vmem %s4, %s409
      $region48: #{bottleneck_forward_nhwc.6} parent=43 // pred_fallthru
        _
    $region44: #{bottleneck_forward_nhwc.6} parent=5 // pred_fallthru
      _
  $region6: #{bottleneck_forward_nhwc.6} parent=0 // loop_footer
    %s14 = sadd.s32 1, %s10
  $region7: #{bottleneck_forward_nhwc.6} parent=0 // loop_footer_branch
    %9 = sbr.rel target = $region3
  $region8: #{bottleneck_forward_nhwc.6} parent=0 // loop_exit
    _

// kernel: bottleneck_forward_nhwc.7
$region0: #{bottleneck_forward_nhwc.7}
  #allocation0 [shape = 'u32[]', space=smem, size = 0x4, offset = 0x4, fixed_abs, tag = 'smem constant byte address 0x4 - core index']
  #allocation1 [shape = 'u32[144,128]{1,0:T(1,128)}', space=vmem, size = 0x12000, scoped, tag = 'internal scratch']
  %s0 = inlined_call_operand.vmem [shape: f32[128,128], index: 0, kind: input, shape index: {}]
  %s1 = inlined_call_operand.vmem [shape: f32[128,128], index: 1, kind: input, shape index: {}]
  %s2 = inlined_call_operand.vmem [shape: f32[1,128], index: 2, kind: input, shape index: {}]
  %s3 = inlined_call_operand.vmem [shape: f32[1,128], index: 3, kind: input, shape index: {}]
  %s4 = inlined_call_operand.hbm [shape: f32[128,128], index: 4, kind: output, shape index: {}]
  %s5 = sld [smem:[#allocation0]]
  $region49: #{bottleneck_forward_nhwc.7} parent=0
    _
  %s7 = ssub.s32 1, %s5
  %s8 = scalar_select 0, %s7, %s5
  $region1: #{bottleneck_forward_nhwc.7} parent=0
    #allocation2 [shape = 'u8[65536]{0}', space=vmem, size = 0x10000, scoped, tag = 'output window, operand 0']
    #allocation3 [shape = 's32[2]{0}', space=sflag, size = 0x8, scoped, tag = 'scoped memory for bottleneck_forward_nhwc.7']
    %9 = vsyncpa [#allocation3], 0
    %s10 = scalar_lea.sflag [#allocation3], 1
    %11 = vsyncpa %s10, 0
    loop: start=0, step=1, limit=4
    $region2: #{bottleneck_forward_nhwc.7} parent=1 // loop_pre_header
      _
    $region3: #{bottleneck_forward_nhwc.7} parent=1 // loop_header
      %s13 = sphi 0, %s17
      %p14 = scmp.ge.s32.totalorder %s13, 4
      %s23 = sphi 0, %s25
      %s26 = sphi 0, %s23
      %s27 = sphi 0, %s26
      %s43 = sphi 0, %s27
      %s49 = sphi 0, %s51
      %s52 = sphi 0, %s49
      %s53 = sphi 0, %s52
      %s69 = sphi 0, %s53
      %s73 = sphi 0, %s73
      %s75 = sphi 0, %s73
      %s76 = sphi 0, %s75
      %s90 = sphi 0, %s76
      %s94 = sphi 0, %s94
      %s96 = sphi 0, %s94
      %s97 = sphi 0, %s96
      %s111 = sphi 0, %s97
      %s117 = sphi 0, %s119
      %s120 = sphi 0, %s117
      %s121 = sphi 0, %s120
      %s137 = sphi 0, %s121
    $region4: #{bottleneck_forward_nhwc.7} parent=1 // loop_header_branch
      %16 = sbr.rel (%p14) target = $region8
    $region5: #{bottleneck_forward_nhwc.7} parent=1 // loop_body
      %s18 = ssub.s32 %s13, 1
      %s19 = ssub.s32 %s13, 2
      %s20 = sadd.s32 %s13, 1
      %s21 = ssub.s32 %s13, %s20
      %p22 = scmp.eq.s32.totalorder %s21, 0
      %s24 = sadd.s32 %s23, 1
      %s25 = scalar_select %p22, %s23, %s24
      %p28 = pneg %p22
      %p29 = scmp.eq.s32.totalorder %s13, 1
      %p30 = por %p28, %p29
      %p31 = scmp.ne.s32.totalorder %s23, %s26
      %p32 = scmp.eq.s32.totalorder %s13, 0
      %p33 = por %p31, %p32
      %p34 = scmp.ne.s32.totalorder %s23, %s26
      %p35 = scmp.eq.s32.totalorder %s18, 1
      %p36 = por %p34, %p35
      %p37 = scmp.ne.s32.totalorder %s26, %s27
      %p38 = scmp.eq.s32.totalorder %s18, 0
      %p39 = por %p37, %p38
      %p40 = scmp.ne.s32.totalorder %s26, %s27
      %p41 = scmp.eq.s32.totalorder %s19, 1
      %p42 = por %p40, %p41
      %p44 = scmp.ne.s32.totalorder %s27, %s43
      %p45 = scmp.eq.s32.totalorder %s19, 0
      %p46 = por %p44, %p45
      %s47 = ssub.s32 %s13, %s20
      %p48 = scmp.eq.s32.totalorder %s47, 0
      %s50 = sadd.s32 %s49, 1
      %s51 = scalar_select %p48, %s49, %s50
      %p54 = pneg %p48
      %p55 = scmp.eq.s32.totalorder %s13, 1
      %p56 = por %p54, %p55
      %p57 = scmp.ne.s32.totalorder %s49, %s52
      %p58 = scmp.eq.s32.totalorder %s13, 0
      %p59 = por %p57, %p58
      %p60 = scmp.ne.s32.totalorder %s49, %s52
      %p61 = scmp.eq.s32.totalorder %s18, 1
      %p62 = por %p60, %p61
      %p63 = scmp.ne.s32.totalorder %s52, %s53
      %p64 = scmp.eq.s32.totalorder %s18, 0
      %p65 = por %p63, %p64
      %p66 = scmp.ne.s32.totalorder %s52, %s53
      %p67 = scmp.eq.s32.totalorder %s19, 1
      %p68 = por %p66, %p67
      %p70 = scmp.ne.s32.totalorder %s53, %s69
      %p71 = scmp.eq.s32.totalorder %s19, 0
      %p72 = por %p70, %p71
      %s74 = sadd.s32 %s73, 1
      %p77 = scmp.eq.s32.totalorder %s13, 1
      %p78 = scmp.ne.s32.totalorder %s73, %s75
      %p79 = scmp.eq.s32.totalorder %s13, 0
      %p80 = por %p78, %p79
      %p81 = scmp.ne.s32.totalorder %s73, %s75
      %p82 = scmp.eq.s32.totalorder %s18, 1
      %p83 = por %p81, %p82
      %p84 = scmp.ne.s32.totalorder %s75, %s76
      %p85 = scmp.eq.s32.totalorder %s18, 0
      %p86 = por %p84, %p85
      %p87 = scmp.ne.s32.totalorder %s75, %s76
      %p88 = scmp.eq.s32.totalorder %s19, 1
      %p89 = por %p87, %p88
      %p91 = scmp.ne.s32.totalorder %s76, %s90
      %p92 = scmp.eq.s32.totalorder %s19, 0
      %p93 = por %p91, %p92
      %s95 = sadd.s32 %s94, 1
      %p98 = scmp.eq.s32.totalorder %s13, 1
      %p99 = scmp.ne.s32.totalorder %s94, %s96
      %p100 = scmp.eq.s32.totalorder %s13, 0
      %p101 = por %p99, %p100
      %p102 = scmp.ne.s32.totalorder %s94, %s96
      %p103 = scmp.eq.s32.totalorder %s18, 1
      %p104 = por %p102, %p103
      %p105 = scmp.ne.s32.totalorder %s96, %s97
      %p106 = scmp.eq.s32.totalorder %s18, 0
      %p107 = por %p105, %p106
      %p108 = scmp.ne.s32.totalorder %s96, %s97
      %p109 = scmp.eq.s32.totalorder %s19, 1
      %p110 = por %p108, %p109
      %p112 = scmp.ne.s32.totalorder %s97, %s111
      %p113 = scmp.eq.s32.totalorder %s19, 0
      %p114 = por %p112, %p113
      %s115 = ssub.s32 %s13, %s20
      %p116 = scmp.eq.s32.totalorder %s115, 0
      %s118 = sadd.s32 %s117, 1
      %s119 = scalar_select %p116, %s117, %s118
      %p122 = pneg %p116
      %p123 = scmp.eq.s32.totalorder %s13, 1
      %p124 = por %p122, %p123
      %p125 = scmp.ne.s32.totalorder %s117, %s120
      %p126 = scmp.eq.s32.totalorder %s13, 0
      %p127 = por %p125, %p126
      %p128 = scmp.ne.s32.totalorder %s117, %s120
      %p129 = scmp.eq.s32.totalorder %s18, 1
      %p130 = por %p128, %p129
      %p131 = scmp.ne.s32.totalorder %s120, %s121
      %p132 = scmp.eq.s32.totalorder %s18, 0
      %p133 = por %p131, %p132
      %p134 = scmp.ne.s32.totalorder %s120, %s121
      %p135 = scmp.eq.s32.totalorder %s19, 1
      %p136 = por %p134, %p135
      %p138 = scmp.ne.s32.totalorder %s121, %s137
      %p139 = scmp.eq.s32.totalorder %s19, 0
      %p140 = por %p138, %p139
      %p141 = scmp.le.s32.totalorder 1, %s13
      %p142 = scmp.lt.s32.totalorder %s13, 3
      %p143 = pnand %p141, %p142
      %p144 = pneg %p143
      // Predicated region
      $region9: #{bottleneck_forward_nhwc.7} parent=5 // pred_check
        _
      $region10: #{bottleneck_forward_nhwc.7} parent=5 // pred_check_branch
        %146 = sbr.rel (%p143) target = $region12
      $region11: #{bottleneck_forward_nhwc.7} parent=5 // pred_region
        %s147 = ssub.s32 %s13, 1
        // Predicated region
        $region13: #{bottleneck_forward_nhwc.7} parent=11 // pred_check
          %p148 = pneg %p86
        $region14: #{bottleneck_forward_nhwc.7} parent=11 // pred_check_branch
          %150 = sbr.rel (%p148) target = $region16
        $region15: #{bottleneck_forward_nhwc.7} parent=11 // pred_region
          _
        $region16: #{bottleneck_forward_nhwc.7} parent=11 // pred_fallthru
          _
        // Predicated region
        $region17: #{bottleneck_forward_nhwc.7} parent=11 // pred_check
          %p151 = pneg %p107
        $region18: #{bottleneck_forward_nhwc.7} parent=11 // pred_check_branch
          %153 = sbr.rel (%p151) target = $region20
        $region19: #{bottleneck_forward_nhwc.7} parent=11 // pred_region
          _
        $region20: #{bottleneck_forward_nhwc.7} parent=11 // pred_fallthru
          _
      $region12: #{bottleneck_forward_nhwc.7} parent=5 // pred_fallthru
        _
      %p154 = scmp.lt.s32.totalorder %s13, 2
      // Predicated region
      $region21: #{bottleneck_forward_nhwc.7} parent=5 // pred_check
        %p155 = pneg %p154
      $region22: #{bottleneck_forward_nhwc.7} parent=5 // pred_check_branch
        %157 = sbr.rel (%p155) target = $region24
      $region23: #{bottleneck_forward_nhwc.7} parent=5 // pred_region
        // Predicated region
        $region25: #{bottleneck_forward_nhwc.7} parent=23 // pred_check
          %p158 = pneg %p33
        $region26: #{bottleneck_forward_nhwc.7} parent=23 // pred_check_branch
          %160 = sbr.rel (%p158) target = $region28
        $region27: #{bottleneck_forward_nhwc.7} parent=23 // pred_region
          %s161 = smul.u32 8, %s13
          %p162 = scmp.lt.s32.totalorder %s161, 15
          %s163 = scalar_select %p162, %s161, 15
          %s164 = smul.addr %s163, 8
          %s165 = scalar_lea.vmem %s0, %s164
          %s166 = smul.u32 8, %s13
        $region28: #{bottleneck_forward_nhwc.7} parent=23 // pred_fallthru
          _
        // Predicated region
        $region29: #{bottleneck_forward_nhwc.7} parent=23 // pred_check
          %p167 = pneg %p59
        $region30: #{bottleneck_forward_nhwc.7} parent=23 // pred_check_branch
          %169 = sbr.rel (%p167) target = $region32
        $region31: #{bottleneck_forward_nhwc.7} parent=23 // pred_region
          %s170 = smul.u32 8, %s13
          %p171 = scmp.lt.s32.totalorder %s170, 15
          %s172 = scalar_select %p171, %s170, 15
          %s173 = smul.addr %s172, 8
          %s174 = scalar_lea.vmem %s1, %s173
          %s175 = smul.u32 8, %s13
        $region32: #{bottleneck_forward_nhwc.7} parent=23 // pred_fallthru
          _
      $region24: #{bottleneck_forward_nhwc.7} parent=5 // pred_fallthru
        _
      %p176 = scmp.le.s32.totalorder 1, %s13
      %p177 = scmp.lt.s32.totalorder %s13, 3
      %p178 = pnand %p176, %p177
      %p179 = pneg %p178
      // Predicated region
      $region33: #{bottleneck_forward_nhwc.7} parent=5 // pred_check
        _
      $region34: #{bottleneck_forward_nhwc.7} parent=5 // pred_check_branch
        %181 = sbr.rel (%p178) target = $region36
      $region35: #{bottleneck_forward_nhwc.7} parent=5 // pred_region
        %s182 = ssub.s32 %s13, 1
        %s183 = smul.u32 8, %s18
        %p184 = scmp.lt.s32.totalorder %s183, 15
        %s185 = scalar_select %p184, %s183, 15
        %s186 = smul.addr %s185, 8
        %s187 = scalar_lea.vmem %s0, %s186
        %p188 = pneg %p39
        %p189 = pneg %p36
        %s190 = smul.u32 8, %s18
        %p191 = scmp.lt.s32.totalorder %s190, 15
        %s192 = scalar_select %p191, %s190, 15
        %s193 = smul.addr %s192, 8
        %s194 = scalar_lea.vmem %s1, %s193
        %p195 = pneg %p65
        %p196 = pneg %p62
        %p197 = pneg %p86
        %p198 = pneg %p83
        %p199 = pneg %p107
        %p200 = pneg %p104
        %p201 = pneg %p133
        %p202 = pneg %p130
        %s203 = sand.u32 %s120, 1
        %s204 = scalar_lea.sflag [#allocation3], %s203
        %s205 = sand.u32 %s120, 1
        %s206 = smul.addr %s205, 64
        %s207 = scalar_lea.vmem [#allocation2], %s206
        %s208 = smul.u32 8, %s18
        %p209 = scmp.lt.s32.totalorder %s208, 15
        %s210 = scalar_select %p209, %s208, 15
        %s211 = smul.addr %s210, 8
        %s212 = scalar_lea.vmem %s0, %s211
        %s213 = smul.u32 8, %s18
        %s214 = smul.u32 8, %s18
        %p215 = scmp.lt.s32.totalorder %s214, 15
        %s216 = scalar_select %p215, %s214, 15
        %s217 = smul.addr %s216, 8
        %s218 = scalar_lea.vmem %s1, %s217
        %s219 = smul.u32 8, %s18
        %s220 = smul.u32 8, %s18
        %v221 = vld [vmem:[%s212] sm:$0xff]
        %v222 = vld [vmem:[%s212 + $0x8] sm:$0xff]
        %v223 = vld [vmem:[%s212 + $0x10] sm:$0xff]
        %v224 = vld [vmem:[%s212 + $0x18] sm:$0xff]
        %v225 = vld [vmem:[%s212 + $0x20] sm:$0xff]
        %v226 = vld [vmem:[%s212 + $0x28] sm:$0xff]
        %v227 = vld [vmem:[%s212 + $0x30] sm:$0xff]
        %v228 = vld [vmem:[%s212 + $0x38] sm:$0xff]
        %v229 = vld [vmem:[%s2] sm:$0x1]
        %v231 = vlaneseq
        %v232 = vshrl.u32 %v231, 7
        %v233 = vsub.s32 0, %v232
        %v234 = vrot.slane %v229, %v233
        %v236 = vmul.f32 %v221, %v234
        %v237 = vmul.f32 %v222, %v234
        %v238 = vmul.f32 %v223, %v234
        %v239 = vmul.f32 %v224, %v234
        %v240 = vmul.f32 %v225, %v234
        %v241 = vmul.f32 %v226, %v234
        %v242 = vmul.f32 %v227, %v234
        %v243 = vmul.f32 %v228, %v234
        %v244 = vld [vmem:[%s3] sm:$0x1]
        %v246 = vlaneseq
        %v247 = vshrl.u32 %v246, 7
        %v248 = vsub.s32 0, %v247
        %v249 = vrot.slane %v244, %v248
        %v251 = vadd.f32 %v236, %v249
        %v252 = vadd.f32 %v237, %v249
        %v253 = vadd.f32 %v238, %v249
        %v254 = vadd.f32 %v239, %v249
        %v255 = vadd.f32 %v240, %v249
        %v256 = vadd.f32 %v241, %v249
        %v257 = vadd.f32 %v242, %v249
        %v258 = vadd.f32 %v243, %v249
        %v259 = vld [vmem:[%s218] sm:$0xff]
        %v260 = vld [vmem:[%s218 + $0x8] sm:$0xff]
        %v261 = vld [vmem:[%s218 + $0x10] sm:$0xff]
        %v262 = vld [vmem:[%s218 + $0x18] sm:$0xff]
        %v263 = vld [vmem:[%s218 + $0x20] sm:$0xff]
        %v264 = vld [vmem:[%s218 + $0x28] sm:$0xff]
        %v265 = vld [vmem:[%s218 + $0x30] sm:$0xff]
        %v266 = vld [vmem:[%s218 + $0x38] sm:$0xff]
        %v267 = vadd.f32 %v251, %v259
        %v268 = vadd.f32 %v252, %v260
        %v269 = vadd.f32 %v253, %v261
        %v270 = vadd.f32 %v254, %v262
        %v271 = vadd.f32 %v255, %v263
        %v272 = vadd.f32 %v256, %v264
        %v273 = vadd.f32 %v257, %v265
        %v274 = vadd.f32 %v258, %v266
        %v275 = vmax.f32 %v267, 0.0
        %v276 = vmax.f32 %v268, 0.0
        %v277 = vmax.f32 %v269, 0.0
        %v278 = vmax.f32 %v270, 0.0
        %v279 = vmax.f32 %v271, 0.0
        %v280 = vmax.f32 %v272, 0.0
        %v281 = vmax.f32 %v273, 0.0
        %v282 = vmax.f32 %v274, 0.0
        %283 = vst [vmem:[%s207] sm:$0xff] %v275
        %284 = vst [vmem:[%s207 + $0x8] sm:$0xff] %v276
        %285 = vst [vmem:[%s207 + $0x10] sm:$0xff] %v277
        %286 = vst [vmem:[%s207 + $0x18] sm:$0xff] %v278
        %287 = vst [vmem:[%s207 + $0x20] sm:$0xff] %v279
        %288 = vst [vmem:[%s207 + $0x28] sm:$0xff] %v280
        %289 = vst [vmem:[%s207 + $0x30] sm:$0xff] %v281
        %290 = vst [vmem:[%s207 + $0x38] sm:$0xff] %v282
        %s291 = sand.u32 %s120, 1
        %s292 = scalar_lea.sflag [#allocation3], %s291
        %s293 = sand.u32 %s120, 1
        %s294 = smul.addr %s293, 64
        %s295 = scalar_lea.vmem [#allocation2], %s294
        // Predicated region
        $region37: #{bottleneck_forward_nhwc.7} parent=35 // pred_check
          %p296 = pneg %p130
        $region38: #{bottleneck_forward_nhwc.7} parent=35 // pred_check_branch
          %298 = sbr.rel (%p296) target = $region40
        $region39: #{bottleneck_forward_nhwc.7} parent=35 // pred_region
          %s299 = smul.u32 8, %s18
          %s301 = ssub.s32 1024, 1024
          %302 = vsyncadd %s292, %s301
          %s303 = smul.addr %s299, 128
          %s304 = scalar_lea.hbm %s4, %s303
          %s305 = sshll.u32 %s295, 4
          %s306 = int_to_ptr.vmem [resolvable:$true] %s305
          %311 = dma.vmem_to_hbm [thread:$0]  %s306, 1024, %s304, %s292, 128, 128, 8
        $region40: #{bottleneck_forward_nhwc.7} parent=35 // pred_fallthru
          _
      $region36: #{bottleneck_forward_nhwc.7} parent=5 // pred_fallthru
        _
      %p312 = scmp.le.s32.totalorder 2, %s13
      // Predicated region
      $region41: #{bottleneck_forward_nhwc.7} parent=5 // pred_check
        %p313 = pneg %p312
      $region42: #{bottleneck_forward_nhwc.7} parent=5 // pred_check_branch
        %315 = sbr.rel (%p313) target = $region44
      $region43: #{bottleneck_forward_nhwc.7} parent=5 // pred_region
        %s316 = ssub.s32 %s13, 2
        // Predicated region
        $region45: #{bottleneck_forward_nhwc.7} parent=43 // pred_check
          %p317 = pneg %p136
        $region46: #{bottleneck_forward_nhwc.7} parent=43 // pred_check_branch
          %319 = sbr.rel (%p317) target = $region48
        $region47: #{bottleneck_forward_nhwc.7} parent=43 // pred_region
          %s320 = sand.u32 %s121, 1
          %s321 = scalar_lea.sflag [#allocation3], %s320
          %s322 = sand.u32 %s121, 1
          %s323 = smul.addr %s322, 64
          %s324 = scalar_lea.vmem [#allocation2], %s323
          %325 = dma.done %s321, 1024
        $region48: #{bottleneck_forward_nhwc.7} parent=43 // pred_fallthru
          _
      $region44: #{bottleneck_forward_nhwc.7} parent=5 // pred_fallthru
        _
    $region6: #{bottleneck_forward_nhwc.7} parent=1 // loop_footer
      %s17 = sadd.s32 1, %s13
    $region7: #{bottleneck_forward_nhwc.7} parent=1 // loop_footer_branch
      %12 = sbr.rel target = $region3
    $region8: #{bottleneck_forward_nhwc.7} parent=1 // loop_exit
      _
    %326 = vsyncpa [#allocation3], 1
    %s327 = scalar_lea.sflag [#allocation3], 1
    %328 = vsyncpa %s327, 1

// kernel: bottleneck_forward_nhwc.5
$region0: #{bottleneck_forward_nhwc.5}
  #allocation0 [shape = 'u32[]', space=smem, size = 0x4, offset = 0x4, fixed_abs, tag = 'smem constant byte address 0x4 - core index']
  #allocation1 [shape = 'u32[144,128]{1,0:T(1,128)}', space=vmem, size = 0x12000, scoped, tag = 'internal scratch']
  #allocation2 [shape = 'bf16[1,10,10,128]{3,2,1,0:T(8,128)(2,1)}', space=vmem, size = 0xa000, scoped, tag = 'scratch operand']
  #allocation3 [shape = 'bf16[64,1152]{1,0:T(16,128)(2,1)}', space=vmem, size = 0x24000, scoped, tag = 'scratch operand']
  %s0 = inlined_call_operand.vmem [shape: f32[2,8,8,128], index: 0, kind: input, shape index: {}]
  %s1 = inlined_call_operand.vmem [shape: f32[1,128], index: 1, kind: input, shape index: {}]
  %s2 = inlined_call_operand.vmem [shape: f32[1,128], index: 2, kind: input, shape index: {}]
  %s3 = inlined_call_operand.vmem [shape: bf16[1152,128], index: 3, kind: input, shape index: {}]
  %s4 = inlined_call_operand.vmem [shape: f32[128,128], index: 4, kind: output, shape index: {}]
  %s5 = sld [smem:[#allocation0]]
  $region49: #{bottleneck_forward_nhwc.5} parent=0
    _
  %s7 = ssub.s32 1, %s5
  %s8 = scalar_select 0, %s7, %s5
  loop: start=0, step=1, limit=4
  $region2: #{bottleneck_forward_nhwc.5} parent=0 // loop_pre_header
    _
  $region3: #{bottleneck_forward_nhwc.5} parent=0 // loop_header
    %s10 = sphi 0, %s14
    %p11 = scmp.ge.s32.totalorder %s10, 4
    %s20 = sphi 0, %s22
    %s23 = sphi 0, %s20
    %s24 = sphi 0, %s23
    %s40 = sphi 0, %s24
    %s44 = sphi 0, %s44
    %s46 = sphi 0, %s44
    %s47 = sphi 0, %s46
    %s61 = sphi 0, %s47
    %s65 = sphi 0, %s65
    %s67 = sphi 0, %s65
    %s68 = sphi 0, %s67
    %s82 = sphi 0, %s68
    %s86 = sphi 0, %s86
    %s88 = sphi 0, %s86
    %s89 = sphi 0, %s88
    %s103 = sphi 0, %s89
    %s109 = sphi 0, %s111
    %s112 = sphi 0, %s109
    %s113 = sphi 0, %s112
    %s129 = sphi 0, %s113
  $region4: #{bottleneck_forward_nhwc.5} parent=0 // loop_header_branch
    %13 = sbr.rel (%p11) target = $region8
  $region5: #{bottleneck_forward_nhwc.5} parent=0 // loop_body
    %s15 = ssub.s32 %s10, 1
    %s16 = ssub.s32 %s10, 2
    %s17 = sadd.s32 %s10, 1
    %s18 = ssub.s32 %s10, %s17
    %p19 = scmp.eq.s32.totalorder %s18, 0
    %s21 = sadd.s32 %s20, 1
    %s22 = scalar_select %p19, %s20, %s21
    %p25 = pneg %p19
    %p26 = scmp.eq.s32.totalorder %s10, 1
    %p27 = por %p25, %p26
    %p28 = scmp.ne.s32.totalorder %s20, %s23
    %p29 = scmp.eq.s32.totalorder %s10, 0
    %p30 = por %p28, %p29
    %p31 = scmp.ne.s32.totalorder %s20, %s23
    %p32 = scmp.eq.s32.totalorder %s15, 1
    %p33 = por %p31, %p32
    %p34 = scmp.ne.s32.totalorder %s23, %s24
    %p35 = scmp.eq.s32.totalorder %s15, 0
    %p36 = por %p34, %p35
    %p37 = scmp.ne.s32.totalorder %s23, %s24
    %p38 = scmp.eq.s32.totalorder %s16, 1
    %p39 = por %p37, %p38
    %p41 = scmp.ne.s32.totalorder %s24, %s40
    %p42 = scmp.eq.s32.totalorder %s16, 0
    %p43 = por %p41, %p42
    %s45 = sadd.s32 %s44, 1
    %p48 = scmp.eq.s32.totalorder %s10, 1
    %p49 = scmp.ne.s32.totalorder %s44, %s46
    %p50 = scmp.eq.s32.totalorder %s10, 0
    %p51 = por %p49, %p50
    %p52 = scmp.ne.s32.totalorder %s44, %s46
    %p53 = scmp.eq.s32.totalorder %s15, 1
    %p54 = por %p52, %p53
    %p55 = scmp.ne.s32.totalorder %s46, %s47
    %p56 = scmp.eq.s32.totalorder %s15, 0
    %p57 = por %p55, %p56
    %p58 = scmp.ne.s32.totalorder %s46, %s47
    %p59 = scmp.eq.s32.totalorder %s16, 1
    %p60 = por %p58, %p59
    %p62 = scmp.ne.s32.totalorder %s47, %s61
    %p63 = scmp.eq.s32.totalorder %s16, 0
    %p64 = por %p62, %p63
    %s66 = sadd.s32 %s65, 1
    %p69 = scmp.eq.s32.totalorder %s10, 1
    %p70 = scmp.ne.s32.totalorder %s65, %s67
    %p71 = scmp.eq.s32.totalorder %s10, 0
    %p72 = por %p70, %p71
    %p73 = scmp.ne.s32.totalorder %s65, %s67
    %p74 = scmp.eq.s32.totalorder %s15, 1
    %p75 = por %p73, %p74
    %p76 = scmp.ne.s32.totalorder %s67, %s68
    %p77 = scmp.eq.s32.totalorder %s15, 0
    %p78 = por %p76, %p77
    %p79 = scmp.ne.s32.totalorder %s67, %s68
    %p80 = scmp.eq.s32.totalorder %s16, 1
    %p81 = por %p79, %p80
    %p83 = scmp.ne.s32.totalorder %s68, %s82
    %p84 = scmp.eq.s32.totalorder %s16, 0
    %p85 = por %p83, %p84
    %s87 = sadd.s32 %s86, 1
    %p90 = scmp.eq.s32.totalorder %s10, 1
    %p91 = scmp.ne.s32.totalorder %s86, %s88
    %p92 = scmp.eq.s32.totalorder %s10, 0
    %p93 = por %p91, %p92
    %p94 = scmp.ne.s32.totalorder %s86, %s88
    %p95 = scmp.eq.s32.totalorder %s15, 1
    %p96 = por %p94, %p95
    %p97 = scmp.ne.s32.totalorder %s88, %s89
    %p98 = scmp.eq.s32.totalorder %s15, 0
    %p99 = por %p97, %p98
    %p100 = scmp.ne.s32.totalorder %s88, %s89
    %p101 = scmp.eq.s32.totalorder %s16, 1
    %p102 = por %p100, %p101
    %p104 = scmp.ne.s32.totalorder %s89, %s103
    %p105 = scmp.eq.s32.totalorder %s16, 0
    %p106 = por %p104, %p105
    %s107 = ssub.s32 %s10, %s17
    %p108 = scmp.eq.s32.totalorder %s107, 0
    %s110 = sadd.s32 %s109, 1
    %s111 = scalar_select %p108, %s109, %s110
    %p114 = pneg %p108
    %p115 = scmp.eq.s32.totalorder %s10, 1
    %p116 = por %p114, %p115
    %p117 = scmp.ne.s32.totalorder %s109, %s112
    %p118 = scmp.eq.s32.totalorder %s10, 0
    %p119 = por %p117, %p118
    %p120 = scmp.ne.s32.totalorder %s109, %s112
    %p121 = scmp.eq.s32.totalorder %s15, 1
    %p122 = por %p120, %p121
    %p123 = scmp.ne.s32.totalorder %s112, %s113
    %p124 = scmp.eq.s32.totalorder %s15, 0
    %p125 = por %p123, %p124
    %p126 = scmp.ne.s32.totalorder %s112, %s113
    %p127 = scmp.eq.s32.totalorder %s16, 1
    %p128 = por %p126, %p127
    %p130 = scmp.ne.s32.totalorder %s113, %s129
    %p131 = scmp.eq.s32.totalorder %s16, 0
    %p132 = por %p130, %p131
    %p133 = scmp.le.s32.totalorder 1, %s10
    %p134 = scmp.lt.s32.totalorder %s10, 3
    %p135 = pnand %p133, %p134
    %p136 = pneg %p135
    // Predicated region
    $region9: #{bottleneck_forward_nhwc.5} parent=5 // pred_check
      _
    $region10: #{bottleneck_forward_nhwc.5} parent=5 // pred_check_branch
      %138 = sbr.rel (%p135) target = $region12
    $region11: #{bottleneck_forward_nhwc.5} parent=5 // pred_region
      %s139 = ssub.s32 %s10, 1
      // Predicated region
      $region13: #{bottleneck_forward_nhwc.5} parent=11 // pred_check
        %p140 = pneg %p57
      $region14: #{bottleneck_forward_nhwc.5} parent=11 // pred_check_branch
        %142 = sbr.rel (%p140) target = $region16
      $region15: #{bottleneck_forward_nhwc.5} parent=11 // pred_region
        _
      $region16: #{bottleneck_forward_nhwc.5} parent=11 // pred_fallthru
        _
      // Predicated region
      $region17: #{bottleneck_forward_nhwc.5} parent=11 // pred_check
        %p143 = pneg %p78
      $region18: #{bottleneck_forward_nhwc.5} parent=11 // pred_check_branch
        %145 = sbr.rel (%p143) target = $region20
      $region19: #{bottleneck_forward_nhwc.5} parent=11 // pred_region
        _
      $region20: #{bottleneck_forward_nhwc.5} parent=11 // pred_fallthru
        _
      // Predicated region
      $region21: #{bottleneck_forward_nhwc.5} parent=11 // pred_check
        %p146 = pneg %p99
      $region22: #{bottleneck_forward_nhwc.5} parent=11 // pred_check_branch
        %148 = sbr.rel (%p146) target = $region24
      $region23: #{bottleneck_forward_nhwc.5} parent=11 // pred_region
        _
      $region24: #{bottleneck_forward_nhwc.5} parent=11 // pred_fallthru
        _
    $region12: #{bottleneck_forward_nhwc.5} parent=5 // pred_fallthru
      _
    %p149 = scmp.lt.s32.totalorder %s10, 2
    // Predicated region
    $region25: #{bottleneck_forward_nhwc.5} parent=5 // pred_check
      %p150 = pneg %p149
    $region26: #{bottleneck_forward_nhwc.5} parent=5 // pred_check_branch
      %152 = sbr.rel (%p150) target = $region28
    $region27: #{bottleneck_forward_nhwc.5} parent=5 // pred_region
      // Predicated region
      $region29: #{bottleneck_forward_nhwc.5} parent=27 // pred_check
        %p153 = pneg %p30
      $region30: #{bottleneck_forward_nhwc.5} parent=27 // pred_check_branch
        %155 = sbr.rel (%p153) target = $region32
      $region31: #{bottleneck_forward_nhwc.5} parent=27 // pred_region
        %p156 = scmp.lt.s32.totalorder %s10, 1
        %s157 = scalar_select %p156, %s10, 1
        %s158 = smul.addr %s157, 8
        %s159 = smul.addr %s158, 8
        %s160 = scalar_lea.vmem %s0, %s159
      $region32: #{bottleneck_forward_nhwc.5} parent=27 // pred_fallthru
        _
    $region28: #{bottleneck_forward_nhwc.5} parent=5 // pred_fallthru
      _
    %p161 = scmp.le.s32.totalorder 1, %s10
    %p162 = scmp.lt.s32.totalorder %s10, 3
    %p163 = pnand %p161, %p162
    %p164 = pneg %p163
    // Predicated region
    $region33: #{bottleneck_forward_nhwc.5} parent=5 // pred_check
      _
    $region34: #{bottleneck_forward_nhwc.5} parent=5 // pred_check_branch
      %166 = sbr.rel (%p163) target = $region36
    $region35: #{bottleneck_forward_nhwc.5} parent=5 // pred_region
      %s167 = ssub.s32 %s10, 1
      %p168 = scmp.lt.s32.totalorder %s15, 1
      %s169 = scalar_select %p168, %s15, 1
      %s170 = smul.addr %s169, 8
      %s171 = smul.addr %s170, 8
      %s172 = scalar_lea.vmem %s0, %s171
      %p173 = pneg %p36
      %p174 = pneg %p33
      %p175 = pneg %p57
      %p176 = pneg %p54
      %p177 = pneg %p78
      %p178 = pneg %p75
      %p179 = pneg %p99
      %p180 = pneg %p96
      %p181 = pneg %p125
      %p182 = pneg %p122
      %s183 = smul.u32 8, %s15
      %p184 = scmp.lt.s32.totalorder %s183, 15
      %s185 = scalar_select %p184, %s183, 15
      %s186 = smul.addr %s185, 8
      %s187 = scalar_lea.vmem %s4, %s186
      %p188 = scmp.lt.s32.totalorder %s15, 1
      %s189 = scalar_select %p188, %s15, 1
      %s190 = smul.addr %s189, 8
      %s191 = smul.addr %s190, 8
      %s192 = scalar_lea.vmem %s0, %s191
      %s193 = smul.u32 8, %s15
      %p194 = scmp.lt.s32.totalorder %s193, 15
      %s195 = scalar_select %p194, %s193, 15
      %s196 = smul.addr %s195, 8
      %s197 = scalar_lea.vmem %s4, %s196
      %s198 = smul.u32 8, %s15
      %v200 = vld [vmem:[%s1] sm:$0x1]
      %v201 = vld [vmem:[%s2] sm:$0x1]
      %v202 = vld [vmem:[%s192] sm:$0xff]
      %v203 = vld [vmem:[%s192 + $0x8] sm:$0xff]
      %v204 = vld [vmem:[%s192 + $0x10] sm:$0xff]
      %v205 = vld [vmem:[%s192 + $0x18] sm:$0xff]
      %v206 = vld [vmem:[%s192 + $0x20] sm:$0xff]
      %v207 = vld [vmem:[%s192 + $0x28] sm:$0xff]
      %v208 = vld [vmem:[%s192 + $0x30] sm:$0xff]
      %v209 = vld [vmem:[%s192 + $0x38] sm:$0xff]
      %v211 = vlaneseq
      %v212 = vshrl.u32 %v211, 7
      %v213 = vsub.s32 0, %v212
      %v214 = vrot.slane %v200, %v213
      %v216 = vmul.f32 %v202, %v214
      %v217 = vmul.f32 %v203, %v214
      %v218 = vmul.f32 %v204, %v214
      %v219 = vmul.f32 %v205, %v214
      %v220 = vmul.f32 %v206, %v214
      %v221 = vmul.f32 %v207, %v214
      %v222 = vmul.f32 %v208, %v214
      %v223 = vmul.f32 %v209, %v214
      %v225 = vlaneseq
      %v226 = vshrl.u32 %v225, 7
      %v227 = vsub.s32 0, %v226
      %v228 = vrot.slane %v201, %v227
      %v230 = vadd.f32 %v216, %v228
      %v231 = vadd.f32 %v217, %v228
      %v232 = vadd.f32 %v218, %v228
      %v233 = vadd.f32 %v219, %v228
      %v234 = vadd.f32 %v220, %v228
      %v235 = vadd.f32 %v221, %v228
      %v236 = vadd.f32 %v222, %v228
      %v237 = vadd.f32 %v223, %v228
      %v238 = vmax.f32 %v230, 0.0
      %v239 = vmax.f32 %v231, 0.0
      %v240 = vmax.f32 %v232, 0.0
      %v241 = vmax.f32 %v233, 0.0
      %v242 = vmax.f32 %v234, 0.0
      %v243 = vmax.f32 %v235, 0.0
      %v244 = vmax.f32 %v236, 0.0
      %v245 = vmax.f32 %v237, 0.0
      %v246 = vpack.c.bf16 %v238, %v238
      %v247 = vpack.c.bf16 %v239, %v239
      %v248 = vpack.c.bf16 %v240, %v240
      %v249 = vpack.c.bf16 %v241, %v241
      %v250 = vpack.c.bf16 %v242, %v242
      %v251 = vpack.c.bf16 %v243, %v243
      %v252 = vpack.c.bf16 %v244, %v244
      %v253 = vpack.c.bf16 %v245, %v245
      %254 = vst [vmem:[#allocation2] sm:$0xf] 0
      %255 = vst [vmem:[#allocation2 + $0x4] sm:$0x1] 0
      %s256 = scalar_lea.vmem [#allocation2], 72
      %257 = vst [vmem:[%s256] sm:$0xf] 0
      %258 = vst [vmem:[%s256 + $0x4] sm:$0x1] 0
      %vm259 = vcmask 1040384
      %vm260 = vsmask.f32 256
      %vm261 = vmand %vm259, %vm260
      %v262 = vld [vmem:[#allocation2] sm:$0x1]
      %v263 = vsel %vm261, 0, %v262
      %264 = vst [vmem:[#allocation2] sm:$0x1] %v263
      %v265 = vld [vmem:[#allocation2 + $0x8] sm:$0x1]
      %v266 = vsel %vm261, 0, %v265
      %267 = vst [vmem:[#allocation2 + $0x8] sm:$0x1] %v266
      %v268 = vld [vmem:[#allocation2 + $0x10] sm:$0x1]
      %v269 = vsel %vm261, 0, %v268
      %270 = vst [vmem:[#allocation2 + $0x10] sm:$0x1] %v269
      %v271 = vld [vmem:[#allocation2 + $0x18] sm:$0x1]
      %v272 = vsel %vm261, 0, %v271
      %273 = vst [vmem:[#allocation2 + $0x18] sm:$0x1] %v272
      %v274 = vld [vmem:[#allocation2 + $0x20] sm:$0x1]
      %v275 = vsel %vm261, 0, %v274
      %276 = vst [vmem:[#allocation2 + $0x20] sm:$0x1] %v275
      %v277 = vld [vmem:[#allocation2 + $0x28] sm:$0x1]
      %v278 = vsel %vm261, 0, %v277
      %279 = vst [vmem:[#allocation2 + $0x28] sm:$0x1] %v278
      %v280 = vld [vmem:[#allocation2 + $0x30] sm:$0x1]
      %v281 = vsel %vm261, 0, %v280
      %282 = vst [vmem:[#allocation2 + $0x30] sm:$0x1] %v281
      %v283 = vld [vmem:[#allocation2 + $0x38] sm:$0x1]
      %v284 = vsel %vm261, 0, %v283
      %285 = vst [vmem:[#allocation2 + $0x38] sm:$0x1] %v284
      %v286 = vld [vmem:[#allocation2 + $0x40] sm:$0x1]
      %v287 = vsel %vm261, 0, %v286
      %288 = vst [vmem:[#allocation2 + $0x40] sm:$0x1] %v287
      %v289 = vld [vmem:[#allocation2 + $0x48] sm:$0x1]
      %v290 = vsel %vm261, 0, %v289
      %291 = vst [vmem:[#allocation2 + $0x48] sm:$0x1] %v290
      %vm292 = vsmask.f32 7938
      %vm293 = vmand %vm259, %vm292
      %v294 = vld [vmem:[#allocation2 + $0x4] sm:$0x1]
      %v295 = vsel %vm293, 0, %v294
      %296 = vst [vmem:[#allocation2 + $0x4] sm:$0x1] %v295
      %v297 = vld [vmem:[#allocation2 + $0xc] sm:$0x1]
      %v298 = vsel %vm293, 0, %v297
      %299 = vst [vmem:[#allocation2 + $0xc] sm:$0x1] %v298
      %v300 = vld [vmem:[#allocation2 + $0x14] sm:$0x1]
      %v301 = vsel %vm293, 0, %v300
      %302 = vst [vmem:[#allocation2 + $0x14] sm:$0x1] %v301
      %v303 = vld [vmem:[#allocation2 + $0x1c] sm:$0x1]
      %v304 = vsel %vm293, 0, %v303
      %305 = vst [vmem:[#allocation2 + $0x1c] sm:$0x1] %v304
      %v306 = vld [vmem:[#allocation2 + $0x24] sm:$0x1]
      %v307 = vsel %vm293, 0, %v306
      %308 = vst [vmem:[#allocation2 + $0x24] sm:$0x1] %v307
      %v309 = vld [vmem:[#allocation2 + $0x2c] sm:$0x1]
      %v310 = vsel %vm293, 0, %v309
      %311 = vst [vmem:[#allocation2 + $0x2c] sm:$0x1] %v310
      %v312 = vld [vmem:[#allocation2 + $0x34] sm:$0x1]
      %v313 = vsel %vm293, 0, %v312
      %314 = vst [vmem:[#allocation2 + $0x34] sm:$0x1] %v313
      %v315 = vld [vmem:[#allocation2 + $0x3c] sm:$0x1]
      %v316 = vsel %vm293, 0, %v315
      %317 = vst [vmem:[#allocation2 + $0x3c] sm:$0x1] %v316
      %v318 = vld [vmem:[#allocation2 + $0x44] sm:$0x1]
      %v319 = vsel %vm293, 0, %v318
      %320 = vst [vmem:[#allocation2 + $0x44] sm:$0x1] %v319
      %v321 = vld [vmem:[#allocation2 + $0x4c] sm:$0x1]
      %v322 = vsel %vm293, 0, %v321
      %323 = vst [vmem:[#allocation2 + $0x4c] sm:$0x1] %v322
      %v332 = vunpack.c.l.b16 %v246
      %v333 = vunpack.c.l.b16 %v247
      %v334 = vunpack.c.l.b16 %v248
      %v335 = vunpack.c.l.b16 %v249
      %v336 = vunpack.c.l.b16 %v250
      %v337 = vunpack.c.l.b16 %v251
      %v338 = vunpack.c.l.b16 %v252
      %v339 = vunpack.c.l.b16 %v253
      %v340 = vpack.c.b16 %v332, %v332
      %v341 = vpack.c.b16 %v333, %v333
      %v342 = vpack.c.b16 %v334, %v334
      %v343 = vpack.c.b16 %v335, %v335
      %v344 = vpack.c.b16 %v336, %v336
      %v345 = vpack.c.b16 %v337, %v337
      %v346 = vpack.c.b16 %v338, %v338
      %v347 = vpack.c.b16 %v339, %v339
      %v349 = vshrl.u32 %v340, 16
      %v351 = vrot.slane %v349, 7
      %v352 = vshll.u32 %v340, 16
      %v354 = vor.u32 %v351, %v352
      %v355 = vrot.slane %v351, 4
      %v357 = vshrl.u32 %v341, 16
      %v359 = vrot.slane %v357, 7
      %v360 = vshll.u32 %v341, 16
      %v362 = vor.u32 %v359, %v360
      %v363 = vrot.slane %v359, 4
      %v365 = vshrl.u32 %v342, 16
      %v367 = vrot.slane %v365, 7
      %v368 = vshll.u32 %v342, 16
      %v370 = vor.u32 %v367, %v368
      %v371 = vrot.slane %v367, 4
      %v373 = vshrl.u32 %v343, 16
      %v375 = vrot.slane %v373, 7
      %v376 = vshll.u32 %v343, 16
      %v378 = vor.u32 %v375, %v376
      %v379 = vrot.slane %v375, 4
      %v381 = vshrl.u32 %v344, 16
      %v383 = vrot.slane %v381, 7
      %v384 = vshll.u32 %v344, 16
      %v386 = vor.u32 %v383, %v384
      %v387 = vrot.slane %v383, 4
      %v389 = vshrl.u32 %v345, 16
      %v391 = vrot.slane %v389, 7
      %v392 = vshll.u32 %v345, 16
      %v394 = vor.u32 %v391, %v392
      %v395 = vrot.slane %v391, 4
      %v397 = vshrl.u32 %v346, 16
      %v399 = vrot.slane %v397, 7
      %v400 = vshll.u32 %v346, 16
      %v402 = vor.u32 %v399, %v400
      %v403 = vrot.slane %v399, 4
      %v405 = vshrl.u32 %v347, 16
      %v407 = vrot.slane %v405, 7
      %v408 = vshll.u32 %v347, 16
      %v410 = vor.u32 %v407, %v408
      %v411 = vrot.slane %v407, 4
      %s428 = scalar_lea.vmem [#allocation2], 8
      %vm429 = vcmask 1043456
      %vm430 = vmand %vm429, %vm292
      %v431 = vld [vmem:[%s428] sm:$0xf]
      %v432 = vsel %vm430, %v354, %v431
      %433 = vst [vmem:[%s428] sm:$0xf] %v432
      %v434 = vld [vmem:[%s428 + $0x4] sm:$0x1]
      %v435 = vsel %vm261, %v355, %v434
      %436 = vst [vmem:[%s428 + $0x4] sm:$0x1] %v435
      %v437 = vld [vmem:[%s428 + $0x8] sm:$0xf]
      %v438 = vsel %vm430, %v362, %v437
      %439 = vst [vmem:[%s428 + $0x8] sm:$0xf] %v438
      %v440 = vld [vmem:[%s428 + $0xc] sm:$0x1]
      %v441 = vsel %vm261, %v363, %v440
      %442 = vst [vmem:[%s428 + $0xc] sm:$0x1] %v441
      %v443 = vld [vmem:[%s428 + $0x10] sm:$0xf]
      %v444 = vsel %vm430, %v370, %v443
      %445 = vst [vmem:[%s428 + $0x10] sm:$0xf] %v444
      %v446 = vld [vmem:[%s428 + $0x14] sm:$0x1]
      %v447 = vsel %vm261, %v371, %v446
      %448 = vst [vmem:[%s428 + $0x14] sm:$0x1] %v447
      %v449 = vld [vmem:[%s428 + $0x18] sm:$0xf]
      %v450 = vsel %vm430, %v378, %v449
      %451 = vst [vmem:[%s428 + $0x18] sm:$0xf] %v450
      %v452 = vld [vmem:[%s428 + $0x1c] sm:$0x1]
      %v453 = vsel %vm261, %v379, %v452
      %454 = vst [vmem:[%s428 + $0x1c] sm:$0x1] %v453
      %v455 = vld [vmem:[%s428 + $0x20] sm:$0xf]
      %v456 = vsel %vm430, %v386, %v455
      %457 = vst [vmem:[%s428 + $0x20] sm:$0xf] %v456
      %v458 = vld [vmem:[%s428 + $0x24] sm:$0x1]
      %v459 = vsel %vm261, %v387, %v458
      %460 = vst [vmem:[%s428 + $0x24] sm:$0x1] %v459
      %v461 = vld [vmem:[%s428 + $0x28] sm:$0xf]
      %v462 = vsel %vm430, %v394, %v461
      %463 = vst [vmem:[%s428 + $0x28] sm:$0xf] %v462
      %v464 = vld [vmem:[%s428 + $0x2c] sm:$0x1]
      %v465 = vsel %vm261, %v395, %v464
      %466 = vst [vmem:[%s428 + $0x2c] sm:$0x1] %v465
      %v467 = vld [vmem:[%s428 + $0x30] sm:$0xf]
      %v468 = vsel %vm430, %v402, %v467
      %469 = vst [vmem:[%s428 + $0x30] sm:$0xf] %v468
      %v470 = vld [vmem:[%s428 + $0x34] sm:$0x1]
      %v471 = vsel %vm261, %v403, %v470
      %472 = vst [vmem:[%s428 + $0x34] sm:$0x1] %v471
      %v473 = vld [vmem:[%s428 + $0x38] sm:$0xf]
      %v474 = vsel %vm430, %v410, %v473
      %475 = vst [vmem:[%s428 + $0x38] sm:$0xf] %v474
      %v476 = vld [vmem:[%s428 + $0x3c] sm:$0x1]
      %v477 = vsel %vm261, %v411, %v476
      %478 = vst [vmem:[%s428 + $0x3c] sm:$0x1] %v477
      %v479 = vld [vmem:[#allocation2] sm:$0xf]
      %v480 = vld [vmem:[#allocation2 + $0x8] sm:$0xf]
      %v481 = vld [vmem:[#allocation2 + $0x10] sm:$0xf]
      %v482 = vld [vmem:[#allocation2 + $0x18] sm:$0xf]
      %v483 = vld [vmem:[#allocation2 + $0x20] sm:$0xf]
      %v484 = vld [vmem:[#allocation2 + $0x28] sm:$0xf]
      %v485 = vld [vmem:[#allocation2 + $0x30] sm:$0xf]
      %v486 = vld [vmem:[#allocation2 + $0x38] sm:$0xf]
      %v495 = vunpack.c.l.b16 %v479
      %v496 = vunpack.c.l.b16 %v480
      %v497 = vunpack.c.l.b16 %v481
      %v498 = vunpack.c.l.b16 %v482
      %v499 = vunpack.c.l.b16 %v483
      %v500 = vunpack.c.l.b16 %v484
      %v501 = vunpack.c.l.b16 %v485
      %v502 = vunpack.c.l.b16 %v486
      %v503 = vpack.c.b16 %v496, %v495
      %v504 = vpack.c.b16 %v498, %v497
      %v505 = vpack.c.b16 %v500, %v499
      %v506 = vpack.c.b16 %v502, %v501
      %511 = vst [vmem:[#allocation3] sm:$0xff] %v503
      %512 = vst [vmem:[#allocation3 + $0x48] sm:$0xff] %v504
      %513 = vst [vmem:[#allocation3 + $0x90] sm:$0xff] %v505
      %514 = vst [vmem:[#allocation3 + $0xd8] sm:$0xff] %v506
      %v515 = vld [vmem:[#allocation2] sm:$0xf]
      %v516 = vld [vmem:[#allocation2 + $0x4] sm:$0x1]
      %v517 = vld [vmem:[#allocation2 + $0x8] sm:$0xf]
      %v518 = vld [vmem:[#allocation2 + $0xc] sm:$0x1]
      %v519 = vld [vmem:[#allocation2 + $0x10] sm:$0xf]
      %v520 = vld [vmem:[#allocation2 + $0x14] sm:$0x1]
      %v521 = vld [vmem:[#allocation2 + $0x18] sm:$0xf]
      %v522 = vld [vmem:[#allocation2 + $0x1c] sm:$0x1]
      %v523 = vld [vmem:[#allocation2 + $0x20] sm:$0xf]
      %v524 = vld [vmem:[#allocation2 + $0x24] sm:$0x1]
      %v525 = vld [vmem:[#allocation2 + $0x28] sm:$0xf]
      %v526 = vld [vmem:[#allocation2 + $0x2c] sm:$0x1]
      %v527 = vld [vmem:[#allocation2 + $0x30] sm:$0xf]
      %v528 = vld [vmem:[#allocation2 + $0x34] sm:$0x1]
      %v529 = vld [vmem:[#allocation2 + $0x38] sm:$0xf]
      %v530 = vld [vmem:[#allocation2 + $0x3c] sm:$0x1]
      %vm531 = vsmask.f32 3328
      %vm532 = vsmask.f32 7440
      %vm533 = vmor %vm531, %vm532
      %v535 = vshrl.u32 %v515, 16
      %v537 = vrot.slane %v535, 4
      %v538 = vshll.u32 %v515, 16
      %v540 = vrot.slane %v538, 5
      %v541 = vor.u32 %v537, %v540
      %v542 = vrot.slane %v541, 4
      %v544 = vshll.u32 %v516, 16
      %v546 = vrot.slane %v544, 5
      %v547 = vsel %vm533, %v542, %v546
      %v549 = vshrl.u32 %v517, 16
      %v551 = vrot.slane %v549, 4
      %v552 = vshll.u32 %v517, 16
      %v554 = vrot.slane %v552, 5
      %v555 = vor.u32 %v551, %v554
      %v556 = vrot.slane %v555, 4
      %v558 = vshll.u32 %v518, 16
      %v560 = vrot.slane %v558, 5
      %v561 = vsel %vm533, %v556, %v560
      %v563 = vshrl.u32 %v519, 16
      %v565 = vrot.slane %v563, 4
      %v566 = vshll.u32 %v519, 16
      %v568 = vrot.slane %v566, 5
      %v569 = vor.u32 %v565, %v568
      %v570 = vrot.slane %v569, 4
      %v572 = vshll.u32 %v520, 16
      %v574 = vrot.slane %v572, 5
      %v575 = vsel %vm533, %v570, %v574
      %v577 = vshrl.u32 %v521, 16
      %v579 = vrot.slane %v577, 4
      %v580 = vshll.u32 %v521, 16
      %v582 = vrot.slane %v580, 5
      %v583 = vor.u32 %v579, %v582
      %v584 = vrot.slane %v583, 4
      %v586 = vshll.u32 %v522, 16
      %v588 = vrot.slane %v586, 5
      %v589 = vsel %vm533, %v584, %v588
      %v591 = vshrl.u32 %v523, 16
      %v593 = vrot.slane %v591, 4
      %v594 = vshll.u32 %v523, 16
      %v596 = vrot.slane %v594, 5
      %v597 = vor.u32 %v593, %v596
      %v598 = vrot.slane %v597, 4
      %v600 = vshll.u32 %v524, 16
      %v602 = vrot.slane %v600, 5
      %v603 = vsel %vm533, %v598, %v602
      %v605 = vshrl.u32 %v525, 16
      %v607 = vrot.slane %v605, 4
      %v608 = vshll.u32 %v525, 16
      %v610 = vrot.slane %v608, 5
      %v611 = vor.u32 %v607, %v610
      %v612 = vrot.slane %v611, 4
      %v614 = vshll.u32 %v526, 16
      %v616 = vrot.slane %v614, 5
      %v617 = vsel %vm533, %v612, %v616
      %v619 = vshrl.u32 %v527, 16
      %v621 = vrot.slane %v619, 4
      %v622 = vshll.u32 %v527, 16
      %v624 = vrot.slane %v622, 5
      %v625 = vor.u32 %v621, %v624
      %v626 = vrot.slane %v625, 4
      %v628 = vshll.u32 %v528, 16
      %v630 = vrot.slane %v628, 5
      %v631 = vsel %vm533, %v626, %v630
      %v633 = vshrl.u32 %v529, 16
      %v635 = vrot.slane %v633, 4
      %v636 = vshll.u32 %v529, 16
      %v638 = vrot.slane %v636, 5
      %v639 = vor.u32 %v635, %v638
      %v640 = vrot.slane %v639, 4
      %v642 = vshll.u32 %v530, 16
      %v644 = vrot.slane %v642, 5
      %v645 = vsel %vm533, %v640, %v644
      %v646 = vunpack.c.l.b16 %v547
      %v647 = vunpack.c.l.b16 %v561
      %v648 = vunpack.c.l.b16 %v575
      %v649 = vunpack.c.l.b16 %v589
      %v650 = vunpack.c.l.b16 %v603
      %v651 = vunpack.c.l.b16 %v617
      %v652 = vunpack.c.l.b16 %v631
      %v653 = vunpack.c.l.b16 %v645
      %v654 = vpack.c.b16 %v647, %v646
      %v655 = vpack.c.b16 %v649, %v648
      %v656 = vpack.c.b16 %v651, %v650
      %v657 = vpack.c.b16 %v653, %v652
      %662 = vst [vmem:[#allocation3 + $0x8] sm:$0xff] %v654
      %663 = vst [vmem:[#allocation3 + $0x50] sm:$0xff] %v655
      %664 = vst [vmem:[#allocation3 + $0x98] sm:$0xff] %v656
      %665 = vst [vmem:[#allocation3 + $0xe0] sm:$0xff] %v657
      %v666 = vld [vmem:[#allocation2] sm:$0xe]
      %v667 = vld [vmem:[#allocation2 + $0x4] sm:$0x1]
      %v668 = vld [vmem:[#allocation2 + $0x8] sm:$0xe]
      %v669 = vld [vmem:[#allocation2 + $0xc] sm:$0x1]
      %v670 = vld [vmem:[#allocation2 + $0x10] sm:$0xe]
      %v671 = vld [vmem:[#allocation2 + $0x14] sm:$0x1]
      %v672 = vld [vmem:[#allocation2 + $0x18] sm:$0xe]
      %v673 = vld [vmem:[#allocation2 + $0x1c] sm:$0x1]
      %v674 = vld [vmem:[#allocation2 + $0x20] sm:$0xe]
      %v675 = vld [vmem:[#allocation2 + $0x24] sm:$0x1]
      %v676 = vld [vmem:[#allocation2 + $0x28] sm:$0xe]
      %v677 = vld [vmem:[#allocation2 + $0x2c] sm:$0x1]
      %v678 = vld [vmem:[#allocation2 + $0x30] sm:$0xe]
      %v679 = vld [vmem:[#allocation2 + $0x34] sm:$0x1]
      %v680 = vld [vmem:[#allocation2 + $0x38] sm:$0xe]
      %v681 = vld [vmem:[#allocation2 + $0x3c] sm:$0x1]
      %vm698 = vcmask 1042432
      %vm699 = vcmask 1046532
      %vm700 = vmor %vm698, %vm699
      %v701 = vrot.slane %v666, 5
      %v702 = vrot.slane %v701, 4
      %v703 = vrot.slane %v667, 5
      %v704 = vsel %vm700, %v702, %v703
      %v705 = vrot.slane %v668, 5
      %v706 = vrot.slane %v705, 4
      %v707 = vrot.slane %v669, 5
      %v708 = vsel %vm700, %v706, %v707
      %v709 = vrot.slane %v670, 5
      %v710 = vrot.slane %v709, 4
      %v711 = vrot.slane %v671, 5
      %v712 = vsel %vm700, %v710, %v711
      %v713 = vrot.slane %v672, 5
      %v714 = vrot.slane %v713, 4
      %v715 = vrot.slane %v673, 5
      %v716 = vsel %vm700, %v714, %v715
      %v717 = vrot.slane %v674, 5
      %v718 = vrot.slane %v717, 4
      %v719 = vrot.slane %v675, 5
      %v720 = vsel %vm700, %v718, %v719
      %v721 = vrot.slane %v676, 5
      %v722 = vrot.slane %v721, 4
      %v723 = vrot.slane %v677, 5
      %v724 = vsel %vm700, %v722, %v723
      %v725 = vrot.slane %v678, 5
      %v726 = vrot.slane %v725, 4
      %v727 = vrot.slane %v679, 5
      %v728 = vsel %vm700, %v726, %v727
      %v729 = vrot.slane %v680, 5
      %v730 = vrot.slane %v729, 4
      %v731 = vrot.slane %v681, 5
      %v732 = vsel %vm700, %v730, %v731
      %v733 = vunpack.c.l.b16 %v704
      %v734 = vunpack.c.l.b16 %v708
      %v735 = vunpack.c.l.b16 %v712
      %v736 = vunpack.c.l.b16 %v716
      %v737 = vunpack.c.l.b16 %v720
      %v738 = vunpack.c.l.b16 %v724
      %v739 = vunpack.c.l.b16 %v728
      %v740 = vunpack.c.l.b16 %v732
      %v741 = vpack.c.b16 %v734, %v733
      %v742 = vpack.c.b16 %v736, %v735
      %v743 = vpack.c.b16 %v738, %v737
      %v744 = vpack.c.b16 %v740, %v739
      %749 = vst [vmem:[#allocation3 + $0x10] sm:$0xff] %v741
      %750 = vst [vmem:[#allocation3 + $0x58] sm:$0xff] %v742
      %751 = vst [vmem:[#allocation3 + $0xa0] sm:$0xff] %v743
      %752 = vst [vmem:[#allocation3 + $0xe8] sm:$0xff] %v744
      %v753 = vld [vmem:[%s428] sm:$0xf]
      %v754 = vld [vmem:[%s428 + $0x8] sm:$0xf]
      %v755 = vld [vmem:[%s428 + $0x10] sm:$0xf]
      %v756 = vld [vmem:[%s428 + $0x18] sm:$0xf]
      %v757 = vld [vmem:[%s428 + $0x20] sm:$0xf]
      %v758 = vld [vmem:[%s428 + $0x28] sm:$0xf]
      %v759 = vld [vmem:[%s428 + $0x30] sm:$0xf]
      %v760 = vld [vmem:[%s428 + $0x38] sm:$0xf]
      %v769 = vunpack.c.l.b16 %v753
      %v770 = vunpack.c.l.b16 %v754
      %v771 = vunpack.c.l.b16 %v755
      %v772 = vunpack.c.l.b16 %v756
      %v773 = vunpack.c.l.b16 %v757
      %v774 = vunpack.c.l.b16 %v758
      %v775 = vunpack.c.l.b16 %v759
      %v776 = vunpack.c.l.b16 %v760
      %v777 = vpack.c.b16 %v770, %v769
      %v778 = vpack.c.b16 %v772, %v771
      %v779 = vpack.c.b16 %v774, %v773
      %v780 = vpack.c.b16 %v776, %v775
      %785 = vst [vmem:[#allocation3 + $0x18] sm:$0xff] %v777
      %786 = vst [vmem:[#allocation3 + $0x60] sm:$0xff] %v778
      %787 = vst [vmem:[#allocation3 + $0xa8] sm:$0xff] %v779
      %788 = vst [vmem:[#allocation3 + $0xf0] sm:$0xff] %v780
      %v789 = vld [vmem:[%s428] sm:$0xf]
      %v790 = vld [vmem:[%s428 + $0x4] sm:$0x1]
      %v791 = vld [vmem:[%s428 + $0x8] sm:$0xf]
      %v792 = vld [vmem:[%s428 + $0xc] sm:$0x1]
      %v793 = vld [vmem:[%s428 + $0x10] sm:$0xf]
      %v794 = vld [vmem:[%s428 + $0x14] sm:$0x1]
      %v795 = vld [vmem:[%s428 + $0x18] sm:$0xf]
      %v796 = vld [vmem:[%s428 + $0x1c] sm:$0x1]
      %v797 = vld [vmem:[%s428 + $0x20] sm:$0xf]
      %v798 = vld [vmem:[%s428 + $0x24] sm:$0x1]
      %v799 = vld [vmem:[%s428 + $0x28] sm:$0xf]
      %v800 = vld [vmem:[%s428 + $0x2c] sm:$0x1]
      %v801 = vld [vmem:[%s428 + $0x30] sm:$0xf]
      %v802 = vld [vmem:[%s428 + $0x34] sm:$0x1]
      %v803 = vld [vmem:[%s428 + $0x38] sm:$0xf]
      %v804 = vld [vmem:[%s428 + $0x3c] sm:$0x1]
      %v806 = vshrl.u32 %v789, 16
      %v808 = vrot.slane %v806, 4
      %v809 = vshll.u32 %v789, 16
      %v811 = vrot.slane %v809, 5
      %v812 = vor.u32 %v808, %v811
      %v813 = vrot.slane %v812, 4
      %v815 = vshll.u32 %v790, 16
      %v817 = vrot.slane %v815, 5
      %v818 = vsel %vm533, %v813, %v817
      %v820 = vshrl.u32 %v791, 16
      %v822 = vrot.slane %v820, 4
      %v823 = vshll.u32 %v791, 16
      %v825 = vrot.slane %v823, 5
      %v826 = vor.u32 %v822, %v825
      %v827 = vrot.slane %v826, 4
      %v829 = vshll.u32 %v792, 16
      %v831 = vrot.slane %v829, 5
      %v832 = vsel %vm533, %v827, %v831
      %v834 = vshrl.u32 %v793, 16
      %v836 = vrot.slane %v834, 4
      %v837 = vshll.u32 %v793, 16
      %v839 = vrot.slane %v837, 5
      %v840 = vor.u32 %v836, %v839
      %v841 = vrot.slane %v840, 4
      %v843 = vshll.u32 %v794, 16
      %v845 = vrot.slane %v843, 5
      %v846 = vsel %vm533, %v841, %v845
      %v848 = vshrl.u32 %v795, 16
      %v850 = vrot.slane %v848, 4
      %v851 = vshll.u32 %v795, 16
      %v853 = vrot.slane %v851, 5
      %v854 = vor.u32 %v850, %v853
      %v855 = vrot.slane %v854, 4
      %v857 = vshll.u32 %v796, 16
      %v859 = vrot.slane %v857, 5
      %v860 = vsel %vm533, %v855, %v859
      %v862 = vshrl.u32 %v797, 16
      %v864 = vrot.slane %v862, 4
      %v865 = vshll.u32 %v797, 16
      %v867 = vrot.slane %v865, 5
      %v868 = vor.u32 %v864, %v867
      %v869 = vrot.slane %v868, 4
      %v871 = vshll.u32 %v798, 16
      %v873 = vrot.slane %v871, 5
      %v874 = vsel %vm533, %v869, %v873
      %v876 = vshrl.u32 %v799, 16
      %v878 = vrot.slane %v876, 4
      %v879 = vshll.u32 %v799, 16
      %v881 = vrot.slane %v879, 5
      %v882 = vor.u32 %v878, %v881
      %v883 = vrot.slane %v882, 4
      %v885 = vshll.u32 %v800, 16
      %v887 = vrot.slane %v885, 5
      %v888 = vsel %vm533, %v883, %v887
      %v890 = vshrl.u32 %v801, 16
      %v892 = vrot.slane %v890, 4
      %v893 = vshll.u32 %v801, 16
      %v895 = vrot.slane %v893, 5
      %v896 = vor.u32 %v892, %v895
      %v897 = vrot.slane %v896, 4
      %v899 = vshll.u32 %v802, 16
      %v901 = vrot.slane %v899, 5
      %v902 = vsel %vm533, %v897, %v901
      %v904 = vshrl.u32 %v803, 16
      %v906 = vrot.slane %v904, 4
      %v907 = vshll.u32 %v803, 16
      %v909 = vrot.slane %v907, 5
      %v910 = vor.u32 %v906, %v909
      %v911 = vrot.slane %v910, 4
      %v913 = vshll.u32 %v804, 16
      %v915 = vrot.slane %v913, 5
      %v916 = vsel %vm533, %v911, %v915
      %v917 = vunpack.c.l.b16 %v818
      %v918 = vunpack.c.l.b16 %v832
      %v919 = vunpack.c.l.b16 %v846
      %v920 = vunpack.c.l.b16 %v860
      %v921 = vunpack.c.l.b16 %v874
      %v922 = vunpack.c.l.b16 %v888
      %v923 = vunpack.c.l.b16 %v902
      %v924 = vunpack.c.l.b16 %v916
      %v925 = vpack.c.b16 %v918, %v917
      %v926 = vpack.c.b16 %v920, %v919
      %v927 = vpack.c.b16 %v922, %v921
      %v928 = vpack.c.b16 %v924, %v923
      %933 = vst [vmem:[#allocation3 + $0x20] sm:$0xff] %v925
      %934 = vst [vmem:[#allocation3 + $0x68] sm:$0xff] %v926
      %935 = vst [vmem:[#allocation3 + $0xb0] sm:$0xff] %v927
      %936 = vst [vmem:[#allocation3 + $0xf8] sm:$0xff] %v928
      %v937 = vld [vmem:[%s428] sm:$0xe]
      %v938 = vld [vmem:[%s428 + $0x4] sm:$0x1]
      %v939 = vld [vmem:[%s428 + $0x8] sm:$0xe]
      %v940 = vld [vmem:[%s428 + $0xc] sm:$0x1]
      %v941 = vld [vmem:[%s428 + $0x10] sm:$0xe]
      %v942 = vld [vmem:[%s428 + $0x14] sm:$0x1]
      %v943 = vld [vmem:[%s428 + $0x18] sm:$0xe]
      %v944 = vld [vmem:[%s428 + $0x1c] sm:$0x1]
      %v945 = vld [vmem:[%s428 + $0x20] sm:$0xe]
      %v946 = vld [vmem:[%s428 + $0x24] sm:$0x1]
      %v947 = vld [vmem:[%s428 + $0x28] sm:$0xe]
      %v948 = vld [vmem:[%s428 + $0x2c] sm:$0x1]
      %v949 = vld [vmem:[%s428 + $0x30] sm:$0xe]
      %v950 = vld [vmem:[%s428 + $0x34] sm:$0x1]
      %v951 = vld [vmem:[%s428 + $0x38] sm:$0xe]
      %v952 = vld [vmem:[%s428 + $0x3c] sm:$0x1]
      %v969 = vrot.slane %v937, 5
      %v970 = vrot.slane %v969, 4
      %v971 = vrot.slane %v938, 5
      %v972 = vsel %vm700, %v970, %v971
      %v973 = vrot.slane %v939, 5
      %v974 = vrot.slane %v973, 4
      %v975 = vrot.slane %v940, 5
      %v976 = vsel %vm700, %v974, %v975
      %v977 = vrot.slane %v941, 5
      %v978 = vrot.slane %v977, 4
      %v979 = vrot.slane %v942, 5
      %v980 = vsel %vm700, %v978, %v979
      %v981 = vrot.slane %v943, 5
      %v982 = vrot.slane %v981, 4
      %v983 = vrot.slane %v944, 5
      %v984 = vsel %vm700, %v982, %v983
      %v985 = vrot.slane %v945, 5
      %v986 = vrot.slane %v985, 4
      %v987 = vrot.slane %v946, 5
      %v988 = vsel %vm700, %v986, %v987
      %v989 = vrot.slane %v947, 5
      %v990 = vrot.slane %v989, 4
      %v991 = vrot.slane %v948, 5
      %v992 = vsel %vm700, %v990, %v991
      %v993 = vrot.slane %v949, 5
      %v994 = vrot.slane %v993, 4
      %v995 = vrot.slane %v950, 5
      %v996 = vsel %vm700, %v994, %v995
      %v997 = vrot.slane %v951, 5
      %v998 = vrot.slane %v997, 4
      %v999 = vrot.slane %v952, 5
      %v1000 = vsel %vm700, %v998, %v999
      %v1001 = vunpack.c.l.b16 %v972
      %v1002 = vunpack.c.l.b16 %v976
      %v1003 = vunpack.c.l.b16 %v980
      %v1004 = vunpack.c.l.b16 %v984
      %v1005 = vunpack.c.l.b16 %v988
      %v1006 = vunpack.c.l.b16 %v992
      %v1007 = vunpack.c.l.b16 %v996
      %v1008 = vunpack.c.l.b16 %v1000
      %v1009 = vpack.c.b16 %v1002, %v1001
      %v1010 = vpack.c.b16 %v1004, %v1003
      %v1011 = vpack.c.b16 %v1006, %v1005
      %v1012 = vpack.c.b16 %v1008, %v1007
      %1017 = vst [vmem:[#allocation3 + $0x28] sm:$0xff] %v1009
      %1018 = vst [vmem:[#allocation3 + $0x70] sm:$0xff] %v1010
      %1019 = vst [vmem:[#allocation3 + $0xb8] sm:$0xff] %v1011
      %1020 = vst [vmem:[#allocation3 + $0x100] sm:$0xff] %v1012
      %s1021 = scalar_lea.vmem [#allocation2], 16
      %v1022 = vld [vmem:[%s1021] sm:$0xf]
      %v1023 = vld [vmem:[%s1021 + $0x8] sm:$0xf]
      %v1024 = vld [vmem:[%s1021 + $0x10] sm:$0xf]
      %v1025 = vld [vmem:[%s1021 + $0x18] sm:$0xf]
      %v1026 = vld [vmem:[%s1021 + $0x20] sm:$0xf]
      %v1027 = vld [vmem:[%s1021 + $0x28] sm:$0xf]
      %v1028 = vld [vmem:[%s1021 + $0x30] sm:$0xf]
      %v1029 = vld [vmem:[%s1021 + $0x38] sm:$0xf]
      %v1038 = vunpack.c.l.b16 %v1022
      %v1039 = vunpack.c.l.b16 %v1023
      %v1040 = vunpack.c.l.b16 %v1024
      %v1041 = vunpack.c.l.b16 %v1025
      %v1042 = vunpack.c.l.b16 %v1026
      %v1043 = vunpack.c.l.b16 %v1027
      %v1044 = vunpack.c.l.b16 %v1028
      %v1045 = vunpack.c.l.b16 %v1029
      %v1046 = vpack.c.b16 %v1039, %v1038
      %v1047 = vpack.c.b16 %v1041, %v1040
      %v1048 = vpack.c.b16 %v1043, %v1042
      %v1049 = vpack.c.b16 %v1045, %v1044
      %1054 = vst [vmem:[#allocation3 + $0x30] sm:$0xff] %v1046
      %1055 = vst [vmem:[#allocation3 + $0x78] sm:$0xff] %v1047
      %1056 = vst [vmem:[#allocation3 + $0xc0] sm:$0xff] %v1048
      %1057 = vst [vmem:[#allocation3 + $0x108] sm:$0xff] %v1049
      %v1058 = vld [vmem:[%s1021] sm:$0xf]
      %v1059 = vld [vmem:[%s1021 + $0x4] sm:$0x1]
      %v1060 = vld [vmem:[%s1021 + $0x8] sm:$0xf]
      %v1061 = vld [vmem:[%s1021 + $0xc] sm:$0x1]
      %v1062 = vld [vmem:[%s1021 + $0x10] sm:$0xf]
      %v1063 = vld [vmem:[%s1021 + $0x14] sm:$0x1]
      %v1064 = vld [vmem:[%s1021 + $0x18] sm:$0xf]
      %v1065 = vld [vmem:[%s1021 + $0x1c] sm:$0x1]
      %v1066 = vld [vmem:[%s1021 + $0x20] sm:$0xf]
      %v1067 = vld [vmem:[%s1021 + $0x24] sm:$0x1]
      %v1068 = vld [vmem:[%s1021 + $0x28] sm:$0xf]
      %v1069 = vld [vmem:[%s1021 + $0x2c] sm:$0x1]
      %v1070 = vld [vmem:[%s1021 + $0x30] sm:$0xf]
      %v1071 = vld [vmem:[%s1021 + $0x34] sm:$0x1]
      %v1072 = vld [vmem:[%s1021 + $0x38] sm:$0xf]
      %v1073 = vld [vmem:[%s1021 + $0x3c] sm:$0x1]
      %v1075 = vshrl.u32 %v1058, 16
      %v1077 = vrot.slane %v1075, 4
      %v1078 = vshll.u32 %v1058, 16
      %v1080 = vrot.slane %v1078, 5
      %v1081 = vor.u32 %v1077, %v1080
      %v1082 = vrot.slane %v1081, 4
      %v1084 = vshll.u32 %v1059, 16
      %v1086 = vrot.slane %v1084, 5
      %v1087 = vsel %vm533, %v1082, %v1086
      %v1089 = vshrl.u32 %v1060, 16
      %v1091 = vrot.slane %v1089, 4
      %v1092 = vshll.u32 %v1060, 16
      %v1094 = vrot.slane %v1092, 5
      %v1095 = vor.u32 %v1091, %v1094
      %v1096 = vrot.slane %v1095, 4
      %v1098 = vshll.u32 %v1061, 16
      %v1100 = vrot.slane %v1098, 5
      %v1101 = vsel %vm533, %v1096, %v1100
      %v1103 = vshrl.u32 %v1062, 16
      %v1105 = vrot.slane %v1103, 4
      %v1106 = vshll.u32 %v1062, 16
      %v1108 = vrot.slane %v1106, 5
      %v1109 = vor.u32 %v1105, %v1108
      %v1110 = vrot.slane %v1109, 4
      %v1112 = vshll.u32 %v1063, 16
      %v1114 = vrot.slane %v1112, 5
      %v1115 = vsel %vm533, %v1110, %v1114
      %v1117 = vshrl.u32 %v1064, 16
      %v1119 = vrot.slane %v1117, 4
      %v1120 = vshll.u32 %v1064, 16
      %v1122 = vrot.slane %v1120, 5
      %v1123 = vor.u32 %v1119, %v1122
      %v1124 = vrot.slane %v1123, 4
      %v1126 = vshll.u32 %v1065, 16
      %v1128 = vrot.slane %v1126, 5
      %v1129 = vsel %vm533, %v1124, %v1128
      %v1131 = vshrl.u32 %v1066, 16
      %v1133 = vrot.slane %v1131, 4
      %v1134 = vshll.u32 %v1066, 16
      %v1136 = vrot.slane %v1134, 5
      %v1137 = vor.u32 %v1133, %v1136
      %v1138 = vrot.slane %v1137, 4
      %v1140 = vshll.u32 %v1067, 16
      %v1142 = vrot.slane %v1140, 5
      %v1143 = vsel %vm533, %v1138, %v1142
      %v1145 = vshrl.u32 %v1068, 16
      %v1147 = vrot.slane %v1145, 4
      %v1148 = vshll.u32 %v1068, 16
      %v1150 = vrot.slane %v1148, 5
      %v1151 = vor.u32 %v1147, %v1150
      %v1152 = vrot.slane %v1151, 4
      %v1154 = vshll.u32 %v1069, 16
      %v1156 = vrot.slane %v1154, 5
      %v1157 = vsel %vm533, %v1152, %v1156
      %v1159 = vshrl.u32 %v1070, 16
      %v1161 = vrot.slane %v1159, 4
      %v1162 = vshll.u32 %v1070, 16
      %v1164 = vrot.slane %v1162, 5
      %v1165 = vor.u32 %v1161, %v1164
      %v1166 = vrot.slane %v1165, 4
      %v1168 = vshll.u32 %v1071, 16
      %v1170 = vrot.slane %v1168, 5
      %v1171 = vsel %vm533, %v1166, %v1170
      %v1173 = vshrl.u32 %v1072, 16
      %v1175 = vrot.slane %v1173, 4
      %v1176 = vshll.u32 %v1072, 16
      %v1178 = vrot.slane %v1176, 5
      %v1179 = vor.u32 %v1175, %v1178
      %v1180 = vrot.slane %v1179, 4
      %v1182 = vshll.u32 %v1073, 16
      %v1184 = vrot.slane %v1182, 5
      %v1185 = vsel %vm533, %v1180, %v1184
      %v1186 = vunpack.c.l.b16 %v1087
      %v1187 = vunpack.c.l.b16 %v1101
      %v1188 = vunpack.c.l.b16 %v1115
      %v1189 = vunpack.c.l.b16 %v1129
      %v1190 = vunpack.c.l.b16 %v1143
      %v1191 = vunpack.c.l.b16 %v1157
      %v1192 = vunpack.c.l.b16 %v1171
      %v1193 = vunpack.c.l.b16 %v1185
      %v1194 = vpack.c.b16 %v1187, %v1186
      %v1195 = vpack.c.b16 %v1189, %v1188
      %v1196 = vpack.c.b16 %v1191, %v1190
      %v1197 = vpack.c.b16 %v1193, %v1192
      %1202 = vst [vmem:[#allocation3 + $0x38] sm:$0xff] %v1194
      %1203 = vst [vmem:[#allocation3 + $0x80] sm:$0xff] %v1195
      %1204 = vst [vmem:[#allocation3 + $0xc8] sm:$0xff] %v1196
      %1205 = vst [vmem:[#allocation3 + $0x110] sm:$0xff] %v1197
      %v1206 = vld [vmem:[%s1021] sm:$0xe]
      %v1207 = vld [vmem:[%s1021 + $0x4] sm:$0x1]
      %v1208 = vld [vmem:[%s1021 + $0x8] sm:$0xe]
      %v1209 = vld [vmem:[%s1021 + $0xc] sm:$0x1]
      %v1210 = vld [vmem:[%s1021 + $0x10] sm:$0xe]
      %v1211 = vld [vmem:[%s1021 + $0x14] sm:$0x1]
      %v1212 = vld [vmem:[%s1021 + $0x18] sm:$0xe]
      %v1213 = vld [vmem:[%s1021 + $0x1c] sm:$0x1]
      %v1214 = vld [vmem:[%s1021 + $0x20] sm:$0xe]
      %v1215 = vld [vmem:[%s1021 + $0x24] sm:$0x1]
      %v1216 = vld [vmem:[%s1021 + $0x28] sm:$0xe]
      %v1217 = vld [vmem:[%s1021 + $0x2c] sm:$0x1]
      %v1218 = vld [vmem:[%s1021 + $0x30] sm:$0xe]
      %v1219 = vld [vmem:[%s1021 + $0x34] sm:$0x1]
      %v1220 = vld [vmem:[%s1021 + $0x38] sm:$0xe]
      %v1221 = vld [vmem:[%s1021 + $0x3c] sm:$0x1]
      %v1238 = vrot.slane %v1206, 5
      %v1239 = vrot.slane %v1238, 4
      %v1240 = vrot.slane %v1207, 5
      %v1241 = vsel %vm700, %v1239, %v1240
      %v1242 = vrot.slane %v1208, 5
      %v1243 = vrot.slane %v1242, 4
      %v1244 = vrot.slane %v1209, 5
      %v1245 = vsel %vm700, %v1243, %v1244
      %v1246 = vrot.slane %v1210, 5
      %v1247 = vrot.slane %v1246, 4
      %v1248 = vrot.slane %v1211, 5
      %v1249 = vsel %vm700, %v1247, %v1248
      %v1250 = vrot.slane %v1212, 5
      %v1251 = vrot.slane %v1250, 4
      %v1252 = vrot.slane %v1213, 5
      %v1253 = vsel %vm700, %v1251, %v1252
      %v1254 = vrot.slane %v1214, 5
      %v1255 = vrot.slane %v1254, 4
      %v1256 = vrot.slane %v1215, 5
      %v1257 = vsel %vm700, %v1255, %v1256
      %v1258 = vrot.slane %v1216, 5
      %v1259 = vrot.slane %v1258, 4
      %v1260 = vrot.slane %v1217, 5
      %v1261 = vsel %vm700, %v1259, %v1260
      %v1262 = vrot.slane %v1218, 5
      %v1263 = vrot.slane %v1262, 4
      %v1264 = vrot.slane %v1219, 5
      %v1265 = vsel %vm700, %v1263, %v1264
      %v1266 = vrot.slane %v1220, 5
      %v1267 = vrot.slane %v1266, 4
      %v1268 = vrot.slane %v1221, 5
      %v1269 = vsel %vm700, %v1267, %v1268
      %v1270 = vunpack.c.l.b16 %v1241
      %v1271 = vunpack.c.l.b16 %v1245
      %v1272 = vunpack.c.l.b16 %v1249
      %v1273 = vunpack.c.l.b16 %v1253
      %v1274 = vunpack.c.l.b16 %v1257
      %v1275 = vunpack.c.l.b16 %v1261
      %v1276 = vunpack.c.l.b16 %v1265
      %v1277 = vunpack.c.l.b16 %v1269
      %v1278 = vpack.c.b16 %v1271, %v1270
      %v1279 = vpack.c.b16 %v1273, %v1272
      %v1280 = vpack.c.b16 %v1275, %v1274
      %v1281 = vpack.c.b16 %v1277, %v1276
      %1286 = vst [vmem:[#allocation3 + $0x40] sm:$0xff] %v1278
      %1287 = vst [vmem:[#allocation3 + $0x88] sm:$0xff] %v1279
      %1288 = vst [vmem:[#allocation3 + $0xd0] sm:$0xff] %v1280
      %1289 = vst [vmem:[#allocation3 + $0x118] sm:$0xff] %v1281
      %v1290 = vld [vmem:[#allocation3] sm:$0xff]
      %v1291 = vld [vmem:[#allocation3 + $0x8] sm:$0xff]
      %v1292 = vld [vmem:[#allocation3 + $0x10] sm:$0xff]
      %v1293 = vld [vmem:[#allocation3 + $0x18] sm:$0xff]
      %v1294 = vld [vmem:[#allocation3 + $0x20] sm:$0xff]
      %v1295 = vld [vmem:[#allocation3 + $0x28] sm:$0xff]
      %v1296 = vld [vmem:[#allocation3 + $0x30] sm:$0xff]
      %v1297 = vld [vmem:[#allocation3 + $0x38] sm:$0xff]
      %v1298 = vld [vmem:[#allocation3 + $0x40] sm:$0xff]
      %v1299 = vld [vmem:[#allocation3 + $0x48] sm:$0xff]
      %v1300 = vld [vmem:[#allocation3 + $0x50] sm:$0xff]
      %v1301 = vld [vmem:[#allocation3 + $0x58] sm:$0xff]
      %v1302 = vld [vmem:[#allocation3 + $0x60] sm:$0xff]
      %v1303 = vld [vmem:[#allocation3 + $0x68] sm:$0xff]
      %v1304 = vld [vmem:[#allocation3 + $0x70] sm:$0xff]
      %v1305 = vld [vmem:[#allocation3 + $0x78] sm:$0xff]
      %v1306 = vld [vmem:[#allocation3 + $0x80] sm:$0xff]
      %v1307 = vld [vmem:[#allocation3 + $0x88] sm:$0xff]
      %v1308 = vld [vmem:[#allocation3 + $0x90] sm:$0xff]
      %v1309 = vld [vmem:[#allocation3 + $0x98] sm:$0xff]
      %v1310 = vld [vmem:[#allocation3 + $0xa0] sm:$0xff]
      %v1311 = vld [vmem:[#allocation3 + $0xa8] sm:$0xff]
      %v1312 = vld [vmem:[#allocation3 + $0xb0] sm:$0xff]
      %v1313 = vld [vmem:[#allocation3 + $0xb8] sm:$0xff]
      %v1314 = vld [vmem:[#allocation3 + $0xc0] sm:$0xff]
      %v1315 = vld [vmem:[#allocation3 + $0xc8] sm:$0xff]
      %v1316 = vld [vmem:[#allocation3 + $0xd0] sm:$0xff]
      %v1317 = vld [vmem:[#allocation3 + $0xd8] sm:$0xff]
      %v1318 = vld [vmem:[#allocation3 + $0xe0] sm:$0xff]
      %v1319 = vld [vmem:[#allocation3 + $0xe8] sm:$0xff]
      %v1320 = vld [vmem:[#allocation3 + $0xf0] sm:$0xff]
      %v1321 = vld [vmem:[#allocation3 + $0xf8] sm:$0xff]
      %v1322 = vld [vmem:[#allocation3 + $0x100] sm:$0xff]
      %v1323 = vld [vmem:[#allocation3 + $0x108] sm:$0xff]
      %v1324 = vld [vmem:[#allocation3 + $0x110] sm:$0xff]
      %v1325 = vld [vmem:[#allocation3 + $0x118] sm:$0xff]
      %v1326 = vld [vmem:[%s3] sm:$0xf]
      %v1327 = vld [vmem:[%s3 + $0x4] sm:$0xf]
      %v1328 = vld [vmem:[%s3 + $0x8] sm:$0xf]
      %v1329 = vld [vmem:[%s3 + $0xc] sm:$0xf]
      %v1330 = vld [vmem:[%s3 + $0x10] sm:$0xf]
      %v1331 = vld [vmem:[%s3 + $0x14] sm:$0xf]
      %v1332 = vld [vmem:[%s3 + $0x18] sm:$0xf]
      %v1333 = vld [vmem:[%s3 + $0x1c] sm:$0xf]
      %v1334 = vld [vmem:[%s3 + $0x20] sm:$0xf]
      %v1335 = vld [vmem:[%s3 + $0x24] sm:$0xf]
      %v1336 = vld [vmem:[%s3 + $0x28] sm:$0xf]
      %v1337 = vld [vmem:[%s3 + $0x2c] sm:$0xf]
      %v1338 = vld [vmem:[%s3 + $0x30] sm:$0xf]
      %v1339 = vld [vmem:[%s3 + $0x34] sm:$0xf]
      %v1340 = vld [vmem:[%s3 + $0x38] sm:$0xf]
      %v1341 = vld [vmem:[%s3 + $0x3c] sm:$0xf]
      %v1342 = vld [vmem:[%s3 + $0x40] sm:$0xf]
      %v1343 = vld [vmem:[%s3 + $0x44] sm:$0xf]
      %v1344 = vld [vmem:[%s3 + $0x48] sm:$0xf]
      %v1345 = vld [vmem:[%s3 + $0x4c] sm:$0xf]
      %v1346 = vld [vmem:[%s3 + $0x50] sm:$0xf]
      %v1347 = vld [vmem:[%s3 + $0x54] sm:$0xf]
      %v1348 = vld [vmem:[%s3 + $0x58] sm:$0xf]
      %v1349 = vld [vmem:[%s3 + $0x5c] sm:$0xf]
      %v1350 = vld [vmem:[%s3 + $0x60] sm:$0xf]
      %v1351 = vld [vmem:[%s3 + $0x64] sm:$0xf]
      %v1352 = vld [vmem:[%s3 + $0x68] sm:$0xf]
      %v1353 = vld [vmem:[%s3 + $0x6c] sm:$0xf]
      %v1354 = vld [vmem:[%s3 + $0x70] sm:$0xf]
      %v1355 = vld [vmem:[%s3 + $0x74] sm:$0xf]
      %v1356 = vld [vmem:[%s3 + $0x78] sm:$0xf]
      %v1357 = vld [vmem:[%s3 + $0x7c] sm:$0xf]
      %v1358 = vld [vmem:[%s3 + $0x80] sm:$0xf]
      %v1359 = vld [vmem:[%s3 + $0x84] sm:$0xf]
      %v1360 = vld [vmem:[%s3 + $0x88] sm:$0xf]
      %v1361 = vld [vmem:[%s3 + $0x8c] sm:$0xf]
      %v1362 = vld [vmem:[%s3 + $0x90] sm:$0xf]
      %v1363 = vld [vmem:[%s3 + $0x94] sm:$0xf]
      %v1364 = vld [vmem:[%s3 + $0x98] sm:$0xf]
      %v1365 = vld [vmem:[%s3 + $0x9c] sm:$0xf]
      %v1366 = vld [vmem:[%s3 + $0xa0] sm:$0xf]
      %v1367 = vld [vmem:[%s3 + $0xa4] sm:$0xf]
      %v1368 = vld [vmem:[%s3 + $0xa8] sm:$0xf]
      %v1369 = vld [vmem:[%s3 + $0xac] sm:$0xf]
      %v1370 = vld [vmem:[%s3 + $0xb0] sm:$0xf]
      %v1371 = vld [vmem:[%s3 + $0xb4] sm:$0xf]
      %v1372 = vld [vmem:[%s3 + $0xb8] sm:$0xf]
      %v1373 = vld [vmem:[%s3 + $0xbc] sm:$0xf]
      %v1374 = vld [vmem:[%s3 + $0xc0] sm:$0xf]
      %v1375 = vld [vmem:[%s3 + $0xc4] sm:$0xf]
      %v1376 = vld [vmem:[%s3 + $0xc8] sm:$0xf]
      %v1377 = vld [vmem:[%s3 + $0xcc] sm:$0xf]
      %v1378 = vld [vmem:[%s3 + $0xd0] sm:$0xf]
      %v1379 = vld [vmem:[%s3 + $0xd4] sm:$0xf]
      %v1380 = vld [vmem:[%s3 + $0xd8] sm:$0xf]
      %v1381 = vld [vmem:[%s3 + $0xdc] sm:$0xf]
      %v1382 = vld [vmem:[%s3 + $0xe0] sm:$0xf]
      %v1383 = vld [vmem:[%s3 + $0xe4] sm:$0xf]
      %v1384 = vld [vmem:[%s3 + $0xe8] sm:$0xf]
      %v1385 = vld [vmem:[%s3 + $0xec] sm:$0xf]
      %v1386 = vld [vmem:[%s3 + $0xf0] sm:$0xf]
      %v1387 = vld [vmem:[%s3 + $0xf4] sm:$0xf]
      %v1388 = vld [vmem:[%s3 + $0xf8] sm:$0xf]
      %v1389 = vld [vmem:[%s3 + $0xfc] sm:$0xf]
      %v1390 = vld [vmem:[%s3 + $0x100] sm:$0xf]
      %v1391 = vld [vmem:[%s3 + $0x104] sm:$0xf]
      %v1392 = vld [vmem:[%s3 + $0x108] sm:$0xf]
      %v1393 = vld [vmem:[%s3 + $0x10c] sm:$0xf]
      %v1394 = vld [vmem:[%s3 + $0x110] sm:$0xf]
      %v1395 = vld [vmem:[%s3 + $0x114] sm:$0xf]
      %v1396 = vld [vmem:[%s3 + $0x118] sm:$0xf]
      %v1397 = vld [vmem:[%s3 + $0x11c] sm:$0xf]
      %v1398 = vld [vmem:[%s3 + $0x120] sm:$0xf]
      %v1399 = vld [vmem:[%s3 + $0x124] sm:$0xf]
      %v1400 = vld [vmem:[%s3 + $0x128] sm:$0xf]
      %v1401 = vld [vmem:[%s3 + $0x12c] sm:$0xf]
      %v1402 = vld [vmem:[%s3 + $0x130] sm:$0xf]
      %v1403 = vld [vmem:[%s3 + $0x134] sm:$0xf]
      %v1404 = vld [vmem:[%s3 + $0x138] sm:$0xf]
      %v1405 = vld [vmem:[%s3 + $0x13c] sm:$0xf]
      %v1406 = vld [vmem:[%s3 + $0x140] sm:$0xf]
      %v1407 = vld [vmem:[%s3 + $0x144] sm:$0xf]
      %v1408 = vld [vmem:[%s3 + $0x148] sm:$0xf]
      %v1409 = vld [vmem:[%s3 + $0x14c] sm:$0xf]
      %v1410 = vld [vmem:[%s3 + $0x150] sm:$0xf]
      %v1411 = vld [vmem:[%s3 + $0x154] sm:$0xf]
      %v1412 = vld [vmem:[%s3 + $0x158] sm:$0xf]
      %v1413 = vld [vmem:[%s3 + $0x15c] sm:$0xf]
      %v1414 = vld [vmem:[%s3 + $0x160] sm:$0xf]
      %v1415 = vld [vmem:[%s3 + $0x164] sm:$0xf]
      %v1416 = vld [vmem:[%s3 + $0x168] sm:$0xf]
      %v1417 = vld [vmem:[%s3 + $0x16c] sm:$0xf]
      %v1418 = vld [vmem:[%s3 + $0x170] sm:$0xf]
      %v1419 = vld [vmem:[%s3 + $0x174] sm:$0xf]
      %v1420 = vld [vmem:[%s3 + $0x178] sm:$0xf]
      %v1421 = vld [vmem:[%s3 + $0x17c] sm:$0xf]
      %v1422 = vld [vmem:[%s3 + $0x180] sm:$0xf]
      %v1423 = vld [vmem:[%s3 + $0x184] sm:$0xf]
      %v1424 = vld [vmem:[%s3 + $0x188] sm:$0xf]
      %v1425 = vld [vmem:[%s3 + $0x18c] sm:$0xf]
      %v1426 = vld [vmem:[%s3 + $0x190] sm:$0xf]
      %v1427 = vld [vmem:[%s3 + $0x194] sm:$0xf]
      %v1428 = vld [vmem:[%s3 + $0x198] sm:$0xf]
      %v1429 = vld [vmem:[%s3 + $0x19c] sm:$0xf]
      %v1430 = vld [vmem:[%s3 + $0x1a0] sm:$0xf]
      %v1431 = vld [vmem:[%s3 + $0x1a4] sm:$0xf]
      %v1432 = vld [vmem:[%s3 + $0x1a8] sm:$0xf]
      %v1433 = vld [vmem:[%s3 + $0x1ac] sm:$0xf]
      %v1434 = vld [vmem:[%s3 + $0x1b0] sm:$0xf]
      %v1435 = vld [vmem:[%s3 + $0x1b4] sm:$0xf]
      %v1436 = vld [vmem:[%s3 + $0x1b8] sm:$0xf]
      %v1437 = vld [vmem:[%s3 + $0x1bc] sm:$0xf]
      %v1438 = vld [vmem:[%s3 + $0x1c0] sm:$0xf]
      %v1439 = vld [vmem:[%s3 + $0x1c4] sm:$0xf]
      %v1440 = vld [vmem:[%s3 + $0x1c8] sm:$0xf]
      %v1441 = vld [vmem:[%s3 + $0x1cc] sm:$0xf]
      %v1442 = vld [vmem:[%s3 + $0x1d0] sm:$0xf]
      %v1443 = vld [vmem:[%s3 + $0x1d4] sm:$0xf]
      %v1444 = vld [vmem:[%s3 + $0x1d8] sm:$0xf]
      %v1445 = vld [vmem:[%s3 + $0x1dc] sm:$0xf]
      %v1446 = vld [vmem:[%s3 + $0x1e0] sm:$0xf]
      %v1447 = vld [vmem:[%s3 + $0x1e4] sm:$0xf]
      %v1448 = vld [vmem:[%s3 + $0x1e8] sm:$0xf]
      %v1449 = vld [vmem:[%s3 + $0x1ec] sm:$0xf]
      %v1450 = vld [vmem:[%s3 + $0x1f0] sm:$0xf]
      %v1451 = vld [vmem:[%s3 + $0x1f4] sm:$0xf]
      %v1452 = vld [vmem:[%s3 + $0x1f8] sm:$0xf]
      %v1453 = vld [vmem:[%s3 + $0x1fc] sm:$0xf]
      %v1454 = vld [vmem:[%s3 + $0x200] sm:$0xf]
      %v1455 = vld [vmem:[%s3 + $0x204] sm:$0xf]
      %v1456 = vld [vmem:[%s3 + $0x208] sm:$0xf]
      %v1457 = vld [vmem:[%s3 + $0x20c] sm:$0xf]
      %v1458 = vld [vmem:[%s3 + $0x210] sm:$0xf]
      %v1459 = vld [vmem:[%s3 + $0x214] sm:$0xf]
      %v1460 = vld [vmem:[%s3 + $0x218] sm:$0xf]
      %v1461 = vld [vmem:[%s3 + $0x21c] sm:$0xf]
      %v1462 = vld [vmem:[%s3 + $0x220] sm:$0xf]
      %v1463 = vld [vmem:[%s3 + $0x224] sm:$0xf]
      %v1464 = vld [vmem:[%s3 + $0x228] sm:$0xf]
      %v1465 = vld [vmem:[%s3 + $0x22c] sm:$0xf]
      %v1466 = vld [vmem:[%s3 + $0x230] sm:$0xf]
      %v1467 = vld [vmem:[%s3 + $0x234] sm:$0xf]
      %v1468 = vld [vmem:[%s3 + $0x238] sm:$0xf]
      %v1469 = vld [vmem:[%s3 + $0x23c] sm:$0xf]
      %v1614 = vunpack.c.l.b16 %v1326
      %v1615 = vunpack.c.l.b16 %v1327
      %v1616 = vunpack.c.l.b16 %v1328
      %v1617 = vunpack.c.l.b16 %v1329
      %v1618 = vunpack.c.l.b16 %v1330
      %v1619 = vunpack.c.l.b16 %v1331
      %v1620 = vunpack.c.l.b16 %v1332
      %v1621 = vunpack.c.l.b16 %v1333
      %v1622 = vunpack.c.l.b16 %v1334
      %v1623 = vunpack.c.l.b16 %v1335
      %v1624 = vunpack.c.l.b16 %v1336
      %v1625 = vunpack.c.l.b16 %v1337
      %v1626 = vunpack.c.l.b16 %v1338
      %v1627 = vunpack.c.l.b16 %v1339
      %v1628 = vunpack.c.l.b16 %v1340
      %v1629 = vunpack.c.l.b16 %v1341
      %v1630 = vunpack.c.l.b16 %v1342
      %v1631 = vunpack.c.l.b16 %v1343
      %v1632 = vunpack.c.l.b16 %v1344
      %v1633 = vunpack.c.l.b16 %v1345
      %v1634 = vunpack.c.l.b16 %v1346
      %v1635 = vunpack.c.l.b16 %v1347
      %v1636 = vunpack.c.l.b16 %v1348
      %v1637 = vunpack.c.l.b16 %v1349
      %v1638 = vunpack.c.l.b16 %v1350
      %v1639 = vunpack.c.l.b16 %v1351
      %v1640 = vunpack.c.l.b16 %v1352
      %v1641 = vunpack.c.l.b16 %v1353
      %v1642 = vunpack.c.l.b16 %v1354
      %v1643 = vunpack.c.l.b16 %v1355
      %v1644 = vunpack.c.l.b16 %v1356
      %v1645 = vunpack.c.l.b16 %v1357
      %v1646 = vunpack.c.l.b16 %v1358
      %v1647 = vunpack.c.l.b16 %v1359
      %v1648 = vunpack.c.l.b16 %v1360
      %v1649 = vunpack.c.l.b16 %v1361
      %v1650 = vunpack.c.l.b16 %v1362
      %v1651 = vunpack.c.l.b16 %v1363
      %v1652 = vunpack.c.l.b16 %v1364
      %v1653 = vunpack.c.l.b16 %v1365
      %v1654 = vunpack.c.l.b16 %v1366
      %v1655 = vunpack.c.l.b16 %v1367
      %v1656 = vunpack.c.l.b16 %v1368
      %v1657 = vunpack.c.l.b16 %v1369
      %v1658 = vunpack.c.l.b16 %v1370
      %v1659 = vunpack.c.l.b16 %v1371
      %v1660 = vunpack.c.l.b16 %v1372
      %v1661 = vunpack.c.l.b16 %v1373
      %v1662 = vunpack.c.l.b16 %v1374
      %v1663 = vunpack.c.l.b16 %v1375
      %v1664 = vunpack.c.l.b16 %v1376
      %v1665 = vunpack.c.l.b16 %v1377
      %v1666 = vunpack.c.l.b16 %v1378
      %v1667 = vunpack.c.l.b16 %v1379
      %v1668 = vunpack.c.l.b16 %v1380
      %v1669 = vunpack.c.l.b16 %v1381
      %v1670 = vunpack.c.l.b16 %v1382
      %v1671 = vunpack.c.l.b16 %v1383
      %v1672 = vunpack.c.l.b16 %v1384
      %v1673 = vunpack.c.l.b16 %v1385
      %v1674 = vunpack.c.l.b16 %v1386
      %v1675 = vunpack.c.l.b16 %v1387
      %v1676 = vunpack.c.l.b16 %v1388
      %v1677 = vunpack.c.l.b16 %v1389
      %v1678 = vunpack.c.l.b16 %v1390
      %v1679 = vunpack.c.l.b16 %v1391
      %v1680 = vunpack.c.l.b16 %v1392
      %v1681 = vunpack.c.l.b16 %v1393
      %v1682 = vunpack.c.l.b16 %v1394
      %v1683 = vunpack.c.l.b16 %v1395
      %v1684 = vunpack.c.l.b16 %v1396
      %v1685 = vunpack.c.l.b16 %v1397
      %v1686 = vunpack.c.l.b16 %v1398
      %v1687 = vunpack.c.l.b16 %v1399
      %v1688 = vunpack.c.l.b16 %v1400
      %v1689 = vunpack.c.l.b16 %v1401
      %v1690 = vunpack.c.l.b16 %v1402
      %v1691 = vunpack.c.l.b16 %v1403
      %v1692 = vunpack.c.l.b16 %v1404
      %v1693 = vunpack.c.l.b16 %v1405
      %v1694 = vunpack.c.l.b16 %v1406
      %v1695 = vunpack.c.l.b16 %v1407
      %v1696 = vunpack.c.l.b16 %v1408
      %v1697 = vunpack.c.l.b16 %v1409
      %v1698 = vunpack.c.l.b16 %v1410
      %v1699 = vunpack.c.l.b16 %v1411
      %v1700 = vunpack.c.l.b16 %v1412
      %v1701 = vunpack.c.l.b16 %v1413
      %v1702 = vunpack.c.l.b16 %v1414
      %v1703 = vunpack.c.l.b16 %v1415
      %v1704 = vunpack.c.l.b16 %v1416
      %v1705 = vunpack.c.l.b16 %v1417
      %v1706 = vunpack.c.l.b16 %v1418
      %v1707 = vunpack.c.l.b16 %v1419
      %v1708 = vunpack.c.l.b16 %v1420
      %v1709 = vunpack.c.l.b16 %v1421
      %v1710 = vunpack.c.l.b16 %v1422
      %v1711 = vunpack.c.l.b16 %v1423
      %v1712 = vunpack.c.l.b16 %v1424
      %v1713 = vunpack.c.l.b16 %v1425
      %v1714 = vunpack.c.l.b16 %v1426
      %v1715 = vunpack.c.l.b16 %v1427
      %v1716 = vunpack.c.l.b16 %v1428
      %v1717 = vunpack.c.l.b16 %v1429
      %v1718 = vunpack.c.l.b16 %v1430
      %v1719 = vunpack.c.l.b16 %v1431
      %v1720 = vunpack.c.l.b16 %v1432
      %v1721 = vunpack.c.l.b16 %v1433
      %v1722 = vunpack.c.l.b16 %v1434
      %v1723 = vunpack.c.l.b16 %v1435
      %v1724 = vunpack.c.l.b16 %v1436
      %v1725 = vunpack.c.l.b16 %v1437
      %v1726 = vunpack.c.l.b16 %v1438
      %v1727 = vunpack.c.l.b16 %v1439
      %v1728 = vunpack.c.l.b16 %v1440
      %v1729 = vunpack.c.l.b16 %v1441
      %v1730 = vunpack.c.l.b16 %v1442
      %v1731 = vunpack.c.l.b16 %v1443
      %v1732 = vunpack.c.l.b16 %v1444
      %v1733 = vunpack.c.l.b16 %v1445
      %v1734 = vunpack.c.l.b16 %v1446
      %v1735 = vunpack.c.l.b16 %v1447
      %v1736 = vunpack.c.l.b16 %v1448
      %v1737 = vunpack.c.l.b16 %v1449
      %v1738 = vunpack.c.l.b16 %v1450
      %v1739 = vunpack.c.l.b16 %v1451
      %v1740 = vunpack.c.l.b16 %v1452
      %v1741 = vunpack.c.l.b16 %v1453
      %v1742 = vunpack.c.l.b16 %v1454
      %v1743 = vunpack.c.l.b16 %v1455
      %v1744 = vunpack.c.l.b16 %v1456
      %v1745 = vunpack.c.l.b16 %v1457
      %v1746 = vunpack.c.l.b16 %v1458
      %v1747 = vunpack.c.l.b16 %v1459
      %v1748 = vunpack.c.l.b16 %v1460
      %v1749 = vunpack.c.l.b16 %v1461
      %v1750 = vunpack.c.l.b16 %v1462
      %v1751 = vunpack.c.l.b16 %v1463
      %v1752 = vunpack.c.l.b16 %v1464
      %v1753 = vunpack.c.l.b16 %v1465
      %v1754 = vunpack.c.l.b16 %v1466
      %v1755 = vunpack.c.l.b16 %v1467
      %v1756 = vunpack.c.l.b16 %v1468
      %v1757 = vunpack.c.l.b16 %v1469
      %v1758 = vpack.c.b16 %v1615, %v1614
      %v1759 = vpack.c.b16 %v1617, %v1616
      %v1760 = vpack.c.b16 %v1619, %v1618
      %v1761 = vpack.c.b16 %v1621, %v1620
      %v1762 = vpack.c.b16 %v1623, %v1622
      %v1763 = vpack.c.b16 %v1625, %v1624
      %v1764 = vpack.c.b16 %v1627, %v1626
      %v1765 = vpack.c.b16 %v1629, %v1628
      %v1766 = vpack.c.b16 %v1631, %v1630
      %v1767 = vpack.c.b16 %v1633, %v1632
      %v1768 = vpack.c.b16 %v1635, %v1634
      %v1769 = vpack.c.b16 %v1637, %v1636
      %v1770 = vpack.c.b16 %v1639, %v1638
      %v1771 = vpack.c.b16 %v1641, %v1640
      %v1772 = vpack.c.b16 %v1643, %v1642
      %v1773 = vpack.c.b16 %v1645, %v1644
      %v1774 = vpack.c.b16 %v1647, %v1646
      %v1775 = vpack.c.b16 %v1649, %v1648
      %v1776 = vpack.c.b16 %v1651, %v1650
      %v1777 = vpack.c.b16 %v1653, %v1652
      %v1778 = vpack.c.b16 %v1655, %v1654
      %v1779 = vpack.c.b16 %v1657, %v1656
      %v1780 = vpack.c.b16 %v1659, %v1658
      %v1781 = vpack.c.b16 %v1661, %v1660
      %v1782 = vpack.c.b16 %v1663, %v1662
      %v1783 = vpack.c.b16 %v1665, %v1664
      %v1784 = vpack.c.b16 %v1667, %v1666
      %v1785 = vpack.c.b16 %v1669, %v1668
      %v1786 = vpack.c.b16 %v1671, %v1670
      %v1787 = vpack.c.b16 %v1673, %v1672
      %v1788 = vpack.c.b16 %v1675, %v1674
      %v1789 = vpack.c.b16 %v1677, %v1676
      %v1790 = vpack.c.b16 %v1679, %v1678
      %v1791 = vpack.c.b16 %v1681, %v1680
      %v1792 = vpack.c.b16 %v1683, %v1682
      %v1793 = vpack.c.b16 %v1685, %v1684
      %v1794 = vpack.c.b16 %v1687, %v1686
      %v1795 = vpack.c.b16 %v1689, %v1688
      %v1796 = vpack.c.b16 %v1691, %v1690
      %v1797 = vpack.c.b16 %v1693, %v1692
      %v1798 = vpack.c.b16 %v1695, %v1694
      %v1799 = vpack.c.b16 %v1697, %v1696
      %v1800 = vpack.c.b16 %v1699, %v1698
      %v1801 = vpack.c.b16 %v1701, %v1700
      %v1802 = vpack.c.b16 %v1703, %v1702
      %v1803 = vpack.c.b16 %v1705, %v1704
      %v1804 = vpack.c.b16 %v1707, %v1706
      %v1805 = vpack.c.b16 %v1709, %v1708
      %v1806 = vpack.c.b16 %v1711, %v1710
      %v1807 = vpack.c.b16 %v1713, %v1712
      %v1808 = vpack.c.b16 %v1715, %v1714
      %v1809 = vpack.c.b16 %v1717, %v1716
      %v1810 = vpack.c.b16 %v1719, %v1718
      %v1811 = vpack.c.b16 %v1721, %v1720
      %v1812 = vpack.c.b16 %v1723, %v1722
      %v1813 = vpack.c.b16 %v1725, %v1724
      %v1814 = vpack.c.b16 %v1727, %v1726
      %v1815 = vpack.c.b16 %v1729, %v1728
      %v1816 = vpack.c.b16 %v1731, %v1730
      %v1817 = vpack.c.b16 %v1733, %v1732
      %v1818 = vpack.c.b16 %v1735, %v1734
      %v1819 = vpack.c.b16 %v1737, %v1736
      %v1820 = vpack.c.b16 %v1739, %v1738
      %v1821 = vpack.c.b16 %v1741, %v1740
      %v1822 = vpack.c.b16 %v1743, %v1742
      %v1823 = vpack.c.b16 %v1745, %v1744
      %v1824 = vpack.c.b16 %v1747, %v1746
      %v1825 = vpack.c.b16 %v1749, %v1748
      %v1826 = vpack.c.b16 %v1751, %v1750
      %v1827 = vpack.c.b16 %v1753, %v1752
      %v1828 = vpack.c.b16 %v1755, %v1754
      %v1829 = vpack.c.b16 %v1757, %v1756
      %1902 = vmatprep.subr.bf16.mxu0 0
      %1903 = vmatpush1.bf16.msra.mxu0 %v1758
      %1904 = vmatprep.subr.bf16.mxu0 0
      %1905 = vmatpush1.bf16.msra.mxu0 %v1759
      %1906 = vmatprep.subr.bf16.mxu0 0
      %1907 = vmatpush1.bf16.msra.mxu0 %v1760
      %1908 = vmatprep.subr.bf16.mxu0 0
      %1909 = vmatpush1.bf16.msra.mxu0 %v1761
      %1910 = vmatprep.subr.bf16.mxu0 0
      %1911 = vmatpush1.bf16.msra.mxu0 %v1762
      %1912 = vmatprep.subr.bf16.mxu0 0
      %1913 = vmatpush1.bf16.msra.mxu0 %v1763
      %1914 = vmatprep.subr.bf16.mxu0 0
      %1915 = vmatpush1.bf16.msra.mxu0 %v1764
      %1916 = vmatprep.subr.bf16.mxu0 0
      %1917 = vmatpush1.bf16.msra.mxu0 %v1765
      %1918 = vmatprep.subr.bf16.mxu0 0
      %1919 = vmatpush1.bf16.msra.mxu0 %v1766
      %1920 = vmatprep.subr.bf16.mxu0 0
      %1921 = vmatpush1.bf16.msra.mxu0 %v1767
      %1922 = vmatprep.subr.bf16.mxu0 0
      %1923 = vmatpush1.bf16.msra.mxu0 %v1768
      %1924 = vmatprep.subr.bf16.mxu0 0
      %1925 = vmatpush1.bf16.msra.mxu0 %v1769
      %1926 = vmatprep.subr.bf16.mxu0 0
      %1927 = vmatpush1.bf16.msra.mxu0 %v1770
      %1928 = vmatprep.subr.bf16.mxu0 0
      %1929 = vmatpush1.bf16.msra.mxu0 %v1771
      %1930 = vmatprep.subr.bf16.mxu0 0
      %1931 = vmatpush1.bf16.msra.mxu0 %v1772
      %1932 = vmatprep.subr.bf16.mxu0 0
      %1933 = vmatpush1.bf16.msra.mxu0 %v1773
      %1934 = vmatprep.mubr.bf16.mxu0 %v1291
      %1935 = vmatmul.mubr.bf16.gmra.mrb[0].mxu0 %v1290
      %v1936 = vpop.f32.mrb[0].mxu0
      %v1937 = vadd.f32 0.0, %v1936
      %v1938 = vpop.f32.mrb[0].mxu0
      %v1939 = vpop.f32.mrb[0].mxu0
      %v1940 = vadd.f32 0.0, %v1939
      %v1941 = vpop.f32.mrb[0].mxu0
      %1942 = vmatprep.mubr.bf16.mxu0 %v1300
      %1943 = vmatmul.mubr.bf16.gmra.mrb[0].mxu0 %v1299
      %v1944 = vpop.f32.mrb[0].mxu0
      %v1945 = vadd.f32 0.0, %v1944
      %v1946 = vpop.f32.mrb[0].mxu0
      %v1947 = vpop.f32.mrb[0].mxu0
      %v1948 = vadd.f32 0.0, %v1947
      %v1949 = vpop.f32.mrb[0].mxu0
      %1950 = vmatprep.mubr.bf16.mxu0 %v1309
      %1951 = vmatmul.mubr.bf16.gmra.mrb[0].mxu0 %v1308
      %v1952 = vpop.f32.mrb[0].mxu0
      %v1953 = vadd.f32 0.0, %v1952
      %v1954 = vpop.f32.mrb[0].mxu0
      %v1955 = vpop.f32.mrb[0].mxu0
      %v1956 = vadd.f32 0.0, %v1955
      %v1957 = vpop.f32.mrb[0].mxu0
      %1958 = vmatprep.mubr.bf16.mxu0 %v1318
      %1959 = vmatmul.mubr.bf16.gmra.mrb[0].mxu0 %v1317
      %v1960 = vpop.f32.mrb[0].mxu0
      %v1961 = vadd.f32 0.0, %v1960
      %v1962 = vpop.f32.mrb[0].mxu0
      %v1963 = vpop.f32.mrb[0].mxu0
      %v1964 = vadd.f32 0.0, %v1963
      %v1965 = vpop.f32.mrb[0].mxu0
      %1966 = vdwg.mxu0
      %1967 = vmatprep.subr.bf16.mxu0 0
      %1968 = vmatpush1.bf16.msra.mxu0 %v1774
      %1969 = vmatprep.subr.bf16.mxu0 0
      %1970 = vmatpush1.bf16.msra.mxu0 %v1775
      %1971 = vmatprep.subr.bf16.mxu0 0
      %1972 = vmatpush1.bf16.msra.mxu0 %v1776
      %1973 = vmatprep.subr.bf16.mxu0 0
      %1974 = vmatpush1.bf16.msra.mxu0 %v1777
      %1975 = vmatprep.subr.bf16.mxu0 0
      %1976 = vmatpush1.bf16.msra.mxu0 %v1778
      %1977 = vmatprep.subr.bf16.mxu0 0
      %1978 = vmatpush1.bf16.msra.mxu0 %v1779
      %1979 = vmatprep.subr.bf16.mxu0 0
      %1980 = vmatpush1.bf16.msra.mxu0 %v1780
      %1981 = vmatprep.subr.bf16.mxu0 0
      %1982 = vmatpush1.bf16.msra.mxu0 %v1781
      %1983 = vmatprep.subr.bf16.mxu0 0
      %1984 = vmatpush1.bf16.msra.mxu0 %v1782
      %1985 = vmatprep.subr.bf16.mxu0 0
      %1986 = vmatpush1.bf16.msra.mxu0 %v1783
      %1987 = vmatprep.subr.bf16.mxu0 0
      %1988 = vmatpush1.bf16.msra.mxu0 %v1784
      %1989 = vmatprep.subr.bf16.mxu0 0
      %1990 = vmatpush1.bf16.msra.mxu0 %v1785
      %1991 = vmatprep.subr.bf16.mxu0 0
      %1992 = vmatpush1.bf16.msra.mxu0 %v1786
      %1993 = vmatprep.subr.bf16.mxu0 0
      %1994 = vmatpush1.bf16.msra.mxu0 %v1787
      %1995 = vmatprep.subr.bf16.mxu0 0
      %1996 = vmatpush1.bf16.msra.mxu0 %v1788
      %1997 = vmatprep.subr.bf16.mxu0 0
      %1998 = vmatpush1.bf16.msra.mxu0 %v1789
      %1999 = vmatprep.mubr.bf16.mxu0 %v1293
      %2000 = vmatmul.mubr.bf16.gmra.mrb[0].mxu0 %v1292
      %v2001 = vpop.f32.mrb[0].mxu0
      %v2002 = vadd.f32 %v1937, %v2001
      %v2003 = vpop.f32.mrb[0].mxu0
      %v2004 = vpop.f32.mrb[0].mxu0
      %v2005 = vadd.f32 %v1940, %v2004
      %v2006 = vpop.f32.mrb[0].mxu0
      %2007 = vmatprep.mubr.bf16.mxu0 %v1302
      %2008 = vmatmul.mubr.bf16.gmra.mrb[0].mxu0 %v1301
      %v2009 = vpop.f32.mrb[0].mxu0
      %v2010 = vadd.f32 %v1945, %v2009
      %v2011 = vpop.f32.mrb[0].mxu0
      %v2012 = vpop.f32.mrb[0].mxu0
      %v2013 = vadd.f32 %v1948, %v2012
      %v2014 = vpop.f32.mrb[0].mxu0
      %2015 = vmatprep.mubr.bf16.mxu0 %v1311
      %2016 = vmatmul.mubr.bf16.gmra.mrb[0].mxu0 %v1310
      %v2017 = vpop.f32.mrb[0].mxu0
      %v2018 = vadd.f32 %v1953, %v2017
      %v2019 = vpop.f32.mrb[0].mxu0
      %v2020 = vpop.f32.mrb[0].mxu0
      %v2021 = vadd.f32 %v1956, %v2020
      %v2022 = vpop.f32.mrb[0].mxu0
      %2023 = vmatprep.mubr.bf16.mxu0 %v1320
      %2024 = vmatmul.mubr.bf16.gmra.mrb[0].mxu0 %v1319
      %v2025 = vpop.f32.mrb[0].mxu0
      %v2026 = vadd.f32 %v1961, %v2025
      %v2027 = vpop.f32.mrb[0].mxu0
      %v2028 = vpop.f32.mrb[0].mxu0
      %v2029 = vadd.f32 %v1964, %v2028
      %v2030 = vpop.f32.mrb[0].mxu0
      %2031 = vdwg.mxu0
      %2032 = vmatprep.subr.bf16.mxu0 0
      %2033 = vmatpush1.bf16.msra.mxu0 %v1790
      %2034 = vmatprep.subr.bf16.mxu0 0
      %2035 = vmatpush1.bf16.msra.mxu0 %v1791
      %2036 = vmatprep.subr.bf16.mxu0 0
      %2037 = vmatpush1.bf16.msra.mxu0 %v1792
      %2038 = vmatprep.subr.bf16.mxu0 0
      %2039 = vmatpush1.bf16.msra.mxu0 %v1793
      %2040 = vmatprep.subr.bf16.mxu0 0
      %2041 = vmatpush1.bf16.msra.mxu0 %v1794
      %2042 = vmatprep.subr.bf16.mxu0 0
      %2043 = vmatpush1.bf16.msra.mxu0 %v1795
      %2044 = vmatprep.subr.bf16.mxu0 0
      %2045 = vmatpush1.bf16.msra.mxu0 %v1796
      %2046 = vmatprep.subr.bf16.mxu0 0
      %2047 = vmatpush1.bf16.msra.mxu0 %v1797
      %2048 = vmatprep.subr.bf16.mxu0 0
      %2049 = vmatpush1.bf16.msra.mxu0 %v1798
      %2050 = vmatprep.subr.bf16.mxu0 0
      %2051 = vmatpush1.bf16.msra.mxu0 %v1799
      %2052 = vmatprep.subr.bf16.mxu0 0
      %2053 = vmatpush1.bf16.msra.mxu0 %v1800
      %2054 = vmatprep.subr.bf16.mxu0 0
      %2055 = vmatpush1.bf16.msra.mxu0 %v1801
      %2056 = vmatprep.subr.bf16.mxu0 0
      %2057 = vmatpush1.bf16.msra.mxu0 %v1802
      %2058 = vmatprep.subr.bf16.mxu0 0
      %2059 = vmatpush1.bf16.msra.mxu0 %v1803
      %2060 = vmatprep.subr.bf16.mxu0 0
      %2061 = vmatpush1.bf16.msra.mxu0 %v1804
      %2062 = vmatprep.subr.bf16.mxu0 0
      %2063 = vmatpush1.bf16.msra.mxu0 %v1805
      %2064 = vmatprep.mubr.bf16.mxu0 %v1295
      %2065 = vmatmul.mubr.bf16.gmra.mrb[0].mxu0 %v1294
      %v2066 = vpop.f32.mrb[0].mxu0
      %v2067 = vadd.f32 %v2002, %v2066
      %v2068 = vpop.f32.mrb[0].mxu0
      %v2069 = vpop.f32.mrb[0].mxu0
      %v2070 = vadd.f32 %v2005, %v2069
      %v2071 = vpop.f32.mrb[0].mxu0
      %2072 = vmatprep.mubr.bf16.mxu0 %v1304
      %2073 = vmatmul.mubr.bf16.gmra.mrb[0].mxu0 %v1303
      %v2074 = vpop.f32.mrb[0].mxu0
      %v2075 = vadd.f32 %v2010, %v2074
      %v2076 = vpop.f32.mrb[0].mxu0
      %v2077 = vpop.f32.mrb[0].mxu0
      %v2078 = vadd.f32 %v2013, %v2077
      %v2079 = vpop.f32.mrb[0].mxu0
      %2080 = vmatprep.mubr.bf16.mxu0 %v1313
      %2081 = vmatmul.mubr.bf16.gmra.mrb[0].mxu0 %v1312
      %v2082 = vpop.f32.mrb[0].mxu0
      %v2083 = vadd.f32 %v2018, %v2082
      %v2084 = vpop.f32.mrb[0].mxu0
      %v2085 = vpop.f32.mrb[0].mxu0
      %v2086 = vadd.f32 %v2021, %v2085
      %v2087 = vpop.f32.mrb[0].mxu0
      %2088 = vmatprep.mubr.bf16.mxu0 %v1322
      %2089 = vmatmul.mubr.bf16.gmra.mrb[0].mxu0 %v1321
      %v2090 = vpop.f32.mrb[0].mxu0
      %v2091 = vadd.f32 %v2026, %v2090
      %v2092 = vpop.f32.mrb[0].mxu0
      %v2093 = vpop.f32.mrb[0].mxu0
      %v2094 = vadd.f32 %v2029, %v2093
      %v2095 = vpop.f32.mrb[0].mxu0
      %2096 = vdwg.mxu0
      %2097 = vmatprep.subr.bf16.mxu0 0
      %2098 = vmatpush1.bf16.msra.mxu0 %v1806
      %2099 = vmatprep.subr.bf16.mxu0 0
      %2100 = vmatpush1.bf16.msra.mxu0 %v1807
      %2101 = vmatprep.subr.bf16.mxu0 0
      %2102 = vmatpush1.bf16.msra.mxu0 %v1808
      %2103 = vmatprep.subr.bf16.mxu0 0
      %2104 = vmatpush1.bf16.msra.mxu0 %v1809
      %2105 = vmatprep.subr.bf16.mxu0 0
      %2106 = vmatpush1.bf16.msra.mxu0 %v1810
      %2107 = vmatprep.subr.bf16.mxu0 0
      %2108 = vmatpush1.bf16.msra.mxu0 %v1811
      %2109 = vmatprep.subr.bf16.mxu0 0
      %2110 = vmatpush1.bf16.msra.mxu0 %v1812
      %2111 = vmatprep.subr.bf16.mxu0 0
      %2112 = vmatpush1.bf16.msra.mxu0 %v1813
      %2113 = vmatprep.subr.bf16.mxu0 0
      %2114 = vmatpush1.bf16.msra.mxu0 %v1814
      %2115 = vmatprep.subr.bf16.mxu0 0
      %2116 = vmatpush1.bf16.msra.mxu0 %v1815
      %2117 = vmatprep.subr.bf16.mxu0 0
      %2118 = vmatpush1.bf16.msra.mxu0 %v1816
      %2119 = vmatprep.subr.bf16.mxu0 0
      %2120 = vmatpush1.bf16.msra.mxu0 %v1817
      %2121 = vmatprep.subr.bf16.mxu0 0
      %2122 = vmatpush1.bf16.msra.mxu0 %v1818
      %2123 = vmatprep.subr.bf16.mxu0 0
      %2124 = vmatpush1.bf16.msra.mxu0 %v1819
      %2125 = vmatprep.subr.bf16.mxu0 0
      %2126 = vmatpush1.bf16.msra.mxu0 %v1820
      %2127 = vmatprep.subr.bf16.mxu0 0
      %2128 = vmatpush1.bf16.msra.mxu0 %v1821
      %2129 = vmatprep.mubr.bf16.mxu0 %v1297
      %2130 = vmatmul.mubr.bf16.gmra.mrb[0].mxu0 %v1296
      %v2131 = vpop.f32.mrb[0].mxu0
      %v2132 = vadd.f32 %v2067, %v2131
      %v2133 = vpop.f32.mrb[0].mxu0
      %v2134 = vpop.f32.mrb[0].mxu0
      %v2135 = vadd.f32 %v2070, %v2134
      %v2136 = vpop.f32.mrb[0].mxu0
      %2137 = vmatprep.mubr.bf16.mxu0 %v1306
      %2138 = vmatmul.mubr.bf16.gmra.mrb[0].mxu0 %v1305
      %v2139 = vpop.f32.mrb[0].mxu0
      %v2140 = vadd.f32 %v2075, %v2139
      %v2141 = vpop.f32.mrb[0].mxu0
      %v2142 = vpop.f32.mrb[0].mxu0
      %v2143 = vadd.f32 %v2078, %v2142
      %v2144 = vpop.f32.mrb[0].mxu0
      %2145 = vmatprep.mubr.bf16.mxu0 %v1315
      %2146 = vmatmul.mubr.bf16.gmra.mrb[0].mxu0 %v1314
      %v2147 = vpop.f32.mrb[0].mxu0
      %v2148 = vadd.f32 %v2083, %v2147
      %v2149 = vpop.f32.mrb[0].mxu0
      %v2150 = vpop.f32.mrb[0].mxu0
      %v2151 = vadd.f32 %v2086, %v2150
      %v2152 = vpop.f32.mrb[0].mxu0
      %2153 = vmatprep.mubr.bf16.mxu0 %v1324
      %2154 = vmatmul.mubr.bf16.gmra.mrb[0].mxu0 %v1323
      %v2155 = vpop.f32.mrb[0].mxu0
      %v2156 = vadd.f32 %v2091, %v2155
      %v2157 = vpop.f32.mrb[0].mxu0
      %v2158 = vpop.f32.mrb[0].mxu0
      %v2159 = vadd.f32 %v2094, %v2158
      %v2160 = vpop.f32.mrb[0].mxu0
      %2161 = vdwg.mxu0
      %2162 = vmatprep.subr.bf16.mxu0 0
      %2163 = vmatpush1.bf16.msra.mxu0 %v1822
      %2164 = vmatprep.subr.bf16.mxu0 0
      %2165 = vmatpush1.bf16.msra.mxu0 %v1823
      %2166 = vmatprep.subr.bf16.mxu0 0
      %2167 = vmatpush1.bf16.msra.mxu0 %v1824
      %2168 = vmatprep.subr.bf16.mxu0 0
      %2169 = vmatpush1.bf16.msra.mxu0 %v1825
      %2170 = vmatprep.subr.bf16.mxu0 0
      %2171 = vmatpush1.bf16.msra.mxu0 %v1826
      %2172 = vmatprep.subr.bf16.mxu0 0
      %2173 = vmatpush1.bf16.msra.mxu0 %v1827
      %2174 = vmatprep.subr.bf16.mxu0 0
      %2175 = vmatpush1.bf16.msra.mxu0 %v1828
      %2176 = vmatprep.subr.bf16.mxu0 0
      %2177 = vmatpush1.bf16.msra.mxu0 %v1829
      %2178 = vmatprep.subr.bf16.mxu0 0
      %2179 = vmatpush1.bf16.msra.mxu0 0
      %2180 = vmatprep.subr.bf16.mxu0 0
      %2181 = vmatpush1.bf16.msra.mxu0 0
      %2182 = vmatprep.subr.bf16.mxu0 0
      %2183 = vmatpush1.bf16.msra.mxu0 0
      %2184 = vmatprep.subr.bf16.mxu0 0
      %2185 = vmatpush1.bf16.msra.mxu0 0
      %2186 = vmatprep.subr.bf16.mxu0 0
      %2187 = vmatpush1.bf16.msra.mxu0 0
      %2188 = vmatprep.subr.bf16.mxu0 0
      %2189 = vmatpush1.bf16.msra.mxu0 0
      %2190 = vmatprep.subr.bf16.mxu0 0
      %2191 = vmatpush1.bf16.msra.mxu0 0
      %2192 = vmatprep.subr.bf16.mxu0 0
      %2193 = vmatpush1.bf16.msra.mxu0 0
      %2194 = vmatprep.mubr.bf16.mxu0 0
      %2195 = vmatmul.mubr.bf16.gmra.mrb[0].mxu0 %v1298
      %v2196 = vpop.f32.mrb[0].mxu0
      %v2197 = vadd.f32 %v2132, %v2196
      %v2198 = vpop.f32.mrb[0].mxu0
      %v2199 = vpop.f32.mrb[0].mxu0
      %v2200 = vadd.f32 %v2135, %v2199
      %v2201 = vpop.f32.mrb[0].mxu0
      %2202 = vmatprep.mubr.bf16.mxu0 0
      %2203 = vmatmul.mubr.bf16.gmra.mrb[0].mxu0 %v1307
      %v2204 = vpop.f32.mrb[0].mxu0
      %v2205 = vadd.f32 %v2140, %v2204
      %v2206 = vpop.f32.mrb[0].mxu0
      %v2207 = vpop.f32.mrb[0].mxu0
      %v2208 = vadd.f32 %v2143, %v2207
      %v2209 = vpop.f32.mrb[0].mxu0
      %2210 = vmatprep.mubr.bf16.mxu0 0
      %2211 = vmatmul.mubr.bf16.gmra.mrb[0].mxu0 %v1316
      %v2212 = vpop.f32.mrb[0].mxu0
      %v2213 = vadd.f32 %v2148, %v2212
      %v2214 = vpop.f32.mrb[0].mxu0
      %v2215 = vpop.f32.mrb[0].mxu0
      %v2216 = vadd.f32 %v2151, %v2215
      %v2217 = vpop.f32.mrb[0].mxu0
      %2218 = vmatprep.mubr.bf16.mxu0 0
      %2219 = vmatmul.mubr.bf16.gmra.mrb[0].mxu0 %v1325
      %v2220 = vpop.f32.mrb[0].mxu0
      %v2221 = vadd.f32 %v2156, %v2220
      %v2222 = vpop.f32.mrb[0].mxu0
      %v2223 = vpop.f32.mrb[0].mxu0
      %v2224 = vadd.f32 %v2159, %v2223
      %v2225 = vpop.f32.mrb[0].mxu0
      %2226 = vdwg.mxu0
      %2227 = vst [vmem:[%s197] sm:$0xff] %v2197
      %2228 = vst [vmem:[%s197 + $0x8] sm:$0xff] %v2200
      %2229 = vst [vmem:[%s197 + $0x10] sm:$0xff] %v2205
      %2230 = vst [vmem:[%s197 + $0x18] sm:$0xff] %v2208
      %2231 = vst [vmem:[%s197 + $0x20] sm:$0xff] %v2213
      %2232 = vst [vmem:[%s197 + $0x28] sm:$0xff] %v2216
      %2233 = vst [vmem:[%s197 + $0x30] sm:$0xff] %v2221
      %2234 = vst [vmem:[%s197 + $0x38] sm:$0xff] %v2224
      %s2235 = smul.u32 8, %s15
      %p2236 = scmp.lt.s32.totalorder %s2235, 15
      %s2237 = scalar_select %p2236, %s2235, 15
      %s2238 = smul.addr %s2237, 8
      %s2239 = scalar_lea.vmem %s4, %s2238
      // Predicated region
      $region37: #{bottleneck_forward_nhwc.5} parent=35 // pred_check
        %p2240 = pneg %p122
      $region38: #{bottleneck_forward_nhwc.5} parent=35 // pred_check_branch
        %2242 = sbr.rel (%p2240) target = $region40
      $region39: #{bottleneck_forward_nhwc.5} parent=35 // pred_region
        %s2243 = smul.u32 8, %s15
      $region40: #{bottleneck_forward_nhwc.5} parent=35 // pred_fallthru
        _
    $region36: #{bottleneck_forward_nhwc.5} parent=5 // pred_fallthru
      _
    %p2244 = scmp.le.s32.totalorder 2, %s10
    // Predicated region
    $region41: #{bottleneck_forward_nhwc.5} parent=5 // pred_check
      %p2245 = pneg %p2244
    $region42: #{bottleneck_forward_nhwc.5} parent=5 // pred_check_branch
      %2247 = sbr.rel (%p2245) target = $region44
    $region43: #{bottleneck_forward_nhwc.5} parent=5 // pred_region
      %s2248 = ssub.s32 %s10, 2
      // Predicated region
      $region45: #{bottleneck_forward_nhwc.5} parent=43 // pred_check
        %p2249 = pneg %p128
      $region46: #{bottleneck_forward_nhwc.5} parent=43 // pred_check_branch
        %2251 = sbr.rel (%p2249) target = $region48
      $region47: #{bottleneck_forward_nhwc.5} parent=43 // pred_region
        %s2252 = smul.u32 8, %s16
        %p2253 = scmp.lt.s32.totalorder %s2252, 15
        %s2254 = scalar_select %p2253, %s2252, 15
        %s2255 = smul.addr %s2254, 8
        %s2256 = scalar_lea.vmem %s4, %s2255
      $region48: #{bottleneck_forward_nhwc.5} parent=43 // pred_fallthru
        _
    $region44: #{bottleneck_forward_nhwc.5} parent=5 // pred_fallthru
      _
  $region6: #{bottleneck_forward_nhwc.5} parent=0 // loop_footer
    %s14 = sadd.s32 1, %s10
  $region7: #{bottleneck_forward_nhwc.5} parent=0 // loop_footer_branch
    %9 = sbr.rel target = $region3
  $region8: #{bottleneck_forward_nhwc.5} parent=0 // loop_exit
    _

</llo_original>
